<compile_context>
chip_gen: v7x
topology: tpu7x:2x2x1
jax: 0.10.0
libtpu: 0.0.40
codegen_flags: <defaults>
</compile_context>

<pallas_src>
import functools

import jax
import jax.numpy as jnp
from jax.experimental import pallas as pl
from jax.experimental.pallas import tpu as pltpu


# ----------------------------------------------------------------------------
# Pallas kernels
# ----------------------------------------------------------------------------
def _bilstm_recurrence(x_ref, wih_ref, whh_ref, b_ref, h0_ref, c0_ref, hseq_ref):
    """Fused bidirectional LSTM layer over a fully VMEM-resident sequence.

    x_ref    : (S, B, I)   layer input, time-major
    wih_ref  : (I, 4G)     input weights, both directions; columns are gate-major
                           [i_f i_b | f_f f_b | g_f g_b | o_f o_b], with G = 2H
    whh_ref  : (G, 4G)     block-diagonal recurrent weights (fwd rows -> fwd columns,
                           bwd rows -> bwd columns)
    b_ref    : (1, 4G)     combined bias (b_ih + b_hh), same column layout as wih
    h0_ref   : (B, G)      [h0_fwd | h0_bwd]
    c0_ref   : (B, G)      [c0_fwd | c0_bwd]
    hseq_ref : (S, B, G)   output: hseq[t] = [h_fwd(t) | h_bwd(t)]  (PyTorch layout)
    """
    S, B, I = x_ref.shape
    G = whh_ref.shape[0]          # 2 * per-direction hidden size
    H = G // 2

    # Hoisted input projection: one MXU matmul for all timesteps & both directions.
    x2d = x_ref[...].reshape(S * B, I)
    gx = (jnp.dot(x2d, wih_ref[...], preferred_element_type=jnp.float32)
          + b_ref[...]).reshape(S, B, 4 * G)

    # Lane mask: within each gate's G-wide block, the first H lanes belong to the
    # forward direction, the last H lanes to the backward direction.
    col = jax.lax.broadcasted_iota(jnp.int32, (B, 4 * G), 1)
    is_fwd = (col % G) < H

    whh = whh_ref[...]            # hoisted out of the time loop
    h = h0_ref[...]               # (B, G) = [h_fwd | h_bwd]
    c = c0_ref[...]

    # Fully unrolled static time loop; the backward direction reads time-reversed rows
    # of the precomputed input projection (index plumbing only, no data flips).
    for s in range(S):
        r = S - 1 - s
        gx_t = jnp.where(is_fwd, gx[s], gx[r])                       # (B, 4G)
        gates = gx_t + jnp.dot(h, whh, preferred_element_type=jnp.float32)
        i_g = jax.nn.sigmoid(gates[:, 0 * G:1 * G])
        f_g = jax.nn.sigmoid(gates[:, 1 * G:2 * G])
        g_g = jnp.tanh(gates[:, 2 * G:3 * G])
        o_g = jax.nn.sigmoid(gates[:, 3 * G:4 * G])
        c = f_g * c + i_g * g_g
        h = o_g * jnp.tanh(c)
        # forward hidden at time s, backward hidden at time r
        hseq_ref[pl.ds(s, 1), :, pl.ds(0, H)] = h[:, 0:H].reshape(1, B, H)
        hseq_ref[pl.ds(r, 1), :, pl.ds(H, H)] = h[:, H:G].reshape(1, B, H)


def _bilstm_layer_kernel(x_ref, wih_ref, whh_ref, b_ref, h0_ref, c0_ref, out_ref):
    _bilstm_recurrence(x_ref, wih_ref, whh_ref, b_ref, h0_ref, c0_ref, out_ref)


def _bilstm_last_layer_kernel(x_ref, wih_ref, whh_ref, b_ref, h0_ref, c0_ref,
                              lin_w_ref, lin_b_ref, out_ref, hseq_scr):
    """Last BiLSTM layer with the final linear projection fused into the epilogue."""
    _bilstm_recurrence(x_ref, wih_ref, whh_ref, b_ref, h0_ref, c0_ref, hseq_scr)
    S, B, G = hseq_scr.shape
    y = (jnp.dot(hseq_scr[...].reshape(S * B, G), lin_w_ref[...],
                 preferred_element_type=jnp.float32) + lin_b_ref[...])
    out_ref[...] = y.reshape(S, B, -1)


def _bilstm_layer(x, wih, whh, bias, h0c, c0c):
    S, B, _ = x.shape
    G = whh.shape[0]
    return pl.pallas_call(
        _bilstm_layer_kernel,
        out_shape=jax.ShapeDtypeStruct((S, B, G), jnp.float32),
    )(x, wih, whh, bias, h0c, c0c)


def _bilstm_last_layer(x, wih, whh, bias, h0c, c0c, lin_w, lin_b):
    S, B, _ = x.shape
    G = whh.shape[0]
    O = lin_w.shape[-1]
    return pl.pallas_call(
        _bilstm_last_layer_kernel,
        out_shape=jax.ShapeDtypeStruct((S, B, O), jnp.float32),
        scratch_shapes=[pltpu.VMEM((S, B, G), jnp.float32)],
    )(x, wih, whh, bias, h0c, c0c, lin_w, lin_b)


# ----------------------------------------------------------------------------
# Parameters: PyTorch-layout init + one-time packing into kernel layout
# ----------------------------------------------------------------------------
def init_params(key, vocab_size, embedding_size, hidden_size, num_layers, num_tags):
    """hidden_size is the module's arg; per-direction H = hidden_size // 2."""
    H = hidden_size // 2
    k = 1.0 / jnp.sqrt(jnp.float32(H))
    params = {}
    key, sub = jax.random.split(key)
    params["embedding"] = jax.random.normal(sub, (vocab_size, embedding_size),
                                            jnp.float32) * 0.1
    params["lstm"] = []
    for layer in range(num_layers):
        in_size = embedding_size if layer == 0 else 2 * H
        layer_p = []
        for _direction in range(2):
            key, k1, k2, k3, k4 = jax.random.split(key, 5)
            layer_p.append({
                "w_ih": jax.random.uniform(k1, (4 * H, in_size), jnp.float32, -k, k),
                "w_hh": jax.random.uniform(k2, (4 * H, H), jnp.float32, -k, k),
                "b_ih": jax.random.uniform(k3, (4 * H,), jnp.float32, -k, k),
                "b_hh": jax.random.uniform(k4, (4 * H,), jnp.float32, -k, k),
            })
        params["lstm"].append(layer_p)
    key, k1, k2 = jax.random.split(key, 3)
    kk = 1.0 / jnp.sqrt(jnp.float32(hidden_size))
    params["lin_w"] = jax.random.uniform(k1, (num_tags, hidden_size), jnp.float32, -kk, kk)
    params["lin_b"] = jax.random.uniform(k2, (num_tags,), jnp.float32, -kk, kk)
    return params


def _pack_dir_cols(t_fwd, t_bwd, H):
    """Interleave gate-major columns of the two directions: [i_f i_b | f_f f_b | ...]."""
    rows = t_fwd.shape[0]
    tf = t_fwd.reshape(rows, 4, H)
    tb = t_bwd.reshape(rows, 4, H)
    return jnp.concatenate([tf, tb], axis=2).reshape(rows, 8 * H)


def _pack_block_diag(whh_fwd_t, whh_bwd_t, H):
    """Block-diagonal recurrent weight so [h_fwd | h_bwd] @ W yields both directions."""
    z = jnp.zeros((H, 4, H), whh_fwd_t.dtype)
    top = jnp.concatenate([whh_fwd_t.reshape(H, 4, H), z], axis=2)   # fwd rows
    bot = jnp.concatenate([z, whh_bwd_t.reshape(H, 4, H)], axis=2)   # bwd rows
    return jnp.concatenate([top, bot], axis=0).reshape(2 * H, 8 * H)


def pack_params(params, num_layers):
    """One-time (outside jit) repack of PyTorch-layout weights into kernel layout."""
    packed = {
        "embedding": params["embedding"],
        "lin_w": params["lin_w"].T,                # (2H, O)
        "lin_b": params["lin_b"].reshape(1, -1),   # (1, O)
        "layers": [],
    }
    for layer in range(num_layers):
        pf, pb = params["lstm"][layer]
        H = pf["w_hh"].shape[1]
        wih = _pack_dir_cols(pf["w_ih"].T, pb["w_ih"].T, H)                    # (I, 8H)
        whh = _pack_block_diag(pf["w_hh"].T, pb["w_hh"].T, H)                  # (2H, 8H)
        bias = _pack_dir_cols((pf["b_ih"] + pf["b_hh"]).reshape(1, -1),
                              (pb["b_ih"] + pb["b_hh"]).reshape(1, -1), H)     # (1, 8H)
        packed["layers"].append({"wih": wih, "whh": whh, "bias": bias})
    return packed


# ----------------------------------------------------------------------------
# Forward
# ----------------------------------------------------------------------------
def bilstm_forward(packed, sentence_sequences, h0, c0, num_layers):
    """sentence_sequences: (B, S) int32; h0/c0: (num_layers*2, B, H) -> (B, S, num_tags)."""
    # Embedding lookup (gather) kept as plain JAX glue.
    emb = jnp.take(packed["embedding"], sentence_sequences, axis=0)   # (B, S, E)
    x = jnp.transpose(emb, (1, 0, 2)).astype(jnp.float32)             # (S, B, E)

    L = num_layers
    B = sentence_sequences.shape[0]
    H = h0.shape[-1]
    # (L*2, B, H) -> (L, B, 2H) with lanes laid out [fwd | bwd]
    h0_cat = h0.reshape(L, 2, B, H).transpose(0, 2, 1, 3).reshape(L, B, 2 * H)
    c0_cat = c0.reshape(L, 2, B, H).transpose(0, 2, 1, 3).reshape(L, B, 2 * H)

    out = None
    for layer in range(L):
        lp = packed["layers"][layer]
        if layer < L - 1:
            x = _bilstm_layer(x, lp["wih"], lp["whh"], lp["bias"],
                              h0_cat[layer], c0_cat[layer])            # (S, B, 2H)
        else:
            out = _bilstm_last_layer(x, lp["wih"], lp["whh"], lp["bias"],
                                     h0_cat[layer], c0_cat[layer],
                                     packed["lin_w"], packed["lin_b"])  # (S, B, O)
    return jnp.transpose(out, (1, 0, 2))              # (B, S, num_tags), batch_first


# ----------------------------------------------------------------------------
# Pure-JAX reference (sanity check, uses original PyTorch-layout params)
# ----------------------------------------------------------------------------
def _ref_lstm_direction(x_sbi, w_ih_t, w_hh_t, bias, h0, c0):
    def step(carry, xt):
        h, c = carry
        gates = xt @ w_ih_t + h @ w_hh_t + bias
        i, f, g, o = jnp.split(gates, 4, axis=-1)
        i, f, g, o = jax.nn.sigmoid(i), jax.nn.sigmoid(f), jnp.tanh(g), jax.nn.sigmoid(o)
        c = f * c + i * g
        h = o * jnp.tanh(c)
        return (h, c), h
    _, ys = jax.lax.scan(step, (h0, c0), x_sbi)
    return ys


def bilstm_forward_ref(params, sentence_sequences, h0, c0, num_layers):
    emb = jnp.take(params["embedding"], sentence_sequences, axis=0)
    x = jnp.transpose(emb, (1, 0, 2)).astype(jnp.float32)
    for layer in range(num_layers):
        outs = []
        for direction in range(2):
            p = params["lstm"][layer][direction]
            b = (p["b_ih"] + p["b_hh"]).reshape(1, -1)
            x_dir = x if direction == 0 else jnp.flip(x, axis=0)
            out = _ref_lstm_direction(x_dir, p["w_ih"].T, p["w_hh"].T, b,
                                      h0[2 * layer + direction], c0[2 * layer + direction])
            if direction == 1:
                out = jnp.flip(out, axis=0)
            outs.append(out)
        x = jnp.concatenate(outs, axis=-1)
    out = x @ params["lin_w"].T + params["lin_b"]
    return jnp.transpose(out, (1, 0, 2))


# ----------------------------------------------------------------------------
if __name__ == "__main__":
    # Module hyper-parameters (small, consistent with BiLSTM.__init__)
    vocab_size = 50
    embedding_size = 16
    hidden_size = 32          # module arg; per-direction hidden = 16
    num_layers = 2
    batch_size = 2
    sentence_length = 8
    tag_to_id = {"O": 0, "B-PER": 1, "I-PER": 2, "B-LOC": 3, "I-LOC": 4}
    num_tags = len(tag_to_id)
    H = hidden_size // 2

    key = jax.random.PRNGKey(0)
    key, pkey, ikey, hkey, ckey = jax.random.split(key, 5)

    params = init_params(pkey, vocab_size, embedding_size, hidden_size,
                         num_layers, num_tags)
    packed = pack_params(params, num_layers)   # one-time weight repack, outside jit

    sentence_sequences = jax.random.randint(
        ikey, (batch_size, sentence_length), 0, vocab_size, dtype=jnp.int32)

    # PyTorch forward draws h_0/c_0 with torch.randn each call; here drawn
    # deterministically from the JAX PRNG instead (synthetic kernel).
    h0 = jax.random.normal(hkey, (num_layers * 2, batch_size, H), jnp.float32)
    c0 = jax.random.normal(ckey, (num_layers * 2, batch_size, H), jnp.float32)

    fwd = jax.jit(functools.partial(bilstm_forward, num_layers=num_layers))
    out = fwd(packed, sentence_sequences, h0, c0)
    out = jax.block_until_ready(out)

    assert out.shape == (batch_size, sentence_length, num_tags), out.shape

    ref = bilstm_forward_ref(params, sentence_sequences, h0, c0, num_layers)
    ref = jax.block_until_ready(ref)
    assert jnp.allclose(out, ref, rtol=1e-3, atol=1e-3), "Pallas output mismatch vs reference"

    print("KERNEL_OK")
</pallas_src>

<mosaic_0001>
module attributes {stable_mosaic.version = 11 : i64} {
  func.func @_bilstm_layer_kernel(%arg0: memref<8x2x16xf32, #tpu.memory_space<vmem>>, %arg1: memref<16x128xf32, #tpu.memory_space<vmem>>, %arg2: memref<32x128xf32, #tpu.memory_space<vmem>>, %arg3: memref<1x128xf32, #tpu.memory_space<vmem>>, %arg4: memref<2x32xf32, #tpu.memory_space<vmem>>, %arg5: memref<2x32xf32, #tpu.memory_space<vmem>>, %arg6: memref<8x2x32xf32, #tpu.memory_space<vmem>>) attributes {dimension_semantics = [], scalar_prefetch = 0 : i64, scratch_operands = 0 : i64, tpu.core_type = #tpu.core_type<tc>} {
    %c0 = arith.constant 0 : index
    %c0_0 = arith.constant 0 : index
    %c0_1 = arith.constant 0 : index
    %0 = vector.load %arg0[%c0, %c0_0, %c0_1] : memref<8x2x16xf32, #tpu.memory_space<vmem>>, vector<8x2x16xf32>
    %1 = vector.shape_cast %0 : vector<8x2x16xf32> to vector<16x16xf32>
    %c0_2 = arith.constant 0 : index
    %c0_3 = arith.constant 0 : index
    %2 = vector.load %arg1[%c0_2, %c0_3] : memref<16x128xf32, #tpu.memory_space<vmem>>, vector<16x128xf32>
    %cst = arith.constant dense<0.000000e+00> : vector<16x128xf32>
    %3 = tpu.matmul %1, %2, %cst {dimension_numbers = #tpu.dot_dimension_numbers<[1], [0], [0], [1], [0, 0, 1, 1], [], []>} : vector<16x16xf32>, vector<16x128xf32>, vector<16x128xf32> -> vector<16x128xf32>
    %c0_4 = arith.constant 0 : index
    %c0_5 = arith.constant 0 : index
    %4 = vector.load %arg3[%c0_4, %c0_5] : memref<1x128xf32, #tpu.memory_space<vmem>>, vector<1x128xf32>
    %5 = vector.broadcast %4 : vector<1x128xf32> to vector<16x128xf32>
    %6 = arith.addf %3, %5 : vector<16x128xf32>
    %7 = vector.shape_cast %6 : vector<16x128xf32> to vector<8x2x128xf32>
    %8 = tpu.iota {dimensions = array<i32: 1>} : vector<2x128xi32>
    %c32_i32 = arith.constant 32 : i32
    %c0_i32 = arith.constant 0 : i32
    %9 = arith.cmpi eq, %c32_i32, %c0_i32 : i32
    %c1_i32 = arith.constant 1 : i32
    %10 = arith.select %9, %c1_i32, %c32_i32 : i32
    %11 = vector.broadcast %10 : i32 to vector<2x128xi32>
    %12 = arith.remsi %8, %11 : vector<2x128xi32>
    %c0_i32_6 = arith.constant 0 : i32
    %13 = vector.broadcast %c0_i32_6 : i32 to vector<2x128xi32>
    %14 = arith.cmpi ne, %12, %13 : vector<2x128xi32>
    %c0_i32_7 = arith.constant 0 : i32
    %15 = vector.broadcast %c0_i32_7 : i32 to vector<2x128xi32>
    %16 = arith.cmpi slt, %12, %15 : vector<2x128xi32>
    %c0_i32_8 = arith.constant 0 : i32
    %17 = arith.cmpi slt, %10, %c0_i32_8 : i32
    %18 = vector.broadcast %17 : i1 to vector<2x128xi1>
    %19 = vector.broadcast %18 : vector<2x128xi1> to vector<2x128xi1>
    %20 = arith.xori %16, %19 : vector<2x128xi1>
    %21 = arith.andi %20, %14 : vector<2x128xi1>
    %22 = vector.broadcast %10 : i32 to vector<2x128xi32>
    %23 = arith.addi %12, %22 : vector<2x128xi32>
    %24 = arith.select %21, %23, %12 : vector<2x128xi1>, vector<2x128xi32>
    %c16_i32 = arith.constant 16 : i32
    %25 = vector.broadcast %c16_i32 : i32 to vector<2x128xi32>
    %26 = arith.cmpi slt, %24, %25 : vector<2x128xi32>
    %c0_9 = arith.constant 0 : index
    %c0_10 = arith.constant 0 : index
    %27 = vector.load %arg2[%c0_9, %c0_10] : memref<32x128xf32, #tpu.memory_space<vmem>>, vector<32x128xf32>
    %c0_11 = arith.constant 0 : index
    %c0_12 = arith.constant 0 : index
    %28 = vector.load %arg4[%c0_11, %c0_12] : memref<2x32xf32, #tpu.memory_space<vmem>>, vector<2x32xf32>
    %c0_13 = arith.constant 0 : index
    %c0_14 = arith.constant 0 : index
    %29 = vector.load %arg5[%c0_13, %c0_14] : memref<2x32xf32, #tpu.memory_space<vmem>>, vector<2x32xf32>
    %30 = vector.extract_strided_slice %7 {offsets = [0, 0, 0], sizes = [1, 2, 128], strides = [1, 1, 1]} : vector<8x2x128xf32> to vector<1x2x128xf32>
    %31 = vector.shape_cast %30 : vector<1x2x128xf32> to vector<2x128xf32>
    %32 = vector.extract_strided_slice %7 {offsets = [7, 0, 0], sizes = [1, 2, 128], strides = [1, 1, 1]} : vector<8x2x128xf32> to vector<1x2x128xf32>
    %33 = vector.shape_cast %32 : vector<1x2x128xf32> to vector<2x128xf32>
    %34 = arith.select %26, %31, %33 : vector<2x128xi1>, vector<2x128xf32>
    %cst_15 = arith.constant dense<0.000000e+00> : vector<2x128xf32>
    %35 = tpu.matmul %28, %27, %cst_15 {dimension_numbers = #tpu.dot_dimension_numbers<[1], [0], [0], [1], [0, 0, 1, 1], [], []>} : vector<2x32xf32>, vector<32x128xf32>, vector<2x128xf32> -> vector<2x128xf32>
    %36 = arith.addf %34, %35 : vector<2x128xf32>
    %37 = vector.extract_strided_slice %36 {offsets = [0, 0], sizes = [2, 32], strides = [1, 1]} : vector<2x128xf32> to vector<2x32xf32>
    %38 = arith.negf %37 : vector<2x32xf32>
    %39 = math.exp %38 : vector<2x32xf32>
    %cst_16 = arith.constant 1.000000e+00 : f32
    %40 = vector.broadcast %cst_16 : f32 to vector<2x32xf32>
    %41 = arith.addf %40, %39 : vector<2x32xf32>
    %42 = arith.divf %40, %41 : vector<2x32xf32>
    %43 = vector.extract_strided_slice %36 {offsets = [0, 32], sizes = [2, 32], strides = [1, 1]} : vector<2x128xf32> to vector<2x32xf32>
    %44 = arith.negf %43 : vector<2x32xf32>
    %45 = math.exp %44 : vector<2x32xf32>
    %cst_17 = arith.constant 1.000000e+00 : f32
    %46 = vector.broadcast %cst_17 : f32 to vector<2x32xf32>
    %47 = arith.addf %46, %45 : vector<2x32xf32>
    %48 = arith.divf %46, %47 : vector<2x32xf32>
    %49 = vector.extract_strided_slice %36 {offsets = [0, 64], sizes = [2, 32], strides = [1, 1]} : vector<2x128xf32> to vector<2x32xf32>
    %50 = math.tanh %49 : vector<2x32xf32>
    %51 = vector.extract_strided_slice %36 {offsets = [0, 96], sizes = [2, 32], strides = [1, 1]} : vector<2x128xf32> to vector<2x32xf32>
    %52 = arith.negf %51 : vector<2x32xf32>
    %53 = math.exp %52 : vector<2x32xf32>
    %cst_18 = arith.constant 1.000000e+00 : f32
    %54 = vector.broadcast %cst_18 : f32 to vector<2x32xf32>
    %55 = arith.addf %54, %53 : vector<2x32xf32>
    %56 = arith.divf %54, %55 : vector<2x32xf32>
    %57 = arith.mulf %48, %29 : vector<2x32xf32>
    %58 = arith.mulf %42, %50 : vector<2x32xf32>
    %59 = arith.addf %57, %58 : vector<2x32xf32>
    %60 = math.tanh %59 : vector<2x32xf32>
    %61 = arith.mulf %56, %60 : vector<2x32xf32>
    %62 = vector.extract_strided_slice %61 {offsets = [0, 0], sizes = [2, 16], strides = [1, 1]} : vector<2x32xf32> to vector<2x16xf32>
    %63 = vector.shape_cast %62 : vector<2x16xf32> to vector<1x2x16xf32>
    %c0_19 = arith.constant 0 : index
    %c0_20 = arith.constant 0 : index
    %c0_21 = arith.constant 0 : index
    %64 = vector.load %arg6[%c0_19, %c0_20, %c0_21] : memref<8x2x32xf32, #tpu.memory_space<vmem>>, vector<1x2x16xf32>
    tpu.vector_store %arg6[%c0_19, %c0_20, %c0_21], %63 {strides = array<i32>} : memref<8x2x32xf32, #tpu.memory_space<vmem>>, vector<1x2x16xf32>,
    %65 = vector.extract_strided_slice %61 {offsets = [0, 16], sizes = [2, 16], strides = [1, 1]} : vector<2x32xf32> to vector<2x16xf32>
    %66 = vector.shape_cast %65 : vector<2x16xf32> to vector<1x2x16xf32>
    %c7 = arith.constant 7 : index
    %c0_22 = arith.constant 0 : index
    %c16 = arith.constant 16 : index
    %67 = vector.load %arg6[%c7, %c0_22, %c16] : memref<8x2x32xf32, #tpu.memory_space<vmem>>, vector<1x2x16xf32>
    tpu.vector_store %arg6[%c7, %c0_22, %c16], %66 {strides = array<i32>} : memref<8x2x32xf32, #tpu.memory_space<vmem>>, vector<1x2x16xf32>,
    %68 = vector.extract_strided_slice %7 {offsets = [1, 0, 0], sizes = [1, 2, 128], strides = [1, 1, 1]} : vector<8x2x128xf32> to vector<1x2x128xf32>
    %69 = vector.shape_cast %68 : vector<1x2x128xf32> to vector<2x128xf32>
    %70 = vector.extract_strided_slice %7 {offsets = [6, 0, 0], sizes = [1, 2, 128], strides = [1, 1, 1]} : vector<8x2x128xf32> to vector<1x2x128xf32>
    %71 = vector.shape_cast %70 : vector<1x2x128xf32> to vector<2x128xf32>
    %72 = arith.select %26, %69, %71 : vector<2x128xi1>, vector<2x128xf32>
    %cst_23 = arith.constant dense<0.000000e+00> : vector<2x128xf32>
    %73 = tpu.matmul %61, %27, %cst_23 {dimension_numbers = #tpu.dot_dimension_numbers<[1], [0], [0], [1], [0, 0, 1, 1], [], []>} : vector<2x32xf32>, vector<32x128xf32>, vector<2x128xf32> -> vector<2x128xf32>
    %74 = arith.addf %72, %73 : vector<2x128xf32>
    %75 = vector.extract_strided_slice %74 {offsets = [0, 0], sizes = [2, 32], strides = [1, 1]} : vector<2x128xf32> to vector<2x32xf32>
    %76 = arith.negf %75 : vector<2x32xf32>
    %77 = math.exp %76 : vector<2x32xf32>
    %cst_24 = arith.constant 1.000000e+00 : f32
    %78 = vector.broadcast %cst_24 : f32 to vector<2x32xf32>
    %79 = arith.addf %78, %77 : vector<2x32xf32>
    %80 = arith.divf %78, %79 : vector<2x32xf32>
    %81 = vector.extract_strided_slice %74 {offsets = [0, 32], sizes = [2, 32], strides = [1, 1]} : vector<2x128xf32> to vector<2x32xf32>
    %82 = arith.negf %81 : vector<2x32xf32>
    %83 = math.exp %82 : vector<2x32xf32>
    %cst_25 = arith.constant 1.000000e+00 : f32
    %84 = vector.broadcast %cst_25 : f32 to vector<2x32xf32>
    %85 = arith.addf %84, %83 : vector<2x32xf32>
    %86 = arith.divf %84, %85 : vector<2x32xf32>
    %87 = vector.extract_strided_slice %74 {offsets = [0, 64], sizes = [2, 32], strides = [1, 1]} : vector<2x128xf32> to vector<2x32xf32>
    %88 = math.tanh %87 : vector<2x32xf32>
    %89 = vector.extract_strided_slice %74 {offsets = [0, 96], sizes = [2, 32], strides = [1, 1]} : vector<2x128xf32> to vector<2x32xf32>
    %90 = arith.negf %89 : vector<2x32xf32>
    %91 = math.exp %90 : vector<2x32xf32>
    %cst_26 = arith.constant 1.000000e+00 : f32
    %92 = vector.broadcast %cst_26 : f32 to vector<2x32xf32>
    %93 = arith.addf %92, %91 : vector<2x32xf32>
    %94 = arith.divf %92, %93 : vector<2x32xf32>
    %95 = arith.mulf %86, %59 : vector<2x32xf32>
    %96 = arith.mulf %80, %88 : vector<2x32xf32>
    %97 = arith.addf %95, %96 : vector<2x32xf32>
    %98 = math.tanh %97 : vector<2x32xf32>
    %99 = arith.mulf %94, %98 : vector<2x32xf32>
    %100 = vector.extract_strided_slice %99 {offsets = [0, 0], sizes = [2, 16], strides = [1, 1]} : vector<2x32xf32> to vector<2x16xf32>
    %101 = vector.shape_cast %100 : vector<2x16xf32> to vector<1x2x16xf32>
    %c1 = arith.constant 1 : index
    %c0_27 = arith.constant 0 : index
    %c0_28 = arith.constant 0 : index
    %102 = vector.load %arg6[%c1, %c0_27, %c0_28] : memref<8x2x32xf32, #tpu.memory_space<vmem>>, vector<1x2x16xf32>
    tpu.vector_store %arg6[%c1, %c0_27, %c0_28], %101 {strides = array<i32>} : memref<8x2x32xf32, #tpu.memory_space<vmem>>, vector<1x2x16xf32>,
    %103 = vector.extract_strided_slice %99 {offsets = [0, 16], sizes = [2, 16], strides = [1, 1]} : vector<2x32xf32> to vector<2x16xf32>
    %104 = vector.shape_cast %103 : vector<2x16xf32> to vector<1x2x16xf32>
    %c6 = arith.constant 6 : index
    %c0_29 = arith.constant 0 : index
    %c16_30 = arith.constant 16 : index
    %105 = vector.load %arg6[%c6, %c0_29, %c16_30] : memref<8x2x32xf32, #tpu.memory_space<vmem>>, vector<1x2x16xf32>
    tpu.vector_store %arg6[%c6, %c0_29, %c16_30], %104 {strides = array<i32>} : memref<8x2x32xf32, #tpu.memory_space<vmem>>, vector<1x2x16xf32>,
    %106 = vector.extract_strided_slice %7 {offsets = [2, 0, 0], sizes = [1, 2, 128], strides = [1, 1, 1]} : vector<8x2x128xf32> to vector<1x2x128xf32>
    %107 = vector.shape_cast %106 : vector<1x2x128xf32> to vector<2x128xf32>
    %108 = vector.extract_strided_slice %7 {offsets = [5, 0, 0], sizes = [1, 2, 128], strides = [1, 1, 1]} : vector<8x2x128xf32> to vector<1x2x128xf32>
    %109 = vector.shape_cast %108 : vector<1x2x128xf32> to vector<2x128xf32>
    %110 = arith.select %26, %107, %109 : vector<2x128xi1>, vector<2x128xf32>
    %cst_31 = arith.constant dense<0.000000e+00> : vector<2x128xf32>
    %111 = tpu.matmul %99, %27, %cst_31 {dimension_numbers = #tpu.dot_dimension_numbers<[1], [0], [0], [1], [0, 0, 1, 1], [], []>} : vector<2x32xf32>, vector<32x128xf32>, vector<2x128xf32> -> vector<2x128xf32>
    %112 = arith.addf %110, %111 : vector<2x128xf32>
    %113 = vector.extract_strided_slice %112 {offsets = [0, 0], sizes = [2, 32], strides = [1, 1]} : vector<2x128xf32> to vector<2x32xf32>
    %114 = arith.negf %113 : vector<2x32xf32>
    %115 = math.exp %114 : vector<2x32xf32>
    %cst_32 = arith.constant 1.000000e+00 : f32
    %116 = vector.broadcast %cst_32 : f32 to vector<2x32xf32>
    %117 = arith.addf %116, %115 : vector<2x32xf32>
    %118 = arith.divf %116, %117 : vector<2x32xf32>
    %119 = vector.extract_strided_slice %112 {offsets = [0, 32], sizes = [2, 32], strides = [1, 1]} : vector<2x128xf32> to vector<2x32xf32>
    %120 = arith.negf %119 : vector<2x32xf32>
    %121 = math.exp %120 : vector<2x32xf32>
    %cst_33 = arith.constant 1.000000e+00 : f32
    %122 = vector.broadcast %cst_33 : f32 to vector<2x32xf32>
    %123 = arith.addf %122, %121 : vector<2x32xf32>
    %124 = arith.divf %122, %123 : vector<2x32xf32>
    %125 = vector.extract_strided_slice %112 {offsets = [0, 64], sizes = [2, 32], strides = [1, 1]} : vector<2x128xf32> to vector<2x32xf32>
    %126 = math.tanh %125 : vector<2x32xf32>
    %127 = vector.extract_strided_slice %112 {offsets = [0, 96], sizes = [2, 32], strides = [1, 1]} : vector<2x128xf32> to vector<2x32xf32>
    %128 = arith.negf %127 : vector<2x32xf32>
    %129 = math.exp %128 : vector<2x32xf32>
    %cst_34 = arith.constant 1.000000e+00 : f32
    %130 = vector.broadcast %cst_34 : f32 to vector<2x32xf32>
    %131 = arith.addf %130, %129 : vector<2x32xf32>
    %132 = arith.divf %130, %131 : vector<2x32xf32>
    %133 = arith.mulf %124, %97 : vector<2x32xf32>
    %134 = arith.mulf %118, %126 : vector<2x32xf32>
    %135 = arith.addf %133, %134 : vector<2x32xf32>
    %136 = math.tanh %135 : vector<2x32xf32>
    %137 = arith.mulf %132, %136 : vector<2x32xf32>
    %138 = vector.extract_strided_slice %137 {offsets = [0, 0], sizes = [2, 16], strides = [1, 1]} : vector<2x32xf32> to vector<2x16xf32>
    %139 = vector.shape_cast %138 : vector<2x16xf32> to vector<1x2x16xf32>
    %c2 = arith.constant 2 : index
    %c0_35 = arith.constant 0 : index
    %c0_36 = arith.constant 0 : index
    %140 = vector.load %arg6[%c2, %c0_35, %c0_36] : memref<8x2x32xf32, #tpu.memory_space<vmem>>, vector<1x2x16xf32>
    tpu.vector_store %arg6[%c2, %c0_35, %c0_36], %139 {strides = array<i32>} : memref<8x2x32xf32, #tpu.memory_space<vmem>>, vector<1x2x16xf32>,
    %141 = vector.extract_strided_slice %137 {offsets = [0, 16], sizes = [2, 16], strides = [1, 1]} : vector<2x32xf32> to vector<2x16xf32>
    %142 = vector.shape_cast %141 : vector<2x16xf32> to vector<1x2x16xf32>
    %c5 = arith.constant 5 : index
    %c0_37 = arith.constant 0 : index
    %c16_38 = arith.constant 16 : index
    %143 = vector.load %arg6[%c5, %c0_37, %c16_38] : memref<8x2x32xf32, #tpu.memory_space<vmem>>, vector<1x2x16xf32>
    tpu.vector_store %arg6[%c5, %c0_37, %c16_38], %142 {strides = array<i32>} : memref<8x2x32xf32, #tpu.memory_space<vmem>>, vector<1x2x16xf32>,
    %144 = vector.extract_strided_slice %7 {offsets = [3, 0, 0], sizes = [1, 2, 128], strides = [1, 1, 1]} : vector<8x2x128xf32> to vector<1x2x128xf32>
    %145 = vector.shape_cast %144 : vector<1x2x128xf32> to vector<2x128xf32>
    %146 = vector.extract_strided_slice %7 {offsets = [4, 0, 0], sizes = [1, 2, 128], strides = [1, 1, 1]} : vector<8x2x128xf32> to vector<1x2x128xf32>
    %147 = vector.shape_cast %146 : vector<1x2x128xf32> to vector<2x128xf32>
    %148 = arith.select %26, %145, %147 : vector<2x128xi1>, vector<2x128xf32>
    %cst_39 = arith.constant dense<0.000000e+00> : vector<2x128xf32>
    %149 = tpu.matmul %137, %27, %cst_39 {dimension_numbers = #tpu.dot_dimension_numbers<[1], [0], [0], [1], [0, 0, 1, 1], [], []>} : vector<2x32xf32>, vector<32x128xf32>, vector<2x128xf32> -> vector<2x128xf32>
    %150 = arith.addf %148, %149 : vector<2x128xf32>
    %151 = vector.extract_strided_slice %150 {offsets = [0, 0], sizes = [2, 32], strides = [1, 1]} : vector<2x128xf32> to vector<2x32xf32>
    %152 = arith.negf %151 : vector<2x32xf32>
    %153 = math.exp %152 : vector<2x32xf32>
    %cst_40 = arith.constant 1.000000e+00 : f32
    %154 = vector.broadcast %cst_40 : f32 to vector<2x32xf32>
    %155 = arith.addf %154, %153 : vector<2x32xf32>
    %156 = arith.divf %154, %155 : vector<2x32xf32>
    %157 = vector.extract_strided_slice %150 {offsets = [0, 32], sizes = [2, 32], strides = [1, 1]} : vector<2x128xf32> to vector<2x32xf32>
    %158 = arith.negf %157 : vector<2x32xf32>
    %159 = math.exp %158 : vector<2x32xf32>
    %cst_41 = arith.constant 1.000000e+00 : f32
    %160 = vector.broadcast %cst_41 : f32 to vector<2x32xf32>
    %161 = arith.addf %160, %159 : vector<2x32xf32>
    %162 = arith.divf %160, %161 : vector<2x32xf32>
    %163 = vector.extract_strided_slice %150 {offsets = [0, 64], sizes = [2, 32], strides = [1, 1]} : vector<2x128xf32> to vector<2x32xf32>
    %164 = math.tanh %163 : vector<2x32xf32>
    %165 = vector.extract_strided_slice %150 {offsets = [0, 96], sizes = [2, 32], strides = [1, 1]} : vector<2x128xf32> to vector<2x32xf32>
    %166 = arith.negf %165 : vector<2x32xf32>
    %167 = math.exp %166 : vector<2x32xf32>
    %cst_42 = arith.constant 1.000000e+00 : f32
    %168 = vector.broadcast %cst_42 : f32 to vector<2x32xf32>
    %169 = arith.addf %168, %167 : vector<2x32xf32>
    %170 = arith.divf %168, %169 : vector<2x32xf32>
    %171 = arith.mulf %162, %135 : vector<2x32xf32>
    %172 = arith.mulf %156, %164 : vector<2x32xf32>
    %173 = arith.addf %171, %172 : vector<2x32xf32>
    %174 = math.tanh %173 : vector<2x32xf32>
    %175 = arith.mulf %170, %174 : vector<2x32xf32>
    %176 = vector.extract_strided_slice %175 {offsets = [0, 0], sizes = [2, 16], strides = [1, 1]} : vector<2x32xf32> to vector<2x16xf32>
    %177 = vector.shape_cast %176 : vector<2x16xf32> to vector<1x2x16xf32>
    %c3 = arith.constant 3 : index
    %c0_43 = arith.constant 0 : index
    %c0_44 = arith.constant 0 : index
    %178 = vector.load %arg6[%c3, %c0_43, %c0_44] : memref<8x2x32xf32, #tpu.memory_space<vmem>>, vector<1x2x16xf32>
    tpu.vector_store %arg6[%c3, %c0_43, %c0_44], %177 {strides = array<i32>} : memref<8x2x32xf32, #tpu.memory_space<vmem>>, vector<1x2x16xf32>,
    %179 = vector.extract_strided_slice %175 {offsets = [0, 16], sizes = [2, 16], strides = [1, 1]} : vector<2x32xf32> to vector<2x16xf32>
    %180 = vector.shape_cast %179 : vector<2x16xf32> to vector<1x2x16xf32>
    %c4 = arith.constant 4 : index
    %c0_45 = arith.constant 0 : index
    %c16_46 = arith.constant 16 : index
    %181 = vector.load %arg6[%c4, %c0_45, %c16_46] : memref<8x2x32xf32, #tpu.memory_space<vmem>>, vector<1x2x16xf32>
    tpu.vector_store %arg6[%c4, %c0_45, %c16_46], %180 {strides = array<i32>} : memref<8x2x32xf32, #tpu.memory_space<vmem>>, vector<1x2x16xf32>,
    %182 = vector.extract_strided_slice %7 {offsets = [4, 0, 0], sizes = [1, 2, 128], strides = [1, 1, 1]} : vector<8x2x128xf32> to vector<1x2x128xf32>
    %183 = vector.shape_cast %182 : vector<1x2x128xf32> to vector<2x128xf32>
    %184 = vector.extract_strided_slice %7 {offsets = [3, 0, 0], sizes = [1, 2, 128], strides = [1, 1, 1]} : vector<8x2x128xf32> to vector<1x2x128xf32>
    %185 = vector.shape_cast %184 : vector<1x2x128xf32> to vector<2x128xf32>
    %186 = arith.select %26, %183, %185 : vector<2x128xi1>, vector<2x128xf32>
    %cst_47 = arith.constant dense<0.000000e+00> : vector<2x128xf32>
    %187 = tpu.matmul %175, %27, %cst_47 {dimension_numbers = #tpu.dot_dimension_numbers<[1], [0], [0], [1], [0, 0, 1, 1], [], []>} : vector<2x32xf32>, vector<32x128xf32>, vector<2x128xf32> -> vector<2x128xf32>
    %188 = arith.addf %186, %187 : vector<2x128xf32>
    %189 = vector.extract_strided_slice %188 {offsets = [0, 0], sizes = [2, 32], strides = [1, 1]} : vector<2x128xf32> to vector<2x32xf32>
    %190 = arith.negf %189 : vector<2x32xf32>
    %191 = math.exp %190 : vector<2x32xf32>
    %cst_48 = arith.constant 1.000000e+00 : f32
    %192 = vector.broadcast %cst_48 : f32 to vector<2x32xf32>
    %193 = arith.addf %192, %191 : vector<2x32xf32>
    %194 = arith.divf %192, %193 : vector<2x32xf32>
    %195 = vector.extract_strided_slice %188 {offsets = [0, 32], sizes = [2, 32], strides = [1, 1]} : vector<2x128xf32> to vector<2x32xf32>
    %196 = arith.negf %195 : vector<2x32xf32>
    %197 = math.exp %196 : vector<2x32xf32>
    %cst_49 = arith.constant 1.000000e+00 : f32
    %198 = vector.broadcast %cst_49 : f32 to vector<2x32xf32>
    %199 = arith.addf %198, %197 : vector<2x32xf32>
    %200 = arith.divf %198, %199 : vector<2x32xf32>
    %201 = vector.extract_strided_slice %188 {offsets = [0, 64], sizes = [2, 32], strides = [1, 1]} : vector<2x128xf32> to vector<2x32xf32>
    %202 = math.tanh %201 : vector<2x32xf32>
    %203 = vector.extract_strided_slice %188 {offsets = [0, 96], sizes = [2, 32], strides = [1, 1]} : vector<2x128xf32> to vector<2x32xf32>
    %204 = arith.negf %203 : vector<2x32xf32>
    %205 = math.exp %204 : vector<2x32xf32>
    %cst_50 = arith.constant 1.000000e+00 : f32
    %206 = vector.broadcast %cst_50 : f32 to vector<2x32xf32>
    %207 = arith.addf %206, %205 : vector<2x32xf32>
    %208 = arith.divf %206, %207 : vector<2x32xf32>
    %209 = arith.mulf %200, %173 : vector<2x32xf32>
    %210 = arith.mulf %194, %202 : vector<2x32xf32>
    %211 = arith.addf %209, %210 : vector<2x32xf32>
    %212 = math.tanh %211 : vector<2x32xf32>
    %213 = arith.mulf %208, %212 : vector<2x32xf32>
    %214 = vector.extract_strided_slice %213 {offsets = [0, 0], sizes = [2, 16], strides = [1, 1]} : vector<2x32xf32> to vector<2x16xf32>
    %215 = vector.shape_cast %214 : vector<2x16xf32> to vector<1x2x16xf32>
    %c4_51 = arith.constant 4 : index
    %c0_52 = arith.constant 0 : index
    %c0_53 = arith.constant 0 : index
    %216 = vector.load %arg6[%c4_51, %c0_52, %c0_53] : memref<8x2x32xf32, #tpu.memory_space<vmem>>, vector<1x2x16xf32>
    tpu.vector_store %arg6[%c4_51, %c0_52, %c0_53], %215 {strides = array<i32>} : memref<8x2x32xf32, #tpu.memory_space<vmem>>, vector<1x2x16xf32>,
    %217 = vector.extract_strided_slice %213 {offsets = [0, 16], sizes = [2, 16], strides = [1, 1]} : vector<2x32xf32> to vector<2x16xf32>
    %218 = vector.shape_cast %217 : vector<2x16xf32> to vector<1x2x16xf32>
    %c3_54 = arith.constant 3 : index
    %c0_55 = arith.constant 0 : index
    %c16_56 = arith.constant 16 : index
    %219 = vector.load %arg6[%c3_54, %c0_55, %c16_56] : memref<8x2x32xf32, #tpu.memory_space<vmem>>, vector<1x2x16xf32>
    tpu.vector_store %arg6[%c3_54, %c0_55, %c16_56], %218 {strides = array<i32>} : memref<8x2x32xf32, #tpu.memory_space<vmem>>, vector<1x2x16xf32>,
    %220 = vector.extract_strided_slice %7 {offsets = [5, 0, 0], sizes = [1, 2, 128], strides = [1, 1, 1]} : vector<8x2x128xf32> to vector<1x2x128xf32>
    %221 = vector.shape_cast %220 : vector<1x2x128xf32> to vector<2x128xf32>
    %222 = vector.extract_strided_slice %7 {offsets = [2, 0, 0], sizes = [1, 2, 128], strides = [1, 1, 1]} : vector<8x2x128xf32> to vector<1x2x128xf32>
    %223 = vector.shape_cast %222 : vector<1x2x128xf32> to vector<2x128xf32>
    %224 = arith.select %26, %221, %223 : vector<2x128xi1>, vector<2x128xf32>
    %cst_57 = arith.constant dense<0.000000e+00> : vector<2x128xf32>
    %225 = tpu.matmul %213, %27, %cst_57 {dimension_numbers = #tpu.dot_dimension_numbers<[1], [0], [0], [1], [0, 0, 1, 1], [], []>} : vector<2x32xf32>, vector<32x128xf32>, vector<2x128xf32> -> vector<2x128xf32>
    %226 = arith.addf %224, %225 : vector<2x128xf32>
    %227 = vector.extract_strided_slice %226 {offsets = [0, 0], sizes = [2, 32], strides = [1, 1]} : vector<2x128xf32> to vector<2x32xf32>
    %228 = arith.negf %227 : vector<2x32xf32>
    %229 = math.exp %228 : vector<2x32xf32>
    %cst_58 = arith.constant 1.000000e+00 : f32
    %230 = vector.broadcast %cst_58 : f32 to vector<2x32xf32>
    %231 = arith.addf %230, %229 : vector<2x32xf32>
    %232 = arith.divf %230, %231 : vector<2x32xf32>
    %233 = vector.extract_strided_slice %226 {offsets = [0, 32], sizes = [2, 32], strides = [1, 1]} : vector<2x128xf32> to vector<2x32xf32>
    %234 = arith.negf %233 : vector<2x32xf32>
    %235 = math.exp %234 : vector<2x32xf32>
    %cst_59 = arith.constant 1.000000e+00 : f32
    %236 = vector.broadcast %cst_59 : f32 to vector<2x32xf32>
    %237 = arith.addf %236, %235 : vector<2x32xf32>
    %238 = arith.divf %236, %237 : vector<2x32xf32>
    %239 = vector.extract_strided_slice %226 {offsets = [0, 64], sizes = [2, 32], strides = [1, 1]} : vector<2x128xf32> to vector<2x32xf32>
    %240 = math.tanh %239 : vector<2x32xf32>
    %241 = vector.extract_strided_slice %226 {offsets = [0, 96], sizes = [2, 32], strides = [1, 1]} : vector<2x128xf32> to vector<2x32xf32>
    %242 = arith.negf %241 : vector<2x32xf32>
    %243 = math.exp %242 : vector<2x32xf32>
    %cst_60 = arith.constant 1.000000e+00 : f32
    %244 = vector.broadcast %cst_60 : f32 to vector<2x32xf32>
    %245 = arith.addf %244, %243 : vector<2x32xf32>
    %246 = arith.divf %244, %245 : vector<2x32xf32>
    %247 = arith.mulf %238, %211 : vector<2x32xf32>
    %248 = arith.mulf %232, %240 : vector<2x32xf32>
    %249 = arith.addf %247, %248 : vector<2x32xf32>
    %250 = math.tanh %249 : vector<2x32xf32>
    %251 = arith.mulf %246, %250 : vector<2x32xf32>
    %252 = vector.extract_strided_slice %251 {offsets = [0, 0], sizes = [2, 16], strides = [1, 1]} : vector<2x32xf32> to vector<2x16xf32>
    %253 = vector.shape_cast %252 : vector<2x16xf32> to vector<1x2x16xf32>
    %c5_61 = arith.constant 5 : index
    %c0_62 = arith.constant 0 : index
    %c0_63 = arith.constant 0 : index
    %254 = vector.load %arg6[%c5_61, %c0_62, %c0_63] : memref<8x2x32xf32, #tpu.memory_space<vmem>>, vector<1x2x16xf32>
    tpu.vector_store %arg6[%c5_61, %c0_62, %c0_63], %253 {strides = array<i32>} : memref<8x2x32xf32, #tpu.memory_space<vmem>>, vector<1x2x16xf32>,
    %255 = vector.extract_strided_slice %251 {offsets = [0, 16], sizes = [2, 16], strides = [1, 1]} : vector<2x32xf32> to vector<2x16xf32>
    %256 = vector.shape_cast %255 : vector<2x16xf32> to vector<1x2x16xf32>
    %c2_64 = arith.constant 2 : index
    %c0_65 = arith.constant 0 : index
    %c16_66 = arith.constant 16 : index
    %257 = vector.load %arg6[%c2_64, %c0_65, %c16_66] : memref<8x2x32xf32, #tpu.memory_space<vmem>>, vector<1x2x16xf32>
    tpu.vector_store %arg6[%c2_64, %c0_65, %c16_66], %256 {strides = array<i32>} : memref<8x2x32xf32, #tpu.memory_space<vmem>>, vector<1x2x16xf32>,
    %258 = vector.extract_strided_slice %7 {offsets = [6, 0, 0], sizes = [1, 2, 128], strides = [1, 1, 1]} : vector<8x2x128xf32> to vector<1x2x128xf32>
    %259 = vector.shape_cast %258 : vector<1x2x128xf32> to vector<2x128xf32>
    %260 = vector.extract_strided_slice %7 {offsets = [1, 0, 0], sizes = [1, 2, 128], strides = [1, 1, 1]} : vector<8x2x128xf32> to vector<1x2x128xf32>
    %261 = vector.shape_cast %260 : vector<1x2x128xf32> to vector<2x128xf32>
    %262 = arith.select %26, %259, %261 : vector<2x128xi1>, vector<2x128xf32>
    %cst_67 = arith.constant dense<0.000000e+00> : vector<2x128xf32>
    %263 = tpu.matmul %251, %27, %cst_67 {dimension_numbers = #tpu.dot_dimension_numbers<[1], [0], [0], [1], [0, 0, 1, 1], [], []>} : vector<2x32xf32>, vector<32x128xf32>, vector<2x128xf32> -> vector<2x128xf32>
    %264 = arith.addf %262, %263 : vector<2x128xf32>
    %265 = vector.extract_strided_slice %264 {offsets = [0, 0], sizes = [2, 32], strides = [1, 1]} : vector<2x128xf32> to vector<2x32xf32>
    %266 = arith.negf %265 : vector<2x32xf32>
    %267 = math.exp %266 : vector<2x32xf32>
    %cst_68 = arith.constant 1.000000e+00 : f32
    %268 = vector.broadcast %cst_68 : f32 to vector<2x32xf32>
    %269 = arith.addf %268, %267 : vector<2x32xf32>
    %270 = arith.divf %268, %269 : vector<2x32xf32>
    %271 = vector.extract_strided_slice %264 {offsets = [0, 32], sizes = [2, 32], strides = [1, 1]} : vector<2x128xf32> to vector<2x32xf32>
    %272 = arith.negf %271 : vector<2x32xf32>
    %273 = math.exp %272 : vector<2x32xf32>
    %cst_69 = arith.constant 1.000000e+00 : f32
    %274 = vector.broadcast %cst_69 : f32 to vector<2x32xf32>
    %275 = arith.addf %274, %273 : vector<2x32xf32>
    %276 = arith.divf %274, %275 : vector<2x32xf32>
    %277 = vector.extract_strided_slice %264 {offsets = [0, 64], sizes = [2, 32], strides = [1, 1]} : vector<2x128xf32> to vector<2x32xf32>
    %278 = math.tanh %277 : vector<2x32xf32>
    %279 = vector.extract_strided_slice %264 {offsets = [0, 96], sizes = [2, 32], strides = [1, 1]} : vector<2x128xf32> to vector<2x32xf32>
    %280 = arith.negf %279 : vector<2x32xf32>
    %281 = math.exp %280 : vector<2x32xf32>
    %cst_70 = arith.constant 1.000000e+00 : f32
    %282 = vector.broadcast %cst_70 : f32 to vector<2x32xf32>
    %283 = arith.addf %282, %281 : vector<2x32xf32>
    %284 = arith.divf %282, %283 : vector<2x32xf32>
    %285 = arith.mulf %276, %249 : vector<2x32xf32>
    %286 = arith.mulf %270, %278 : vector<2x32xf32>
    %287 = arith.addf %285, %286 : vector<2x32xf32>
    %288 = math.tanh %287 : vector<2x32xf32>
    %289 = arith.mulf %284, %288 : vector<2x32xf32>
    %290 = vector.extract_strided_slice %289 {offsets = [0, 0], sizes = [2, 16], strides = [1, 1]} : vector<2x32xf32> to vector<2x16xf32>
    %291 = vector.shape_cast %290 : vector<2x16xf32> to vector<1x2x16xf32>
    %c6_71 = arith.constant 6 : index
    %c0_72 = arith.constant 0 : index
    %c0_73 = arith.constant 0 : index
    %292 = vector.load %arg6[%c6_71, %c0_72, %c0_73] : memref<8x2x32xf32, #tpu.memory_space<vmem>>, vector<1x2x16xf32>
    tpu.vector_store %arg6[%c6_71, %c0_72, %c0_73], %291 {strides = array<i32>} : memref<8x2x32xf32, #tpu.memory_space<vmem>>, vector<1x2x16xf32>,
    %293 = vector.extract_strided_slice %289 {offsets = [0, 16], sizes = [2, 16], strides = [1, 1]} : vector<2x32xf32> to vector<2x16xf32>
    %294 = vector.shape_cast %293 : vector<2x16xf32> to vector<1x2x16xf32>
    %c1_74 = arith.constant 1 : index
    %c0_75 = arith.constant 0 : index
    %c16_76 = arith.constant 16 : index
    %295 = vector.load %arg6[%c1_74, %c0_75, %c16_76] : memref<8x2x32xf32, #tpu.memory_space<vmem>>, vector<1x2x16xf32>
    tpu.vector_store %arg6[%c1_74, %c0_75, %c16_76], %294 {strides = array<i32>} : memref<8x2x32xf32, #tpu.memory_space<vmem>>, vector<1x2x16xf32>,
    %296 = vector.extract_strided_slice %7 {offsets = [7, 0, 0], sizes = [1, 2, 128], strides = [1, 1, 1]} : vector<8x2x128xf32> to vector<1x2x128xf32>
    %297 = vector.shape_cast %296 : vector<1x2x128xf32> to vector<2x128xf32>
    %298 = vector.extract_strided_slice %7 {offsets = [0, 0, 0], sizes = [1, 2, 128], strides = [1, 1, 1]} : vector<8x2x128xf32> to vector<1x2x128xf32>
    %299 = vector.shape_cast %298 : vector<1x2x128xf32> to vector<2x128xf32>
    %300 = arith.select %26, %297, %299 : vector<2x128xi1>, vector<2x128xf32>
    %cst_77 = arith.constant dense<0.000000e+00> : vector<2x128xf32>
    %301 = tpu.matmul %289, %27, %cst_77 {dimension_numbers = #tpu.dot_dimension_numbers<[1], [0], [0], [1], [0, 0, 1, 1], [], []>} : vector<2x32xf32>, vector<32x128xf32>, vector<2x128xf32> -> vector<2x128xf32>
    %302 = arith.addf %300, %301 : vector<2x128xf32>
    %303 = vector.extract_strided_slice %302 {offsets = [0, 0], sizes = [2, 32], strides = [1, 1]} : vector<2x128xf32> to vector<2x32xf32>
    %304 = arith.negf %303 : vector<2x32xf32>
    %305 = math.exp %304 : vector<2x32xf32>
    %cst_78 = arith.constant 1.000000e+00 : f32
    %306 = vector.broadcast %cst_78 : f32 to vector<2x32xf32>
    %307 = arith.addf %306, %305 : vector<2x32xf32>
    %308 = arith.divf %306, %307 : vector<2x32xf32>
    %309 = vector.extract_strided_slice %302 {offsets = [0, 32], sizes = [2, 32], strides = [1, 1]} : vector<2x128xf32> to vector<2x32xf32>
    %310 = arith.negf %309 : vector<2x32xf32>
    %311 = math.exp %310 : vector<2x32xf32>
    %cst_79 = arith.constant 1.000000e+00 : f32
    %312 = vector.broadcast %cst_79 : f32 to vector<2x32xf32>
    %313 = arith.addf %312, %311 : vector<2x32xf32>
    %314 = arith.divf %312, %313 : vector<2x32xf32>
    %315 = vector.extract_strided_slice %302 {offsets = [0, 64], sizes = [2, 32], strides = [1, 1]} : vector<2x128xf32> to vector<2x32xf32>
    %316 = math.tanh %315 : vector<2x32xf32>
    %317 = vector.extract_strided_slice %302 {offsets = [0, 96], sizes = [2, 32], strides = [1, 1]} : vector<2x128xf32> to vector<2x32xf32>
    %318 = arith.negf %317 : vector<2x32xf32>
    %319 = math.exp %318 : vector<2x32xf32>
    %cst_80 = arith.constant 1.000000e+00 : f32
    %320 = vector.broadcast %cst_80 : f32 to vector<2x32xf32>
    %321 = arith.addf %320, %319 : vector<2x32xf32>
    %322 = arith.divf %320, %321 : vector<2x32xf32>
    %323 = arith.mulf %314, %287 : vector<2x32xf32>
    %324 = arith.mulf %308, %316 : vector<2x32xf32>
    %325 = arith.addf %323, %324 : vector<2x32xf32>
    %326 = math.tanh %325 : vector<2x32xf32>
    %327 = arith.mulf %322, %326 : vector<2x32xf32>
    %328 = vector.extract_strided_slice %327 {offsets = [0, 0], sizes = [2, 16], strides = [1, 1]} : vector<2x32xf32> to vector<2x16xf32>
    %329 = vector.shape_cast %328 : vector<2x16xf32> to vector<1x2x16xf32>
    %c7_81 = arith.constant 7 : index
    %c0_82 = arith.constant 0 : index
    %c0_83 = arith.constant 0 : index
    %330 = vector.load %arg6[%c7_81, %c0_82, %c0_83] : memref<8x2x32xf32, #tpu.memory_space<vmem>>, vector<1x2x16xf32>
    tpu.vector_store %arg6[%c7_81, %c0_82, %c0_83], %329 {strides = array<i32>} : memref<8x2x32xf32, #tpu.memory_space<vmem>>, vector<1x2x16xf32>,
    %331 = vector.extract_strided_slice %327 {offsets = [0, 16], sizes = [2, 16], strides = [1, 1]} : vector<2x32xf32> to vector<2x16xf32>
    %332 = vector.shape_cast %331 : vector<2x16xf32> to vector<1x2x16xf32>
    %c0_84 = arith.constant 0 : index
    %c0_85 = arith.constant 0 : index
    %c16_86 = arith.constant 16 : index
    %333 = vector.load %arg6[%c0_84, %c0_85, %c16_86] : memref<8x2x32xf32, #tpu.memory_space<vmem>>, vector<1x2x16xf32>
    tpu.vector_store %arg6[%c0_84, %c0_85, %c16_86], %332 {strides = array<i32>} : memref<8x2x32xf32, #tpu.memory_space<vmem>>, vector<1x2x16xf32>,
    return
  }
}

module attributes {stable_mosaic.version = 11 : i64} {
  func.func @_bilstm_last_layer_kernel(%arg0: memref<8x2x32xf32, #tpu.memory_space<vmem>>, %arg1: memref<32x128xf32, #tpu.memory_space<vmem>>, %arg2: memref<32x128xf32, #tpu.memory_space<vmem>>, %arg3: memref<1x128xf32, #tpu.memory_space<vmem>>, %arg4: memref<2x32xf32, #tpu.memory_space<vmem>>, %arg5: memref<2x32xf32, #tpu.memory_space<vmem>>, %arg6: memref<32x5xf32, #tpu.memory_space<vmem>>, %arg7: memref<1x5xf32, #tpu.memory_space<vmem>>, %arg8: memref<8x2x5xf32, #tpu.memory_space<vmem>>, %arg9: memref<8x2x32xf32, #tpu.memory_space<vmem>>) attributes {dimension_semantics = [], scalar_prefetch = 0 : i64, scratch_operands = 1 : i64, tpu.core_type = #tpu.core_type<tc>} {
    %c0 = arith.constant 0 : index
    %c0_0 = arith.constant 0 : index
    %c0_1 = arith.constant 0 : index
    %0 = vector.load %arg0[%c0, %c0_0, %c0_1] : memref<8x2x32xf32, #tpu.memory_space<vmem>>, vector<8x2x32xf32>
    %1 = vector.shape_cast %0 : vector<8x2x32xf32> to vector<16x32xf32>
    %c0_2 = arith.constant 0 : index
    %c0_3 = arith.constant 0 : index
    %2 = vector.load %arg1[%c0_2, %c0_3] : memref<32x128xf32, #tpu.memory_space<vmem>>, vector<32x128xf32>
    %cst = arith.constant dense<0.000000e+00> : vector<16x128xf32>
    %3 = tpu.matmul %1, %2, %cst {dimension_numbers = #tpu.dot_dimension_numbers<[1], [0], [0], [1], [0, 0, 1, 1], [], []>} : vector<16x32xf32>, vector<32x128xf32>, vector<16x128xf32> -> vector<16x128xf32>
    %c0_4 = arith.constant 0 : index
    %c0_5 = arith.constant 0 : index
    %4 = vector.load %arg3[%c0_4, %c0_5] : memref<1x128xf32, #tpu.memory_space<vmem>>, vector<1x128xf32>
    %5 = vector.broadcast %4 : vector<1x128xf32> to vector<16x128xf32>
    %6 = arith.addf %3, %5 : vector<16x128xf32>
    %7 = vector.shape_cast %6 : vector<16x128xf32> to vector<8x2x128xf32>
    %8 = tpu.iota {dimensions = array<i32: 1>} : vector<2x128xi32>
    %c32_i32 = arith.constant 32 : i32
    %c0_i32 = arith.constant 0 : i32
    %9 = arith.cmpi eq, %c32_i32, %c0_i32 : i32
    %c1_i32 = arith.constant 1 : i32
    %10 = arith.select %9, %c1_i32, %c32_i32 : i32
    %11 = vector.broadcast %10 : i32 to vector<2x128xi32>
    %12 = arith.remsi %8, %11 : vector<2x128xi32>
    %c0_i32_6 = arith.constant 0 : i32
    %13 = vector.broadcast %c0_i32_6 : i32 to vector<2x128xi32>
    %14 = arith.cmpi ne, %12, %13 : vector<2x128xi32>
    %c0_i32_7 = arith.constant 0 : i32
    %15 = vector.broadcast %c0_i32_7 : i32 to vector<2x128xi32>
    %16 = arith.cmpi slt, %12, %15 : vector<2x128xi32>
    %c0_i32_8 = arith.constant 0 : i32
    %17 = arith.cmpi slt, %10, %c0_i32_8 : i32
    %18 = vector.broadcast %17 : i1 to vector<2x128xi1>
    %19 = vector.broadcast %18 : vector<2x128xi1> to vector<2x128xi1>
    %20 = arith.xori %16, %19 : vector<2x128xi1>
    %21 = arith.andi %20, %14 : vector<2x128xi1>
    %22 = vector.broadcast %10 : i32 to vector<2x128xi32>
    %23 = arith.addi %12, %22 : vector<2x128xi32>
    %24 = arith.select %21, %23, %12 : vector<2x128xi1>, vector<2x128xi32>
    %c16_i32 = arith.constant 16 : i32
    %25 = vector.broadcast %c16_i32 : i32 to vector<2x128xi32>
    %26 = arith.cmpi slt, %24, %25 : vector<2x128xi32>
    %c0_9 = arith.constant 0 : index
    %c0_10 = arith.constant 0 : index
    %27 = vector.load %arg2[%c0_9, %c0_10] : memref<32x128xf32, #tpu.memory_space<vmem>>, vector<32x128xf32>
    %c0_11 = arith.constant 0 : index
    %c0_12 = arith.constant 0 : index
    %28 = vector.load %arg4[%c0_11, %c0_12] : memref<2x32xf32, #tpu.memory_space<vmem>>, vector<2x32xf32>
    %c0_13 = arith.constant 0 : index
    %c0_14 = arith.constant 0 : index
    %29 = vector.load %arg5[%c0_13, %c0_14] : memref<2x32xf32, #tpu.memory_space<vmem>>, vector<2x32xf32>
    %30 = vector.extract_strided_slice %7 {offsets = [0, 0, 0], sizes = [1, 2, 128], strides = [1, 1, 1]} : vector<8x2x128xf32> to vector<1x2x128xf32>
    %31 = vector.shape_cast %30 : vector<1x2x128xf32> to vector<2x128xf32>
    %32 = vector.extract_strided_slice %7 {offsets = [7, 0, 0], sizes = [1, 2, 128], strides = [1, 1, 1]} : vector<8x2x128xf32> to vector<1x2x128xf32>
    %33 = vector.shape_cast %32 : vector<1x2x128xf32> to vector<2x128xf32>
    %34 = arith.select %26, %31, %33 : vector<2x128xi1>, vector<2x128xf32>
    %cst_15 = arith.constant dense<0.000000e+00> : vector<2x128xf32>
    %35 = tpu.matmul %28, %27, %cst_15 {dimension_numbers = #tpu.dot_dimension_numbers<[1], [0], [0], [1], [0, 0, 1, 1], [], []>} : vector<2x32xf32>, vector<32x128xf32>, vector<2x128xf32> -> vector<2x128xf32>
    %36 = arith.addf %34, %35 : vector<2x128xf32>
    %37 = vector.extract_strided_slice %36 {offsets = [0, 0], sizes = [2, 32], strides = [1, 1]} : vector<2x128xf32> to vector<2x32xf32>
    %38 = arith.negf %37 : vector<2x32xf32>
    %39 = math.exp %38 : vector<2x32xf32>
    %cst_16 = arith.constant 1.000000e+00 : f32
    %40 = vector.broadcast %cst_16 : f32 to vector<2x32xf32>
    %41 = arith.addf %40, %39 : vector<2x32xf32>
    %42 = arith.divf %40, %41 : vector<2x32xf32>
    %43 = vector.extract_strided_slice %36 {offsets = [0, 32], sizes = [2, 32], strides = [1, 1]} : vector<2x128xf32> to vector<2x32xf32>
    %44 = arith.negf %43 : vector<2x32xf32>
    %45 = math.exp %44 : vector<2x32xf32>
    %cst_17 = arith.constant 1.000000e+00 : f32
    %46 = vector.broadcast %cst_17 : f32 to vector<2x32xf32>
    %47 = arith.addf %46, %45 : vector<2x32xf32>
    %48 = arith.divf %46, %47 : vector<2x32xf32>
    %49 = vector.extract_strided_slice %36 {offsets = [0, 64], sizes = [2, 32], strides = [1, 1]} : vector<2x128xf32> to vector<2x32xf32>
    %50 = math.tanh %49 : vector<2x32xf32>
    %51 = vector.extract_strided_slice %36 {offsets = [0, 96], sizes = [2, 32], strides = [1, 1]} : vector<2x128xf32> to vector<2x32xf32>
    %52 = arith.negf %51 : vector<2x32xf32>
    %53 = math.exp %52 : vector<2x32xf32>
    %cst_18 = arith.constant 1.000000e+00 : f32
    %54 = vector.broadcast %cst_18 : f32 to vector<2x32xf32>
    %55 = arith.addf %54, %53 : vector<2x32xf32>
    %56 = arith.divf %54, %55 : vector<2x32xf32>
    %57 = arith.mulf %48, %29 : vector<2x32xf32>
    %58 = arith.mulf %42, %50 : vector<2x32xf32>
    %59 = arith.addf %57, %58 : vector<2x32xf32>
    %60 = math.tanh %59 : vector<2x32xf32>
    %61 = arith.mulf %56, %60 : vector<2x32xf32>
    %62 = vector.extract_strided_slice %61 {offsets = [0, 0], sizes = [2, 16], strides = [1, 1]} : vector<2x32xf32> to vector<2x16xf32>
    %63 = vector.shape_cast %62 : vector<2x16xf32> to vector<1x2x16xf32>
    %c0_19 = arith.constant 0 : index
    %c0_20 = arith.constant 0 : index
    %c0_21 = arith.constant 0 : index
    %64 = vector.load %arg9[%c0_19, %c0_20, %c0_21] : memref<8x2x32xf32, #tpu.memory_space<vmem>>, vector<1x2x16xf32>
    tpu.vector_store %arg9[%c0_19, %c0_20, %c0_21], %63 {strides = array<i32>} : memref<8x2x32xf32, #tpu.memory_space<vmem>>, vector<1x2x16xf32>,
    %65 = vector.extract_strided_slice %61 {offsets = [0, 16], sizes = [2, 16], strides = [1, 1]} : vector<2x32xf32> to vector<2x16xf32>
    %66 = vector.shape_cast %65 : vector<2x16xf32> to vector<1x2x16xf32>
    %c7 = arith.constant 7 : index
    %c0_22 = arith.constant 0 : index
    %c16 = arith.constant 16 : index
    %67 = vector.load %arg9[%c7, %c0_22, %c16] : memref<8x2x32xf32, #tpu.memory_space<vmem>>, vector<1x2x16xf32>
    tpu.vector_store %arg9[%c7, %c0_22, %c16], %66 {strides = array<i32>} : memref<8x2x32xf32, #tpu.memory_space<vmem>>, vector<1x2x16xf32>,
    %68 = vector.extract_strided_slice %7 {offsets = [1, 0, 0], sizes = [1, 2, 128], strides = [1, 1, 1]} : vector<8x2x128xf32> to vector<1x2x128xf32>
    %69 = vector.shape_cast %68 : vector<1x2x128xf32> to vector<2x128xf32>
    %70 = vector.extract_strided_slice %7 {offsets = [6, 0, 0], sizes = [1, 2, 128], strides = [1, 1, 1]} : vector<8x2x128xf32> to vector<1x2x128xf32>
    %71 = vector.shape_cast %70 : vector<1x2x128xf32> to vector<2x128xf32>
    %72 = arith.select %26, %69, %71 : vector<2x128xi1>, vector<2x128xf32>
    %cst_23 = arith.constant dense<0.000000e+00> : vector<2x128xf32>
    %73 = tpu.matmul %61, %27, %cst_23 {dimension_numbers = #tpu.dot_dimension_numbers<[1], [0], [0], [1], [0, 0, 1, 1], [], []>} : vector<2x32xf32>, vector<32x128xf32>, vector<2x128xf32> -> vector<2x128xf32>
    %74 = arith.addf %72, %73 : vector<2x128xf32>
    %75 = vector.extract_strided_slice %74 {offsets = [0, 0], sizes = [2, 32], strides = [1, 1]} : vector<2x128xf32> to vector<2x32xf32>
    %76 = arith.negf %75 : vector<2x32xf32>
    %77 = math.exp %76 : vector<2x32xf32>
    %cst_24 = arith.constant 1.000000e+00 : f32
    %78 = vector.broadcast %cst_24 : f32 to vector<2x32xf32>
    %79 = arith.addf %78, %77 : vector<2x32xf32>
    %80 = arith.divf %78, %79 : vector<2x32xf32>
    %81 = vector.extract_strided_slice %74 {offsets = [0, 32], sizes = [2, 32], strides = [1, 1]} : vector<2x128xf32> to vector<2x32xf32>
    %82 = arith.negf %81 : vector<2x32xf32>
    %83 = math.exp %82 : vector<2x32xf32>
    %cst_25 = arith.constant 1.000000e+00 : f32
    %84 = vector.broadcast %cst_25 : f32 to vector<2x32xf32>
    %85 = arith.addf %84, %83 : vector<2x32xf32>
    %86 = arith.divf %84, %85 : vector<2x32xf32>
    %87 = vector.extract_strided_slice %74 {offsets = [0, 64], sizes = [2, 32], strides = [1, 1]} : vector<2x128xf32> to vector<2x32xf32>
    %88 = math.tanh %87 : vector<2x32xf32>
    %89 = vector.extract_strided_slice %74 {offsets = [0, 96], sizes = [2, 32], strides = [1, 1]} : vector<2x128xf32> to vector<2x32xf32>
    %90 = arith.negf %89 : vector<2x32xf32>
    %91 = math.exp %90 : vector<2x32xf32>
    %cst_26 = arith.constant 1.000000e+00 : f32
    %92 = vector.broadcast %cst_26 : f32 to vector<2x32xf32>
    %93 = arith.addf %92, %91 : vector<2x32xf32>
    %94 = arith.divf %92, %93 : vector<2x32xf32>
    %95 = arith.mulf %86, %59 : vector<2x32xf32>
    %96 = arith.mulf %80, %88 : vector<2x32xf32>
    %97 = arith.addf %95, %96 : vector<2x32xf32>
    %98 = math.tanh %97 : vector<2x32xf32>
    %99 = arith.mulf %94, %98 : vector<2x32xf32>
    %100 = vector.extract_strided_slice %99 {offsets = [0, 0], sizes = [2, 16], strides = [1, 1]} : vector<2x32xf32> to vector<2x16xf32>
    %101 = vector.shape_cast %100 : vector<2x16xf32> to vector<1x2x16xf32>
    %c1 = arith.constant 1 : index
    %c0_27 = arith.constant 0 : index
    %c0_28 = arith.constant 0 : index
    %102 = vector.load %arg9[%c1, %c0_27, %c0_28] : memref<8x2x32xf32, #tpu.memory_space<vmem>>, vector<1x2x16xf32>
    tpu.vector_store %arg9[%c1, %c0_27, %c0_28], %101 {strides = array<i32>} : memref<8x2x32xf32, #tpu.memory_space<vmem>>, vector<1x2x16xf32>,
    %103 = vector.extract_strided_slice %99 {offsets = [0, 16], sizes = [2, 16], strides = [1, 1]} : vector<2x32xf32> to vector<2x16xf32>
    %104 = vector.shape_cast %103 : vector<2x16xf32> to vector<1x2x16xf32>
    %c6 = arith.constant 6 : index
    %c0_29 = arith.constant 0 : index
    %c16_30 = arith.constant 16 : index
    %105 = vector.load %arg9[%c6, %c0_29, %c16_30] : memref<8x2x32xf32, #tpu.memory_space<vmem>>, vector<1x2x16xf32>
    tpu.vector_store %arg9[%c6, %c0_29, %c16_30], %104 {strides = array<i32>} : memref<8x2x32xf32, #tpu.memory_space<vmem>>, vector<1x2x16xf32>,
    %106 = vector.extract_strided_slice %7 {offsets = [2, 0, 0], sizes = [1, 2, 128], strides = [1, 1, 1]} : vector<8x2x128xf32> to vector<1x2x128xf32>
    %107 = vector.shape_cast %106 : vector<1x2x128xf32> to vector<2x128xf32>
    %108 = vector.extract_strided_slice %7 {offsets = [5, 0, 0], sizes = [1, 2, 128], strides = [1, 1, 1]} : vector<8x2x128xf32> to vector<1x2x128xf32>
    %109 = vector.shape_cast %108 : vector<1x2x128xf32> to vector<2x128xf32>
    %110 = arith.select %26, %107, %109 : vector<2x128xi1>, vector<2x128xf32>
    %cst_31 = arith.constant dense<0.000000e+00> : vector<2x128xf32>
    %111 = tpu.matmul %99, %27, %cst_31 {dimension_numbers = #tpu.dot_dimension_numbers<[1], [0], [0], [1], [0, 0, 1, 1], [], []>} : vector<2x32xf32>, vector<32x128xf32>, vector<2x128xf32> -> vector<2x128xf32>
    %112 = arith.addf %110, %111 : vector<2x128xf32>
    %113 = vector.extract_strided_slice %112 {offsets = [0, 0], sizes = [2, 32], strides = [1, 1]} : vector<2x128xf32> to vector<2x32xf32>
    %114 = arith.negf %113 : vector<2x32xf32>
    %115 = math.exp %114 : vector<2x32xf32>
    %cst_32 = arith.constant 1.000000e+00 : f32
    %116 = vector.broadcast %cst_32 : f32 to vector<2x32xf32>
    %117 = arith.addf %116, %115 : vector<2x32xf32>
    %118 = arith.divf %116, %117 : vector<2x32xf32>
    %119 = vector.extract_strided_slice %112 {offsets = [0, 32], sizes = [2, 32], strides = [1, 1]} : vector<2x128xf32> to vector<2x32xf32>
    %120 = arith.negf %119 : vector<2x32xf32>
    %121 = math.exp %120 : vector<2x32xf32>
    %cst_33 = arith.constant 1.000000e+00 : f32
    %122 = vector.broadcast %cst_33 : f32 to vector<2x32xf32>
    %123 = arith.addf %122, %121 : vector<2x32xf32>
    %124 = arith.divf %122, %123 : vector<2x32xf32>
    %125 = vector.extract_strided_slice %112 {offsets = [0, 64], sizes = [2, 32], strides = [1, 1]} : vector<2x128xf32> to vector<2x32xf32>
    %126 = math.tanh %125 : vector<2x32xf32>
    %127 = vector.extract_strided_slice %112 {offsets = [0, 96], sizes = [2, 32], strides = [1, 1]} : vector<2x128xf32> to vector<2x32xf32>
    %128 = arith.negf %127 : vector<2x32xf32>
    %129 = math.exp %128 : vector<2x32xf32>
    %cst_34 = arith.constant 1.000000e+00 : f32
    %130 = vector.broadcast %cst_34 : f32 to vector<2x32xf32>
    %131 = arith.addf %130, %129 : vector<2x32xf32>
    %132 = arith.divf %130, %131 : vector<2x32xf32>
    %133 = arith.mulf %124, %97 : vector<2x32xf32>
    %134 = arith.mulf %118, %126 : vector<2x32xf32>
    %135 = arith.addf %133, %134 : vector<2x32xf32>
    %136 = math.tanh %135 : vector<2x32xf32>
    %137 = arith.mulf %132, %136 : vector<2x32xf32>
    %138 = vector.extract_strided_slice %137 {offsets = [0, 0], sizes = [2, 16], strides = [1, 1]} : vector<2x32xf32> to vector<2x16xf32>
    %139 = vector.shape_cast %138 : vector<2x16xf32> to vector<1x2x16xf32>
    %c2 = arith.constant 2 : index
    %c0_35 = arith.constant 0 : index
    %c0_36 = arith.constant 0 : index
    %140 = vector.load %arg9[%c2, %c0_35, %c0_36] : memref<8x2x32xf32, #tpu.memory_space<vmem>>, vector<1x2x16xf32>
    tpu.vector_store %arg9[%c2, %c0_35, %c0_36], %139 {strides = array<i32>} : memref<8x2x32xf32, #tpu.memory_space<vmem>>, vector<1x2x16xf32>,
    %141 = vector.extract_strided_slice %137 {offsets = [0, 16], sizes = [2, 16], strides = [1, 1]} : vector<2x32xf32> to vector<2x16xf32>
    %142 = vector.shape_cast %141 : vector<2x16xf32> to vector<1x2x16xf32>
    %c5 = arith.constant 5 : index
    %c0_37 = arith.constant 0 : index
    %c16_38 = arith.constant 16 : index
    %143 = vector.load %arg9[%c5, %c0_37, %c16_38] : memref<8x2x32xf32, #tpu.memory_space<vmem>>, vector<1x2x16xf32>
    tpu.vector_store %arg9[%c5, %c0_37, %c16_38], %142 {strides = array<i32>} : memref<8x2x32xf32, #tpu.memory_space<vmem>>, vector<1x2x16xf32>,
    %144 = vector.extract_strided_slice %7 {offsets = [3, 0, 0], sizes = [1, 2, 128], strides = [1, 1, 1]} : vector<8x2x128xf32> to vector<1x2x128xf32>
    %145 = vector.shape_cast %144 : vector<1x2x128xf32> to vector<2x128xf32>
    %146 = vector.extract_strided_slice %7 {offsets = [4, 0, 0], sizes = [1, 2, 128], strides = [1, 1, 1]} : vector<8x2x128xf32> to vector<1x2x128xf32>
    %147 = vector.shape_cast %146 : vector<1x2x128xf32> to vector<2x128xf32>
    %148 = arith.select %26, %145, %147 : vector<2x128xi1>, vector<2x128xf32>
    %cst_39 = arith.constant dense<0.000000e+00> : vector<2x128xf32>
    %149 = tpu.matmul %137, %27, %cst_39 {dimension_numbers = #tpu.dot_dimension_numbers<[1], [0], [0], [1], [0, 0, 1, 1], [], []>} : vector<2x32xf32>, vector<32x128xf32>, vector<2x128xf32> -> vector<2x128xf32>
    %150 = arith.addf %148, %149 : vector<2x128xf32>
    %151 = vector.extract_strided_slice %150 {offsets = [0, 0], sizes = [2, 32], strides = [1, 1]} : vector<2x128xf32> to vector<2x32xf32>
    %152 = arith.negf %151 : vector<2x32xf32>
    %153 = math.exp %152 : vector<2x32xf32>
    %cst_40 = arith.constant 1.000000e+00 : f32
    %154 = vector.broadcast %cst_40 : f32 to vector<2x32xf32>
    %155 = arith.addf %154, %153 : vector<2x32xf32>
    %156 = arith.divf %154, %155 : vector<2x32xf32>
    %157 = vector.extract_strided_slice %150 {offsets = [0, 32], sizes = [2, 32], strides = [1, 1]} : vector<2x128xf32> to vector<2x32xf32>
    %158 = arith.negf %157 : vector<2x32xf32>
    %159 = math.exp %158 : vector<2x32xf32>
    %cst_41 = arith.constant 1.000000e+00 : f32
    %160 = vector.broadcast %cst_41 : f32 to vector<2x32xf32>
    %161 = arith.addf %160, %159 : vector<2x32xf32>
    %162 = arith.divf %160, %161 : vector<2x32xf32>
    %163 = vector.extract_strided_slice %150 {offsets = [0, 64], sizes = [2, 32], strides = [1, 1]} : vector<2x128xf32> to vector<2x32xf32>
    %164 = math.tanh %163 : vector<2x32xf32>
    %165 = vector.extract_strided_slice %150 {offsets = [0, 96], sizes = [2, 32], strides = [1, 1]} : vector<2x128xf32> to vector<2x32xf32>
    %166 = arith.negf %165 : vector<2x32xf32>
    %167 = math.exp %166 : vector<2x32xf32>
    %cst_42 = arith.constant 1.000000e+00 : f32
    %168 = vector.broadcast %cst_42 : f32 to vector<2x32xf32>
    %169 = arith.addf %168, %167 : vector<2x32xf32>
    %170 = arith.divf %168, %169 : vector<2x32xf32>
    %171 = arith.mulf %162, %135 : vector<2x32xf32>
    %172 = arith.mulf %156, %164 : vector<2x32xf32>
    %173 = arith.addf %171, %172 : vector<2x32xf32>
    %174 = math.tanh %173 : vector<2x32xf32>
    %175 = arith.mulf %170, %174 : vector<2x32xf32>
    %176 = vector.extract_strided_slice %175 {offsets = [0, 0], sizes = [2, 16], strides = [1, 1]} : vector<2x32xf32> to vector<2x16xf32>
    %177 = vector.shape_cast %176 : vector<2x16xf32> to vector<1x2x16xf32>
    %c3 = arith.constant 3 : index
    %c0_43 = arith.constant 0 : index
    %c0_44 = arith.constant 0 : index
    %178 = vector.load %arg9[%c3, %c0_43, %c0_44] : memref<8x2x32xf32, #tpu.memory_space<vmem>>, vector<1x2x16xf32>
    tpu.vector_store %arg9[%c3, %c0_43, %c0_44], %177 {strides = array<i32>} : memref<8x2x32xf32, #tpu.memory_space<vmem>>, vector<1x2x16xf32>,
    %179 = vector.extract_strided_slice %175 {offsets = [0, 16], sizes = [2, 16], strides = [1, 1]} : vector<2x32xf32> to vector<2x16xf32>
    %180 = vector.shape_cast %179 : vector<2x16xf32> to vector<1x2x16xf32>
    %c4 = arith.constant 4 : index
    %c0_45 = arith.constant 0 : index
    %c16_46 = arith.constant 16 : index
    %181 = vector.load %arg9[%c4, %c0_45, %c16_46] : memref<8x2x32xf32, #tpu.memory_space<vmem>>, vector<1x2x16xf32>
    tpu.vector_store %arg9[%c4, %c0_45, %c16_46], %180 {strides = array<i32>} : memref<8x2x32xf32, #tpu.memory_space<vmem>>, vector<1x2x16xf32>,
    %182 = vector.extract_strided_slice %7 {offsets = [4, 0, 0], sizes = [1, 2, 128], strides = [1, 1, 1]} : vector<8x2x128xf32> to vector<1x2x128xf32>
    %183 = vector.shape_cast %182 : vector<1x2x128xf32> to vector<2x128xf32>
    %184 = vector.extract_strided_slice %7 {offsets = [3, 0, 0], sizes = [1, 2, 128], strides = [1, 1, 1]} : vector<8x2x128xf32> to vector<1x2x128xf32>
    %185 = vector.shape_cast %184 : vector<1x2x128xf32> to vector<2x128xf32>
    %186 = arith.select %26, %183, %185 : vector<2x128xi1>, vector<2x128xf32>
    %cst_47 = arith.constant dense<0.000000e+00> : vector<2x128xf32>
    %187 = tpu.matmul %175, %27, %cst_47 {dimension_numbers = #tpu.dot_dimension_numbers<[1], [0], [0], [1], [0, 0, 1, 1], [], []>} : vector<2x32xf32>, vector<32x128xf32>, vector<2x128xf32> -> vector<2x128xf32>
    %188 = arith.addf %186, %187 : vector<2x128xf32>
    %189 = vector.extract_strided_slice %188 {offsets = [0, 0], sizes = [2, 32], strides = [1, 1]} : vector<2x128xf32> to vector<2x32xf32>
    %190 = arith.negf %189 : vector<2x32xf32>
    %191 = math.exp %190 : vector<2x32xf32>
    %cst_48 = arith.constant 1.000000e+00 : f32
    %192 = vector.broadcast %cst_48 : f32 to vector<2x32xf32>
    %193 = arith.addf %192, %191 : vector<2x32xf32>
    %194 = arith.divf %192, %193 : vector<2x32xf32>
    %195 = vector.extract_strided_slice %188 {offsets = [0, 32], sizes = [2, 32], strides = [1, 1]} : vector<2x128xf32> to vector<2x32xf32>
    %196 = arith.negf %195 : vector<2x32xf32>
    %197 = math.exp %196 : vector<2x32xf32>
    %cst_49 = arith.constant 1.000000e+00 : f32
    %198 = vector.broadcast %cst_49 : f32 to vector<2x32xf32>
    %199 = arith.addf %198, %197 : vector<2x32xf32>
    %200 = arith.divf %198, %199 : vector<2x32xf32>
    %201 = vector.extract_strided_slice %188 {offsets = [0, 64], sizes = [2, 32], strides = [1, 1]} : vector<2x128xf32> to vector<2x32xf32>
    %202 = math.tanh %201 : vector<2x32xf32>
    %203 = vector.extract_strided_slice %188 {offsets = [0, 96], sizes = [2, 32], strides = [1, 1]} : vector<2x128xf32> to vector<2x32xf32>
    %204 = arith.negf %203 : vector<2x32xf32>
    %205 = math.exp %204 : vector<2x32xf32>
    %cst_50 = arith.constant 1.000000e+00 : f32
    %206 = vector.broadcast %cst_50 : f32 to vector<2x32xf32>
    %207 = arith.addf %206, %205 : vector<2x32xf32>
    %208 = arith.divf %206, %207 : vector<2x32xf32>
    %209 = arith.mulf %200, %173 : vector<2x32xf32>
    %210 = arith.mulf %194, %202 : vector<2x32xf32>
    %211 = arith.addf %209, %210 : vector<2x32xf32>
    %212 = math.tanh %211 : vector<2x32xf32>
    %213 = arith.mulf %208, %212 : vector<2x32xf32>
    %214 = vector.extract_strided_slice %213 {offsets = [0, 0], sizes = [2, 16], strides = [1, 1]} : vector<2x32xf32> to vector<2x16xf32>
    %215 = vector.shape_cast %214 : vector<2x16xf32> to vector<1x2x16xf32>
    %c4_51 = arith.constant 4 : index
    %c0_52 = arith.constant 0 : index
    %c0_53 = arith.constant 0 : index
    %216 = vector.load %arg9[%c4_51, %c0_52, %c0_53] : memref<8x2x32xf32, #tpu.memory_space<vmem>>, vector<1x2x16xf32>
    tpu.vector_store %arg9[%c4_51, %c0_52, %c0_53], %215 {strides = array<i32>} : memref<8x2x32xf32, #tpu.memory_space<vmem>>, vector<1x2x16xf32>,
    %217 = vector.extract_strided_slice %213 {offsets = [0, 16], sizes = [2, 16], strides = [1, 1]} : vector<2x32xf32> to vector<2x16xf32>
    %218 = vector.shape_cast %217 : vector<2x16xf32> to vector<1x2x16xf32>
    %c3_54 = arith.constant 3 : index
    %c0_55 = arith.constant 0 : index
    %c16_56 = arith.constant 16 : index
    %219 = vector.load %arg9[%c3_54, %c0_55, %c16_56] : memref<8x2x32xf32, #tpu.memory_space<vmem>>, vector<1x2x16xf32>
    tpu.vector_store %arg9[%c3_54, %c0_55, %c16_56], %218 {strides = array<i32>} : memref<8x2x32xf32, #tpu.memory_space<vmem>>, vector<1x2x16xf32>,
    %220 = vector.extract_strided_slice %7 {offsets = [5, 0, 0], sizes = [1, 2, 128], strides = [1, 1, 1]} : vector<8x2x128xf32> to vector<1x2x128xf32>
    %221 = vector.shape_cast %220 : vector<1x2x128xf32> to vector<2x128xf32>
    %222 = vector.extract_strided_slice %7 {offsets = [2, 0, 0], sizes = [1, 2, 128], strides = [1, 1, 1]} : vector<8x2x128xf32> to vector<1x2x128xf32>
    %223 = vector.shape_cast %222 : vector<1x2x128xf32> to vector<2x128xf32>
    %224 = arith.select %26, %221, %223 : vector<2x128xi1>, vector<2x128xf32>
    %cst_57 = arith.constant dense<0.000000e+00> : vector<2x128xf32>
    %225 = tpu.matmul %213, %27, %cst_57 {dimension_numbers = #tpu.dot_dimension_numbers<[1], [0], [0], [1], [0, 0, 1, 1], [], []>} : vector<2x32xf32>, vector<32x128xf32>, vector<2x128xf32> -> vector<2x128xf32>
    %226 = arith.addf %224, %225 : vector<2x128xf32>
    %227 = vector.extract_strided_slice %226 {offsets = [0, 0], sizes = [2, 32], strides = [1, 1]} : vector<2x128xf32> to vector<2x32xf32>
    %228 = arith.negf %227 : vector<2x32xf32>
    %229 = math.exp %228 : vector<2x32xf32>
    %cst_58 = arith.constant 1.000000e+00 : f32
    %230 = vector.broadcast %cst_58 : f32 to vector<2x32xf32>
    %231 = arith.addf %230, %229 : vector<2x32xf32>
    %232 = arith.divf %230, %231 : vector<2x32xf32>
    %233 = vector.extract_strided_slice %226 {offsets = [0, 32], sizes = [2, 32], strides = [1, 1]} : vector<2x128xf32> to vector<2x32xf32>
    %234 = arith.negf %233 : vector<2x32xf32>
    %235 = math.exp %234 : vector<2x32xf32>
    %cst_59 = arith.constant 1.000000e+00 : f32
    %236 = vector.broadcast %cst_59 : f32 to vector<2x32xf32>
    %237 = arith.addf %236, %235 : vector<2x32xf32>
    %238 = arith.divf %236, %237 : vector<2x32xf32>
    %239 = vector.extract_strided_slice %226 {offsets = [0, 64], sizes = [2, 32], strides = [1, 1]} : vector<2x128xf32> to vector<2x32xf32>
    %240 = math.tanh %239 : vector<2x32xf32>
    %241 = vector.extract_strided_slice %226 {offsets = [0, 96], sizes = [2, 32], strides = [1, 1]} : vector<2x128xf32> to vector<2x32xf32>
    %242 = arith.negf %241 : vector<2x32xf32>
    %243 = math.exp %242 : vector<2x32xf32>
    %cst_60 = arith.constant 1.000000e+00 : f32
    %244 = vector.broadcast %cst_60 : f32 to vector<2x32xf32>
    %245 = arith.addf %244, %243 : vector<2x32xf32>
    %246 = arith.divf %244, %245 : vector<2x32xf32>
    %247 = arith.mulf %238, %211 : vector<2x32xf32>
    %248 = arith.mulf %232, %240 : vector<2x32xf32>
    %249 = arith.addf %247, %248 : vector<2x32xf32>
    %250 = math.tanh %249 : vector<2x32xf32>
    %251 = arith.mulf %246, %250 : vector<2x32xf32>
    %252 = vector.extract_strided_slice %251 {offsets = [0, 0], sizes = [2, 16], strides = [1, 1]} : vector<2x32xf32> to vector<2x16xf32>
    %253 = vector.shape_cast %252 : vector<2x16xf32> to vector<1x2x16xf32>
    %c5_61 = arith.constant 5 : index
    %c0_62 = arith.constant 0 : index
    %c0_63 = arith.constant 0 : index
    %254 = vector.load %arg9[%c5_61, %c0_62, %c0_63] : memref<8x2x32xf32, #tpu.memory_space<vmem>>, vector<1x2x16xf32>
    tpu.vector_store %arg9[%c5_61, %c0_62, %c0_63], %253 {strides = array<i32>} : memref<8x2x32xf32, #tpu.memory_space<vmem>>, vector<1x2x16xf32>,
    %255 = vector.extract_strided_slice %251 {offsets = [0, 16], sizes = [2, 16], strides = [1, 1]} : vector<2x32xf32> to vector<2x16xf32>
    %256 = vector.shape_cast %255 : vector<2x16xf32> to vector<1x2x16xf32>
    %c2_64 = arith.constant 2 : index
    %c0_65 = arith.constant 0 : index
    %c16_66 = arith.constant 16 : index
    %257 = vector.load %arg9[%c2_64, %c0_65, %c16_66] : memref<8x2x32xf32, #tpu.memory_space<vmem>>, vector<1x2x16xf32>
    tpu.vector_store %arg9[%c2_64, %c0_65, %c16_66], %256 {strides = array<i32>} : memref<8x2x32xf32, #tpu.memory_space<vmem>>, vector<1x2x16xf32>,
    %258 = vector.extract_strided_slice %7 {offsets = [6, 0, 0], sizes = [1, 2, 128], strides = [1, 1, 1]} : vector<8x2x128xf32> to vector<1x2x128xf32>
    %259 = vector.shape_cast %258 : vector<1x2x128xf32> to vector<2x128xf32>
    %260 = vector.extract_strided_slice %7 {offsets = [1, 0, 0], sizes = [1, 2, 128], strides = [1, 1, 1]} : vector<8x2x128xf32> to vector<1x2x128xf32>
    %261 = vector.shape_cast %260 : vector<1x2x128xf32> to vector<2x128xf32>
    %262 = arith.select %26, %259, %261 : vector<2x128xi1>, vector<2x128xf32>
    %cst_67 = arith.constant dense<0.000000e+00> : vector<2x128xf32>
    %263 = tpu.matmul %251, %27, %cst_67 {dimension_numbers = #tpu.dot_dimension_numbers<[1], [0], [0], [1], [0, 0, 1, 1], [], []>} : vector<2x32xf32>, vector<32x128xf32>, vector<2x128xf32> -> vector<2x128xf32>
    %264 = arith.addf %262, %263 : vector<2x128xf32>
    %265 = vector.extract_strided_slice %264 {offsets = [0, 0], sizes = [2, 32], strides = [1, 1]} : vector<2x128xf32> to vector<2x32xf32>
    %266 = arith.negf %265 : vector<2x32xf32>
    %267 = math.exp %266 : vector<2x32xf32>
    %cst_68 = arith.constant 1.000000e+00 : f32
    %268 = vector.broadcast %cst_68 : f32 to vector<2x32xf32>
    %269 = arith.addf %268, %267 : vector<2x32xf32>
    %270 = arith.divf %268, %269 : vector<2x32xf32>
    %271 = vector.extract_strided_slice %264 {offsets = [0, 32], sizes = [2, 32], strides = [1, 1]} : vector<2x128xf32> to vector<2x32xf32>
    %272 = arith.negf %271 : vector<2x32xf32>
    %273 = math.exp %272 : vector<2x32xf32>
    %cst_69 = arith.constant 1.000000e+00 : f32
    %274 = vector.broadcast %cst_69 : f32 to vector<2x32xf32>
    %275 = arith.addf %274, %273 : vector<2x32xf32>
    %276 = arith.divf %274, %275 : vector<2x32xf32>
    %277 = vector.extract_strided_slice %264 {offsets = [0, 64], sizes = [2, 32], strides = [1, 1]} : vector<2x128xf32> to vector<2x32xf32>
    %278 = math.tanh %277 : vector<2x32xf32>
    %279 = vector.extract_strided_slice %264 {offsets = [0, 96], sizes = [2, 32], strides = [1, 1]} : vector<2x128xf32> to vector<2x32xf32>
    %280 = arith.negf %279 : vector<2x32xf32>
    %281 = math.exp %280 : vector<2x32xf32>
    %cst_70 = arith.constant 1.000000e+00 : f32
    %282 = vector.broadcast %cst_70 : f32 to vector<2x32xf32>
    %283 = arith.addf %282, %281 : vector<2x32xf32>
    %284 = arith.divf %282, %283 : vector<2x32xf32>
    %285 = arith.mulf %276, %249 : vector<2x32xf32>
    %286 = arith.mulf %270, %278 : vector<2x32xf32>
    %287 = arith.addf %285, %286 : vector<2x32xf32>
    %288 = math.tanh %287 : vector<2x32xf32>
    %289 = arith.mulf %284, %288 : vector<2x32xf32>
    %290 = vector.extract_strided_slice %289 {offsets = [0, 0], sizes = [2, 16], strides = [1, 1]} : vector<2x32xf32> to vector<2x16xf32>
    %291 = vector.shape_cast %290 : vector<2x16xf32> to vector<1x2x16xf32>
    %c6_71 = arith.constant 6 : index
    %c0_72 = arith.constant 0 : index
    %c0_73 = arith.constant 0 : index
    %292 = vector.load %arg9[%c6_71, %c0_72, %c0_73] : memref<8x2x32xf32, #tpu.memory_space<vmem>>, vector<1x2x16xf32>
    tpu.vector_store %arg9[%c6_71, %c0_72, %c0_73], %291 {strides = array<i32>} : memref<8x2x32xf32, #tpu.memory_space<vmem>>, vector<1x2x16xf32>,
    %293 = vector.extract_strided_slice %289 {offsets = [0, 16], sizes = [2, 16], strides = [1, 1]} : vector<2x32xf32> to vector<2x16xf32>
    %294 = vector.shape_cast %293 : vector<2x16xf32> to vector<1x2x16xf32>
    %c1_74 = arith.constant 1 : index
    %c0_75 = arith.constant 0 : index
    %c16_76 = arith.constant 16 : index
    %295 = vector.load %arg9[%c1_74, %c0_75, %c16_76] : memref<8x2x32xf32, #tpu.memory_space<vmem>>, vector<1x2x16xf32>
    tpu.vector_store %arg9[%c1_74, %c0_75, %c16_76], %294 {strides = array<i32>} : memref<8x2x32xf32, #tpu.memory_space<vmem>>, vector<1x2x16xf32>,
    %296 = vector.extract_strided_slice %7 {offsets = [7, 0, 0], sizes = [1, 2, 128], strides = [1, 1, 1]} : vector<8x2x128xf32> to vector<1x2x128xf32>
    %297 = vector.shape_cast %296 : vector<1x2x128xf32> to vector<2x128xf32>
    %298 = vector.extract_strided_slice %7 {offsets = [0, 0, 0], sizes = [1, 2, 128], strides = [1, 1, 1]} : vector<8x2x128xf32> to vector<1x2x128xf32>
    %299 = vector.shape_cast %298 : vector<1x2x128xf32> to vector<2x128xf32>
    %300 = arith.select %26, %297, %299 : vector<2x128xi1>, vector<2x128xf32>
    %cst_77 = arith.constant dense<0.000000e+00> : vector<2x128xf32>
    %301 = tpu.matmul %289, %27, %cst_77 {dimension_numbers = #tpu.dot_dimension_numbers<[1], [0], [0], [1], [0, 0, 1, 1], [], []>} : vector<2x32xf32>, vector<32x128xf32>, vector<2x128xf32> -> vector<2x128xf32>
    %302 = arith.addf %300, %301 : vector<2x128xf32>
    %303 = vector.extract_strided_slice %302 {offsets = [0, 0], sizes = [2, 32], strides = [1, 1]} : vector<2x128xf32> to vector<2x32xf32>
    %304 = arith.negf %303 : vector<2x32xf32>
    %305 = math.exp %304 : vector<2x32xf32>
    %cst_78 = arith.constant 1.000000e+00 : f32
    %306 = vector.broadcast %cst_78 : f32 to vector<2x32xf32>
    %307 = arith.addf %306, %305 : vector<2x32xf32>
    %308 = arith.divf %306, %307 : vector<2x32xf32>
    %309 = vector.extract_strided_slice %302 {offsets = [0, 32], sizes = [2, 32], strides = [1, 1]} : vector<2x128xf32> to vector<2x32xf32>
    %310 = arith.negf %309 : vector<2x32xf32>
    %311 = math.exp %310 : vector<2x32xf32>
    %cst_79 = arith.constant 1.000000e+00 : f32
    %312 = vector.broadcast %cst_79 : f32 to vector<2x32xf32>
    %313 = arith.addf %312, %311 : vector<2x32xf32>
    %314 = arith.divf %312, %313 : vector<2x32xf32>
    %315 = vector.extract_strided_slice %302 {offsets = [0, 64], sizes = [2, 32], strides = [1, 1]} : vector<2x128xf32> to vector<2x32xf32>
    %316 = math.tanh %315 : vector<2x32xf32>
    %317 = vector.extract_strided_slice %302 {offsets = [0, 96], sizes = [2, 32], strides = [1, 1]} : vector<2x128xf32> to vector<2x32xf32>
    %318 = arith.negf %317 : vector<2x32xf32>
    %319 = math.exp %318 : vector<2x32xf32>
    %cst_80 = arith.constant 1.000000e+00 : f32
    %320 = vector.broadcast %cst_80 : f32 to vector<2x32xf32>
    %321 = arith.addf %320, %319 : vector<2x32xf32>
    %322 = arith.divf %320, %321 : vector<2x32xf32>
    %323 = arith.mulf %314, %287 : vector<2x32xf32>
    %324 = arith.mulf %308, %316 : vector<2x32xf32>
    %325 = arith.addf %323, %324 : vector<2x32xf32>
    %326 = math.tanh %325 : vector<2x32xf32>
    %327 = arith.mulf %322, %326 : vector<2x32xf32>
    %328 = vector.extract_strided_slice %327 {offsets = [0, 0], sizes = [2, 16], strides = [1, 1]} : vector<2x32xf32> to vector<2x16xf32>
    %329 = vector.shape_cast %328 : vector<2x16xf32> to vector<1x2x16xf32>
    %c7_81 = arith.constant 7 : index
    %c0_82 = arith.constant 0 : index
    %c0_83 = arith.constant 0 : index
    %330 = vector.load %arg9[%c7_81, %c0_82, %c0_83] : memref<8x2x32xf32, #tpu.memory_space<vmem>>, vector<1x2x16xf32>
    tpu.vector_store %arg9[%c7_81, %c0_82, %c0_83], %329 {strides = array<i32>} : memref<8x2x32xf32, #tpu.memory_space<vmem>>, vector<1x2x16xf32>,
    %331 = vector.extract_strided_slice %327 {offsets = [0, 16], sizes = [2, 16], strides = [1, 1]} : vector<2x32xf32> to vector<2x16xf32>
    %332 = vector.shape_cast %331 : vector<2x16xf32> to vector<1x2x16xf32>
    %c0_84 = arith.constant 0 : index
    %c0_85 = arith.constant 0 : index
    %c16_86 = arith.constant 16 : index
    %333 = vector.load %arg9[%c0_84, %c0_85, %c16_86] : memref<8x2x32xf32, #tpu.memory_space<vmem>>, vector<1x2x16xf32>
    tpu.vector_store %arg9[%c0_84, %c0_85, %c16_86], %332 {strides = array<i32>} : memref<8x2x32xf32, #tpu.memory_space<vmem>>, vector<1x2x16xf32>,
    %c0_87 = arith.constant 0 : index
    %c0_88 = arith.constant 0 : index
    %c0_89 = arith.constant 0 : index
    %334 = vector.load %arg9[%c0_87, %c0_88, %c0_89] : memref<8x2x32xf32, #tpu.memory_space<vmem>>, vector<8x2x32xf32>
    %335 = vector.shape_cast %334 : vector<8x2x32xf32> to vector<16x32xf32>
    %c0_90 = arith.constant 0 : index
    %c0_91 = arith.constant 0 : index
    %336 = vector.load %arg6[%c0_90, %c0_91] : memref<32x5xf32, #tpu.memory_space<vmem>>, vector<32x5xf32>
    %cst_92 = arith.constant dense<0.000000e+00> : vector<16x5xf32>
    %337 = tpu.matmul %335, %336, %cst_92 {dimension_numbers = #tpu.dot_dimension_numbers<[1], [0], [0], [1], [0, 0, 1, 1], [], []>} : vector<16x32xf32>, vector<32x5xf32>, vector<16x5xf32> -> vector<16x5xf32>
    %c0_93 = arith.constant 0 : index
    %c0_94 = arith.constant 0 : index
    %338 = vector.load %arg7[%c0_93, %c0_94] : memref<1x5xf32, #tpu.memory_space<vmem>>, vector<1x5xf32>
    %339 = vector.broadcast %338 : vector<1x5xf32> to vector<16x5xf32>
    %340 = arith.addf %337, %339 : vector<16x5xf32>
    %341 = vector.shape_cast %340 : vector<16x5xf32> to vector<8x2x5xf32>
    %c0_95 = arith.constant 0 : index
    %c0_96 = arith.constant 0 : index
    %c0_97 = arith.constant 0 : index
    %342 = vector.load %arg8[%c0_95, %c0_96, %c0_97] : memref<8x2x5xf32, #tpu.memory_space<vmem>>, vector<8x2x5xf32>
    tpu.vector_store %arg8[%c0_95, %c0_96, %c0_97], %341 {strides = array<i32>} : memref<8x2x5xf32, #tpu.memory_space<vmem>>, vector<8x2x5xf32>,
    return
  }
}

</mosaic_0001>

<llo_original>
// kernel: squeeze.4
$region0: #{squeeze.4}
  %s0 = inlined_call_operand.vmem [shape: f32[1,2,2,16], index: 0, kind: input, shape index: {}]
  %s1 = inlined_call_operand.vmem [shape: f32[2,32], index: 1, kind: output, shape index: {}]
  $region1: #{squeeze.4} parent=0
    #allocation0 [shape = 'u8[4096]{0}', space=vmem, size = 0x1000, scoped, tag = 'scoped mem for output reshape']
    #allocation1 [shape = 'u8[8192]{0}', space=vmem, size = 0x2000, scoped, tag = 'scoped mem for input reshape']
    %s3 = sshllo.u32 0, 2
    %s4 = scalar_lea.vmem %s0, 2
    %v5 = vld [vmem:[%s4] sm:%s3]
    %s6 = scalar_lea.vmem [#allocation1], 8
    %7 = vst [vmem:[%s6] sm:%s3] %v5
    %v8 = vld [vmem:[%s0] sm:%s3]
    %9 = vst [vmem:[#allocation1] sm:%s3] %v8
    %s10 = smov 3
    %v11 = vld [vmem:[#allocation1] ss:$8 sm:%s10]
    %vm12 = vcmask 130048
    %13 = vst.msk [vmem:[#allocation0] sm:$0x3] %vm12, %v11
    %s14 = scalar_lea.vmem [#allocation1], 1
    %s15 = smov 3
    %v16 = vld [vmem:[%s14] ss:$8 sm:%s15]
    %17 = vrot.lane.b32.xlu0 %v16, 16
    %v18 = vpop.permute.xlu0 %17
    %vm19 = vcmask 261248
    %20 = vst.msk [vmem:[#allocation0] sm:$0x3] %vm19, %v18
    %s22 = sshllo.u32 0, 2
    %v24 = vld [vmem:[#allocation0] sm:%s22]
    %s25 = sshllo.u32 0, 2
    %26 = vst [vmem:[%s1] sm:%s25] %v24

// kernel: bilstm_forward.3
$region0: #{bilstm_forward.3}
  #allocation0 [shape = 'u32[]', space=smem, size = 0x4, offset = 0x4, fixed_abs, tag = 'smem constant byte address 0x4 - core index']
  #allocation1 [shape = 'u32[144,128]{1,0:T(1,128)}', space=vmem, size = 0x12000, scoped, tag = 'internal scratch']
  #allocation2 [shape = 'f32[8,2,32]{2,1,0:T(2,128)}', space=vmem, size = 0x2000, scoped, tag = 'scratch operand']
  %s0 = inlined_call_operand.vmem [shape: f32[8,2,32], index: 0, kind: input, shape index: {}]
  %s1 = inlined_call_operand.vmem [shape: f32[32,128], index: 1, kind: input, shape index: {}]
  %s2 = inlined_call_operand.vmem [shape: f32[32,128], index: 2, kind: input, shape index: {}]
  %s3 = inlined_call_operand.vmem [shape: f32[1,128], index: 3, kind: input, shape index: {}]
  %s4 = inlined_call_operand.vmem [shape: f32[2,32], index: 4, kind: input, shape index: {}]
  %s5 = inlined_call_operand.vmem [shape: f32[2,32], index: 5, kind: input, shape index: {}]
  %s6 = inlined_call_operand.vmem [shape: f32[32,5], index: 6, kind: input, shape index: {}]
  %s7 = inlined_call_operand.vmem [shape: f32[1,5], index: 7, kind: input, shape index: {}]
  %s8 = inlined_call_operand.vmem [shape: f32[8,2,5], index: 8, kind: output, shape index: {}]
  %s9 = sld [smem:[#allocation0]]
  $region42: #{bilstm_forward.3} parent=0
    _
  %s11 = ssub.s32 1, %s9
  %s12 = scalar_select 0, %s11, %s9
  // Predicated region
  $region2: #{bilstm_forward.3} parent=0 // pred_check
    _
  $region3: #{bilstm_forward.3} parent=0 // pred_check_branch
    %14 = sbr.rel (0) target = $region5
  $region4: #{bilstm_forward.3} parent=0 // pred_region
    _
  $region5: #{bilstm_forward.3} parent=0 // pred_fallthru
    _
  // Predicated region
  $region6: #{bilstm_forward.3} parent=0 // pred_check
    _
  $region7: #{bilstm_forward.3} parent=0 // pred_check_branch
    %16 = sbr.rel (0) target = $region9
  $region8: #{bilstm_forward.3} parent=0 // pred_region
    _
  $region9: #{bilstm_forward.3} parent=0 // pred_fallthru
    _
  // Predicated region
  $region10: #{bilstm_forward.3} parent=0 // pred_check
    _
  $region11: #{bilstm_forward.3} parent=0 // pred_check_branch
    %18 = sbr.rel (0) target = $region13
  $region12: #{bilstm_forward.3} parent=0 // pred_region
    _
  $region13: #{bilstm_forward.3} parent=0 // pred_fallthru
    _
  // Predicated region
  $region14: #{bilstm_forward.3} parent=0 // pred_check
    _
  $region15: #{bilstm_forward.3} parent=0 // pred_check_branch
    %20 = sbr.rel (0) target = $region17
  $region16: #{bilstm_forward.3} parent=0 // pred_region
    _
  $region17: #{bilstm_forward.3} parent=0 // pred_fallthru
    _
  // Predicated region
  $region18: #{bilstm_forward.3} parent=0 // pred_check
    _
  $region19: #{bilstm_forward.3} parent=0 // pred_check_branch
    %22 = sbr.rel (0) target = $region21
  $region20: #{bilstm_forward.3} parent=0 // pred_region
    _
  $region21: #{bilstm_forward.3} parent=0 // pred_fallthru
    _
  // Predicated region
  $region22: #{bilstm_forward.3} parent=0 // pred_check
    _
  $region23: #{bilstm_forward.3} parent=0 // pred_check_branch
    %24 = sbr.rel (0) target = $region25
  $region24: #{bilstm_forward.3} parent=0 // pred_region
    _
  $region25: #{bilstm_forward.3} parent=0 // pred_fallthru
    _
  // Predicated region
  $region26: #{bilstm_forward.3} parent=0 // pred_check
    _
  $region27: #{bilstm_forward.3} parent=0 // pred_check_branch
    %26 = sbr.rel (0) target = $region29
  $region28: #{bilstm_forward.3} parent=0 // pred_region
    _
  $region29: #{bilstm_forward.3} parent=0 // pred_fallthru
    _
  // Predicated region
  $region30: #{bilstm_forward.3} parent=0 // pred_check
    _
  $region31: #{bilstm_forward.3} parent=0 // pred_check_branch
    %28 = sbr.rel (0) target = $region33
  $region32: #{bilstm_forward.3} parent=0 // pred_region
    _
  $region33: #{bilstm_forward.3} parent=0 // pred_fallthru
    _
  %v29 = vld [vmem:[%s0] sm:$0x3]
  %v30 = vld [vmem:[%s0 + $0x2] sm:$0x3]
  %v31 = vld [vmem:[%s0 + $0x4] sm:$0x3]
  %v32 = vld [vmem:[%s0 + $0x6] sm:$0x3]
  %v33 = vld [vmem:[%s0 + $0x8] sm:$0x3]
  %v34 = vld [vmem:[%s0 + $0xa] sm:$0x3]
  %v35 = vld [vmem:[%s0 + $0xc] sm:$0x3]
  %v36 = vld [vmem:[%s0 + $0xe] sm:$0x3]
  %v37 = vld [vmem:[%s1] sm:$0xff]
  %v38 = vld [vmem:[%s1 + $0x8] sm:$0xff]
  %v39 = vld [vmem:[%s1 + $0x10] sm:$0xff]
  %v40 = vld [vmem:[%s1 + $0x18] sm:$0xff]
  %v41 = vld [vmem:[%s3] sm:$0x1]
  %v43 = vlaneseq
  %v44 = vshrl.u32 %v43, 7
  %v45 = vsub.s32 0, %v44
  %v46 = vrot.slane %v41, %v45
  %v56 = vcombine.low %v29, %v30
  %v57 = vcombine.low %v31, %v32
  %v59 = vunpack.c.l.s4 1983009808
  %v60 = vunpack.c.0.s8 %v59
  %v61 = vlaneseq
  %v62 = vshrl.u32 %v61, 7
  %v63 = vsub.s32 %v60, %v62
  %v64 = vrot.slane %v56, %v63
  %v66 = vunpack.c.l.s4 1983009808
  %v67 = vunpack.c.0.s8 %v66
  %v68 = vlaneseq
  %v69 = vshrl.u32 %v68, 7
  %v70 = vsub.s32 %v67, %v69
  %v71 = vrot.slane %v57, %v70
  %v72 = vcombine.low %v64, %v71
  %v73 = vcombine.low %v33, %v34
  %v74 = vcombine.low %v35, %v36
  %v76 = vunpack.c.l.s4 1983009808
  %v77 = vunpack.c.0.s8 %v76
  %v78 = vlaneseq
  %v79 = vshrl.u32 %v78, 7
  %v80 = vsub.s32 %v77, %v79
  %v81 = vrot.slane %v73, %v80
  %v83 = vunpack.c.l.s4 1983009808
  %v84 = vunpack.c.0.s8 %v83
  %v85 = vlaneseq
  %v86 = vshrl.u32 %v85, 7
  %v87 = vsub.s32 %v84, %v86
  %v88 = vrot.slane %v74, %v87
  %v89 = vcombine.low %v81, %v88
  %vm90 = vcmask 261120
  %v91 = vsel %vm90, %v72, 0
  %v93 = vsel %vm90, %v89, 0
  %95 = vmatprep.subr.mxu0 0.0
  %96 = vmatpush1.msra.mxu0 %v37
  %97 = vmatprep.subr.mxu0 0.0
  %98 = vmatpush1.msra.mxu0 %v38
  %99 = vmatprep.subr.mxu0 0.0
  %100 = vmatpush1.msra.mxu0 %v39
  %101 = vmatprep.subr.mxu0 0.0
  %102 = vmatpush1.msra.mxu0 %v40
  %103 = vmatprep.subr.mxu0 0.0
  %104 = vmatpush1.msra.mxu0 0.0
  %105 = vmatprep.subr.mxu0 0.0
  %106 = vmatpush1.msra.mxu0 0.0
  %107 = vmatprep.subr.mxu0 0.0
  %108 = vmatpush1.msra.mxu0 0.0
  %109 = vmatprep.subr.mxu0 0.0
  %110 = vmatpush1.msra.mxu0 0.0
  %111 = vmatprep.subr.mxu0 0.0
  %112 = vmatpush1.msra.mxu0 0.0
  %113 = vmatprep.subr.mxu0 0.0
  %114 = vmatpush1.msra.mxu0 0.0
  %115 = vmatprep.subr.mxu0 0.0
  %116 = vmatpush1.msra.mxu0 0.0
  %117 = vmatprep.subr.mxu0 0.0
  %118 = vmatpush1.msra.mxu0 0.0
  %119 = vmatprep.subr.mxu0 0.0
  %120 = vmatpush1.msra.mxu0 0.0
  %121 = vmatprep.subr.mxu0 0.0
  %122 = vmatpush1.msra.mxu0 0.0
  %123 = vmatprep.subr.mxu0 0.0
  %124 = vmatpush1.msra.mxu0 0.0
  %125 = vmatprep.subr.mxu0 0.0
  %126 = vmatpush1.msra.mxu0 0.0
  %127 = vmatprep.subr.mxu0 0.0
  %128 = vmatpush1.msra.mxu0 0.0
  %129 = vmatprep.subr.mxu0 0.0
  %130 = vmatpush1.msra.mxu0 0.0
  %131 = vmatprep.subr.mxu0 0.0
  %132 = vmatpush1.msra.mxu0 0.0
  %133 = vmatprep.subr.mxu0 0.0
  %134 = vmatpush1.msra.mxu0 0.0
  %135 = vmatprep.subr.mxu0 0.0
  %136 = vmatpush1.msra.mxu0 0.0
  %137 = vmatprep.subr.mxu0 0.0
  %138 = vmatpush1.msra.mxu0 0.0
  %139 = vmatprep.subr.mxu0 0.0
  %140 = vmatpush1.msra.mxu0 0.0
  %141 = vmatprep.subr.mxu0 0.0
  %142 = vmatpush1.msra.mxu0 0.0
  %143 = vmatprep.subr.mxu0 0.0
  %144 = vmatpush1.msra.mxu0 0.0
  %145 = vmatprep.subr.mxu0 0.0
  %146 = vmatpush1.msra.mxu0 0.0
  %147 = vmatprep.subr.mxu0 0.0
  %148 = vmatpush1.msra.mxu0 0.0
  %149 = vmatprep.subr.mxu0 0.0
  %150 = vmatpush1.msra.mxu0 0.0
  %151 = vmatprep.subr.mxu0 0.0
  %152 = vmatpush1.msra.mxu0 0.0
  %153 = vmatprep.subr.mxu0 0.0
  %154 = vmatpush1.msra.mxu0 0.0
  %155 = vmatprep.subr.mxu0 0.0
  %156 = vmatpush1.msra.mxu0 0.0
  %157 = vmatprep.subr.mxu0 0.0
  %158 = vmatpush1.msra.mxu0 0.0
  %159 = vmatprep.mubr.f32.mxu0 0.0
  %160 = vmatmul.mubr.f32.gmra.mrb[0].mxu0 %v91
  %v161 = vpop.f32.mrb[0].mxu0
  %v162 = vadd.f32 %v46, %v161
  %v163 = vpop.f32.mrb[0].mxu0
  %164 = vmatprep.mubr.f32.mxu0 0.0
  %165 = vmatmul.mubr.f32.gmra.mrb[0].mxu0 %v93
  %v166 = vpop.f32.mrb[0].mxu0
  %v167 = vadd.f32 %v46, %v166
  %v168 = vpop.f32.mrb[0].mxu0
  %169 = vdwg.mxu0
  %v172 = vcombine.high %v162, %v162
  %v174 = vunpack.c.l.s4 1983009808
  %v175 = vunpack.c.0.s8 %v174
  %v176 = vlaneseq
  %v177 = vshrl.u32 %v176, 7
  %v178 = vsub.s32 %v175, %v177
  %v179 = vrot.slane %v162, %v178
  %v181 = vunpack.c.l.s4 1983009808
  %v182 = vunpack.c.0.s8 %v181
  %v183 = vlaneseq
  %v184 = vshrl.u32 %v183, 7
  %v185 = vsub.s32 %v182, %v184
  %v186 = vrot.slane %v172, %v185
  %v187 = vcombine.high %v179, %v179
  %v188 = vcombine.high %v186, %v186
  %v189 = vcombine.high %v167, %v167
  %v191 = vunpack.c.l.s4 1983009808
  %v192 = vunpack.c.0.s8 %v191
  %v193 = vlaneseq
  %v194 = vshrl.u32 %v193, 7
  %v195 = vsub.s32 %v192, %v194
  %v196 = vrot.slane %v167, %v195
  %v198 = vunpack.c.l.s4 1983009808
  %v199 = vunpack.c.0.s8 %v198
  %v200 = vlaneseq
  %v201 = vshrl.u32 %v200, 7
  %v202 = vsub.s32 %v199, %v201
  %v203 = vrot.slane %v189, %v202
  %v204 = vcombine.high %v196, %v196
  %v205 = vcombine.high %v203, %v203
  %v214 = vlaneseq
  %v215 = vand.u32 %v214, 127
  %vm216 = vcmp.lt.s32.totalorder %v215, 0
  %v217 = vsub.s32 0, %v215
  %v218 = vsel %vm216, %v217, %v215
  %v219 = vshrl.u32 %v218, 5
  %v220 = vand.u32 %v218, 31
  %v221 = vsub.s32 0, %v220
  %v222 = vsel %vm216, %v221, %v220
  %vm223 = vcmp.ne.s32.totalorder %v222, 0
  %vm224 = vcmp.lt.s32.totalorder %v222, 0
  %vm225 = vmand %vm224, %vm223
  %v226 = vadd.s32 %v222, 32
  %v227 = vsel %vm225, %v226, %v222
  %vm228 = vcmp.lt.s32.totalorder %v227, 16
  %v229 = vld [vmem:[%s2] sm:$0xff]
  %v230 = vld [vmem:[%s2 + $0x8] sm:$0xff]
  %v231 = vld [vmem:[%s2 + $0x10] sm:$0xff]
  %v232 = vld [vmem:[%s2 + $0x18] sm:$0xff]
  %v233 = vld [vmem:[%s4] sm:$0x3]
  %v234 = vld [vmem:[%s5] sm:$0x3]
  %v235 = vsel %vm228, %v179, %v205
  %v237 = vsel %vm90, %v233, 0
  %239 = vmatprep.subr.mxu0 0.0
  %240 = vmatpush1.msra.mxu0 %v229
  %241 = vmatprep.subr.mxu0 0.0
  %242 = vmatpush1.msra.mxu0 %v230
  %243 = vmatprep.subr.mxu0 0.0
  %244 = vmatpush1.msra.mxu0 %v231
  %245 = vmatprep.subr.mxu0 0.0
  %246 = vmatpush1.msra.mxu0 %v232
  %247 = vmatprep.subr.mxu0 0.0
  %248 = vmatpush1.msra.mxu0 0.0
  %249 = vmatprep.subr.mxu0 0.0
  %250 = vmatpush1.msra.mxu0 0.0
  %251 = vmatprep.subr.mxu0 0.0
  %252 = vmatpush1.msra.mxu0 0.0
  %253 = vmatprep.subr.mxu0 0.0
  %254 = vmatpush1.msra.mxu0 0.0
  %255 = vmatprep.subr.mxu0 0.0
  %256 = vmatpush1.msra.mxu0 0.0
  %257 = vmatprep.subr.mxu0 0.0
  %258 = vmatpush1.msra.mxu0 0.0
  %259 = vmatprep.subr.mxu0 0.0
  %260 = vmatpush1.msra.mxu0 0.0
  %261 = vmatprep.subr.mxu0 0.0
  %262 = vmatpush1.msra.mxu0 0.0
  %263 = vmatprep.subr.mxu0 0.0
  %264 = vmatpush1.msra.mxu0 0.0
  %265 = vmatprep.subr.mxu0 0.0
  %266 = vmatpush1.msra.mxu0 0.0
  %267 = vmatprep.subr.mxu0 0.0
  %268 = vmatpush1.msra.mxu0 0.0
  %269 = vmatprep.subr.mxu0 0.0
  %270 = vmatpush1.msra.mxu0 0.0
  %271 = vmatprep.subr.mxu0 0.0
  %272 = vmatpush1.msra.mxu0 0.0
  %273 = vmatprep.subr.mxu0 0.0
  %274 = vmatpush1.msra.mxu0 0.0
  %275 = vmatprep.subr.mxu0 0.0
  %276 = vmatpush1.msra.mxu0 0.0
  %277 = vmatprep.subr.mxu0 0.0
  %278 = vmatpush1.msra.mxu0 0.0
  %279 = vmatprep.subr.mxu0 0.0
  %280 = vmatpush1.msra.mxu0 0.0
  %281 = vmatprep.subr.mxu0 0.0
  %282 = vmatpush1.msra.mxu0 0.0
  %283 = vmatprep.subr.mxu0 0.0
  %284 = vmatpush1.msra.mxu0 0.0
  %285 = vmatprep.subr.mxu0 0.0
  %286 = vmatpush1.msra.mxu0 0.0
  %287 = vmatprep.subr.mxu0 0.0
  %288 = vmatpush1.msra.mxu0 0.0
  %289 = vmatprep.subr.mxu0 0.0
  %290 = vmatpush1.msra.mxu0 0.0
  %291 = vmatprep.subr.mxu0 0.0
  %292 = vmatpush1.msra.mxu0 0.0
  %293 = vmatprep.subr.mxu0 0.0
  %294 = vmatpush1.msra.mxu0 0.0
  %295 = vmatprep.subr.mxu0 0.0
  %296 = vmatpush1.msra.mxu0 0.0
  %297 = vmatprep.subr.mxu0 0.0
  %298 = vmatpush1.msra.mxu0 0.0
  %299 = vmatprep.subr.mxu0 0.0
  %300 = vmatpush1.msra.mxu0 0.0
  %301 = vmatprep.subr.mxu0 0.0
  %302 = vmatpush1.msra.mxu0 0.0
  %303 = vmatprep.mubr.f32.mxu0 0.0
  %304 = vmatmul.mubr.f32.gmra.mrb[0].mxu0 %v237
  %v305 = vpop.f32.mrb[0].mxu0
  %v306 = vadd.f32 0.0, %v305
  %v307 = vpop.f32.mrb[0].mxu0
  %308 = vdwg.mxu0
  %v309 = vadd.f32 %v235, %v306
  %v310 = vxor.u32 %v309, 2147483648
  %v311 = vmul.f32 %v310, 1.442695
  %v312 = vpow.pop %v311
  %v313 = vadd.f32 %v312, 1.0
  %v314 = vrcp.pop %v313
  %v315 = vmul.f32 1.0, %v314
  %v316 = vtanh.pop %v309
  %318 = vrot.lane.b32.xlu0 %v234, 32
  %v319 = vpop.permute.xlu0 %318
  %v321 = vmul.f32 %v315, %v319
  %323 = vrot.lane.b32.xlu0 %v316, 64
  %v324 = vpop.permute.xlu0 %323
  %v326 = vmul.f32 %v315, %v324
  %328 = vrot.lane.b32.xlu0 %v326, 32
  %v329 = vpop.permute.xlu0 %328
  %v331 = vadd.f32 %v321, %v329
  %v332 = vtanh.pop %v331
  %334 = vrot.lane.b32.xlu0 %v332, 64
  %v335 = vpop.permute.xlu0 %334
  %v337 = vmul.f32 %v315, %v335
  %339 = vrot.lane.b32.xlu0 %v337, 32
  %v340 = vpop.permute.xlu0 %339
  %vm342 = vcmask 123904
  %343 = vst.msk [vmem:[#allocation2] sm:$0x3] %vm342, %v340
  %s344 = scalar_lea.vmem [#allocation2], 14
  %vm345 = vcmask 255104
  %346 = vst.msk [vmem:[%s344] sm:$0x3] %vm345, %v340
  %v347 = vsel %vm228, %v187, %v203
  %v348 = vsel %vm90, %v340, 0
  %350 = vmatprep.subr.mxu0 0.0
  %351 = vmatpush1.msra.mxu0 %v229
  %352 = vmatprep.subr.mxu0 0.0
  %353 = vmatpush1.msra.mxu0 %v230
  %354 = vmatprep.subr.mxu0 0.0
  %355 = vmatpush1.msra.mxu0 %v231
  %356 = vmatprep.subr.mxu0 0.0
  %357 = vmatpush1.msra.mxu0 %v232
  %358 = vmatprep.subr.mxu0 0.0
  %359 = vmatpush1.msra.mxu0 0.0
  %360 = vmatprep.subr.mxu0 0.0
  %361 = vmatpush1.msra.mxu0 0.0
  %362 = vmatprep.subr.mxu0 0.0
  %363 = vmatpush1.msra.mxu0 0.0
  %364 = vmatprep.subr.mxu0 0.0
  %365 = vmatpush1.msra.mxu0 0.0
  %366 = vmatprep.subr.mxu0 0.0
  %367 = vmatpush1.msra.mxu0 0.0
  %368 = vmatprep.subr.mxu0 0.0
  %369 = vmatpush1.msra.mxu0 0.0
  %370 = vmatprep.subr.mxu0 0.0
  %371 = vmatpush1.msra.mxu0 0.0
  %372 = vmatprep.subr.mxu0 0.0
  %373 = vmatpush1.msra.mxu0 0.0
  %374 = vmatprep.subr.mxu0 0.0
  %375 = vmatpush1.msra.mxu0 0.0
  %376 = vmatprep.subr.mxu0 0.0
  %377 = vmatpush1.msra.mxu0 0.0
  %378 = vmatprep.subr.mxu0 0.0
  %379 = vmatpush1.msra.mxu0 0.0
  %380 = vmatprep.subr.mxu0 0.0
  %381 = vmatpush1.msra.mxu0 0.0
  %382 = vmatprep.subr.mxu0 0.0
  %383 = vmatpush1.msra.mxu0 0.0
  %384 = vmatprep.subr.mxu0 0.0
  %385 = vmatpush1.msra.mxu0 0.0
  %386 = vmatprep.subr.mxu0 0.0
  %387 = vmatpush1.msra.mxu0 0.0
  %388 = vmatprep.subr.mxu0 0.0
  %389 = vmatpush1.msra.mxu0 0.0
  %390 = vmatprep.subr.mxu0 0.0
  %391 = vmatpush1.msra.mxu0 0.0
  %392 = vmatprep.subr.mxu0 0.0
  %393 = vmatpush1.msra.mxu0 0.0
  %394 = vmatprep.subr.mxu0 0.0
  %395 = vmatpush1.msra.mxu0 0.0
  %396 = vmatprep.subr.mxu0 0.0
  %397 = vmatpush1.msra.mxu0 0.0
  %398 = vmatprep.subr.mxu0 0.0
  %399 = vmatpush1.msra.mxu0 0.0
  %400 = vmatprep.subr.mxu0 0.0
  %401 = vmatpush1.msra.mxu0 0.0
  %402 = vmatprep.subr.mxu0 0.0
  %403 = vmatpush1.msra.mxu0 0.0
  %404 = vmatprep.subr.mxu0 0.0
  %405 = vmatpush1.msra.mxu0 0.0
  %406 = vmatprep.subr.mxu0 0.0
  %407 = vmatpush1.msra.mxu0 0.0
  %408 = vmatprep.subr.mxu0 0.0
  %409 = vmatpush1.msra.mxu0 0.0
  %410 = vmatprep.subr.mxu0 0.0
  %411 = vmatpush1.msra.mxu0 0.0
  %412 = vmatprep.subr.mxu0 0.0
  %413 = vmatpush1.msra.mxu0 0.0
  %414 = vmatprep.mubr.f32.mxu0 0.0
  %415 = vmatmul.mubr.f32.gmra.mrb[0].mxu0 %v348
  %v416 = vpop.f32.mrb[0].mxu0
  %v417 = vadd.f32 0.0, %v416
  %v418 = vpop.f32.mrb[0].mxu0
  %419 = vdwg.mxu0
  %v420 = vadd.f32 %v347, %v417
  %v421 = vxor.u32 %v420, 2147483648
  %v422 = vmul.f32 %v421, 1.442695
  %v423 = vpow.pop %v422
  %v424 = vadd.f32 %v423, 1.0
  %v425 = vrcp.pop %v424
  %v426 = vmul.f32 1.0, %v425
  %v427 = vtanh.pop %v420
  %v428 = vmul.f32 %v426, %v331
  %430 = vrot.lane.b32.xlu0 %v427, 64
  %v431 = vpop.permute.xlu0 %430
  %v433 = vmul.f32 %v426, %v431
  %435 = vrot.lane.b32.xlu0 %v433, 32
  %v436 = vpop.permute.xlu0 %435
  %v438 = vadd.f32 %v428, %v436
  %v439 = vtanh.pop %v438
  %441 = vrot.lane.b32.xlu0 %v439, 64
  %v442 = vpop.permute.xlu0 %441
  %v444 = vmul.f32 %v426, %v442
  %446 = vrot.lane.b32.xlu0 %v444, 32
  %v447 = vpop.permute.xlu0 %446
  %s449 = scalar_lea.vmem [#allocation2], 2
  %450 = vst.msk [vmem:[%s449] sm:$0x3] %vm342, %v447
  %s451 = scalar_lea.vmem [#allocation2], 12
  %452 = vst.msk [vmem:[%s451] sm:$0x3] %vm345, %v447
  %v453 = vsel %vm228, %v186, %v204
  %v454 = vsel %vm90, %v447, 0
  %456 = vmatprep.subr.mxu0 0.0
  %457 = vmatpush1.msra.mxu0 %v229
  %458 = vmatprep.subr.mxu0 0.0
  %459 = vmatpush1.msra.mxu0 %v230
  %460 = vmatprep.subr.mxu0 0.0
  %461 = vmatpush1.msra.mxu0 %v231
  %462 = vmatprep.subr.mxu0 0.0
  %463 = vmatpush1.msra.mxu0 %v232
  %464 = vmatprep.subr.mxu0 0.0
  %465 = vmatpush1.msra.mxu0 0.0
  %466 = vmatprep.subr.mxu0 0.0
  %467 = vmatpush1.msra.mxu0 0.0
  %468 = vmatprep.subr.mxu0 0.0
  %469 = vmatpush1.msra.mxu0 0.0
  %470 = vmatprep.subr.mxu0 0.0
  %471 = vmatpush1.msra.mxu0 0.0
  %472 = vmatprep.subr.mxu0 0.0
  %473 = vmatpush1.msra.mxu0 0.0
  %474 = vmatprep.subr.mxu0 0.0
  %475 = vmatpush1.msra.mxu0 0.0
  %476 = vmatprep.subr.mxu0 0.0
  %477 = vmatpush1.msra.mxu0 0.0
  %478 = vmatprep.subr.mxu0 0.0
  %479 = vmatpush1.msra.mxu0 0.0
  %480 = vmatprep.subr.mxu0 0.0
  %481 = vmatpush1.msra.mxu0 0.0
  %482 = vmatprep.subr.mxu0 0.0
  %483 = vmatpush1.msra.mxu0 0.0
  %484 = vmatprep.subr.mxu0 0.0
  %485 = vmatpush1.msra.mxu0 0.0
  %486 = vmatprep.subr.mxu0 0.0
  %487 = vmatpush1.msra.mxu0 0.0
  %488 = vmatprep.subr.mxu0 0.0
  %489 = vmatpush1.msra.mxu0 0.0
  %490 = vmatprep.subr.mxu0 0.0
  %491 = vmatpush1.msra.mxu0 0.0
  %492 = vmatprep.subr.mxu0 0.0
  %493 = vmatpush1.msra.mxu0 0.0
  %494 = vmatprep.subr.mxu0 0.0
  %495 = vmatpush1.msra.mxu0 0.0
  %496 = vmatprep.subr.mxu0 0.0
  %497 = vmatpush1.msra.mxu0 0.0
  %498 = vmatprep.subr.mxu0 0.0
  %499 = vmatpush1.msra.mxu0 0.0
  %500 = vmatprep.subr.mxu0 0.0
  %501 = vmatpush1.msra.mxu0 0.0
  %502 = vmatprep.subr.mxu0 0.0
  %503 = vmatpush1.msra.mxu0 0.0
  %504 = vmatprep.subr.mxu0 0.0
  %505 = vmatpush1.msra.mxu0 0.0
  %506 = vmatprep.subr.mxu0 0.0
  %507 = vmatpush1.msra.mxu0 0.0
  %508 = vmatprep.subr.mxu0 0.0
  %509 = vmatpush1.msra.mxu0 0.0
  %510 = vmatprep.subr.mxu0 0.0
  %511 = vmatpush1.msra.mxu0 0.0
  %512 = vmatprep.subr.mxu0 0.0
  %513 = vmatpush1.msra.mxu0 0.0
  %514 = vmatprep.subr.mxu0 0.0
  %515 = vmatpush1.msra.mxu0 0.0
  %516 = vmatprep.subr.mxu0 0.0
  %517 = vmatpush1.msra.mxu0 0.0
  %518 = vmatprep.subr.mxu0 0.0
  %519 = vmatpush1.msra.mxu0 0.0
  %520 = vmatprep.mubr.f32.mxu0 0.0
  %521 = vmatmul.mubr.f32.gmra.mrb[0].mxu0 %v454
  %v522 = vpop.f32.mrb[0].mxu0
  %v523 = vadd.f32 0.0, %v522
  %v524 = vpop.f32.mrb[0].mxu0
  %525 = vdwg.mxu0
  %v526 = vadd.f32 %v453, %v523
  %v527 = vxor.u32 %v526, 2147483648
  %v528 = vmul.f32 %v527, 1.442695
  %v529 = vpow.pop %v528
  %v530 = vadd.f32 %v529, 1.0
  %v531 = vrcp.pop %v530
  %v532 = vmul.f32 1.0, %v531
  %v533 = vtanh.pop %v526
  %v534 = vmul.f32 %v532, %v438
  %536 = vrot.lane.b32.xlu0 %v533, 64
  %v537 = vpop.permute.xlu0 %536
  %v539 = vmul.f32 %v532, %v537
  %541 = vrot.lane.b32.xlu0 %v539, 32
  %v542 = vpop.permute.xlu0 %541
  %v544 = vadd.f32 %v534, %v542
  %v545 = vtanh.pop %v544
  %547 = vrot.lane.b32.xlu0 %v545, 64
  %v548 = vpop.permute.xlu0 %547
  %v550 = vmul.f32 %v532, %v548
  %552 = vrot.lane.b32.xlu0 %v550, 32
  %v553 = vpop.permute.xlu0 %552
  %s555 = scalar_lea.vmem [#allocation2], 4
  %556 = vst.msk [vmem:[%s555] sm:$0x3] %vm342, %v553
  %s557 = scalar_lea.vmem [#allocation2], 10
  %558 = vst.msk [vmem:[%s557] sm:$0x3] %vm345, %v553
  %v559 = vsel %vm228, %v188, %v196
  %v560 = vsel %vm90, %v553, 0
  %562 = vmatprep.subr.mxu0 0.0
  %563 = vmatpush1.msra.mxu0 %v229
  %564 = vmatprep.subr.mxu0 0.0
  %565 = vmatpush1.msra.mxu0 %v230
  %566 = vmatprep.subr.mxu0 0.0
  %567 = vmatpush1.msra.mxu0 %v231
  %568 = vmatprep.subr.mxu0 0.0
  %569 = vmatpush1.msra.mxu0 %v232
  %570 = vmatprep.subr.mxu0 0.0
  %571 = vmatpush1.msra.mxu0 0.0
  %572 = vmatprep.subr.mxu0 0.0
  %573 = vmatpush1.msra.mxu0 0.0
  %574 = vmatprep.subr.mxu0 0.0
  %575 = vmatpush1.msra.mxu0 0.0
  %576 = vmatprep.subr.mxu0 0.0
  %577 = vmatpush1.msra.mxu0 0.0
  %578 = vmatprep.subr.mxu0 0.0
  %579 = vmatpush1.msra.mxu0 0.0
  %580 = vmatprep.subr.mxu0 0.0
  %581 = vmatpush1.msra.mxu0 0.0
  %582 = vmatprep.subr.mxu0 0.0
  %583 = vmatpush1.msra.mxu0 0.0
  %584 = vmatprep.subr.mxu0 0.0
  %585 = vmatpush1.msra.mxu0 0.0
  %586 = vmatprep.subr.mxu0 0.0
  %587 = vmatpush1.msra.mxu0 0.0
  %588 = vmatprep.subr.mxu0 0.0
  %589 = vmatpush1.msra.mxu0 0.0
  %590 = vmatprep.subr.mxu0 0.0
  %591 = vmatpush1.msra.mxu0 0.0
  %592 = vmatprep.subr.mxu0 0.0
  %593 = vmatpush1.msra.mxu0 0.0
  %594 = vmatprep.subr.mxu0 0.0
  %595 = vmatpush1.msra.mxu0 0.0
  %596 = vmatprep.subr.mxu0 0.0
  %597 = vmatpush1.msra.mxu0 0.0
  %598 = vmatprep.subr.mxu0 0.0
  %599 = vmatpush1.msra.mxu0 0.0
  %600 = vmatprep.subr.mxu0 0.0
  %601 = vmatpush1.msra.mxu0 0.0
  %602 = vmatprep.subr.mxu0 0.0
  %603 = vmatpush1.msra.mxu0 0.0
  %604 = vmatprep.subr.mxu0 0.0
  %605 = vmatpush1.msra.mxu0 0.0
  %606 = vmatprep.subr.mxu0 0.0
  %607 = vmatpush1.msra.mxu0 0.0
  %608 = vmatprep.subr.mxu0 0.0
  %609 = vmatpush1.msra.mxu0 0.0
  %610 = vmatprep.subr.mxu0 0.0
  %611 = vmatpush1.msra.mxu0 0.0
  %612 = vmatprep.subr.mxu0 0.0
  %613 = vmatpush1.msra.mxu0 0.0
  %614 = vmatprep.subr.mxu0 0.0
  %615 = vmatpush1.msra.mxu0 0.0
  %616 = vmatprep.subr.mxu0 0.0
  %617 = vmatpush1.msra.mxu0 0.0
  %618 = vmatprep.subr.mxu0 0.0
  %619 = vmatpush1.msra.mxu0 0.0
  %620 = vmatprep.subr.mxu0 0.0
  %621 = vmatpush1.msra.mxu0 0.0
  %622 = vmatprep.subr.mxu0 0.0
  %623 = vmatpush1.msra.mxu0 0.0
  %624 = vmatprep.subr.mxu0 0.0
  %625 = vmatpush1.msra.mxu0 0.0
  %626 = vmatprep.mubr.f32.mxu0 0.0
  %627 = vmatmul.mubr.f32.gmra.mrb[0].mxu0 %v560
  %v628 = vpop.f32.mrb[0].mxu0
  %v629 = vadd.f32 0.0, %v628
  %v630 = vpop.f32.mrb[0].mxu0
  %631 = vdwg.mxu0
  %v632 = vadd.f32 %v559, %v629
  %v633 = vxor.u32 %v632, 2147483648
  %v634 = vmul.f32 %v633, 1.442695
  %v635 = vpow.pop %v634
  %v636 = vadd.f32 %v635, 1.0
  %v637 = vrcp.pop %v636
  %v638 = vmul.f32 1.0, %v637
  %v639 = vtanh.pop %v632
  %v640 = vmul.f32 %v638, %v544
  %642 = vrot.lane.b32.xlu0 %v639, 64
  %v643 = vpop.permute.xlu0 %642
  %v645 = vmul.f32 %v638, %v643
  %647 = vrot.lane.b32.xlu0 %v645, 32
  %v648 = vpop.permute.xlu0 %647
  %v650 = vadd.f32 %v640, %v648
  %v651 = vtanh.pop %v650
  %653 = vrot.lane.b32.xlu0 %v651, 64
  %v654 = vpop.permute.xlu0 %653
  %v656 = vmul.f32 %v638, %v654
  %658 = vrot.lane.b32.xlu0 %v656, 32
  %v659 = vpop.permute.xlu0 %658
  %s661 = scalar_lea.vmem [#allocation2], 6
  %662 = vst.msk [vmem:[%s661] sm:$0x3] %vm342, %v659
  %s663 = scalar_lea.vmem [#allocation2], 8
  %664 = vst.msk [vmem:[%s663] sm:$0x3] %vm345, %v659
  %v665 = vsel %vm228, %v196, %v188
  %v666 = vsel %vm90, %v659, 0
  %668 = vmatprep.subr.mxu0 0.0
  %669 = vmatpush1.msra.mxu0 %v229
  %670 = vmatprep.subr.mxu0 0.0
  %671 = vmatpush1.msra.mxu0 %v230
  %672 = vmatprep.subr.mxu0 0.0
  %673 = vmatpush1.msra.mxu0 %v231
  %674 = vmatprep.subr.mxu0 0.0
  %675 = vmatpush1.msra.mxu0 %v232
  %676 = vmatprep.subr.mxu0 0.0
  %677 = vmatpush1.msra.mxu0 0.0
  %678 = vmatprep.subr.mxu0 0.0
  %679 = vmatpush1.msra.mxu0 0.0
  %680 = vmatprep.subr.mxu0 0.0
  %681 = vmatpush1.msra.mxu0 0.0
  %682 = vmatprep.subr.mxu0 0.0
  %683 = vmatpush1.msra.mxu0 0.0
  %684 = vmatprep.subr.mxu0 0.0
  %685 = vmatpush1.msra.mxu0 0.0
  %686 = vmatprep.subr.mxu0 0.0
  %687 = vmatpush1.msra.mxu0 0.0
  %688 = vmatprep.subr.mxu0 0.0
  %689 = vmatpush1.msra.mxu0 0.0
  %690 = vmatprep.subr.mxu0 0.0
  %691 = vmatpush1.msra.mxu0 0.0
  %692 = vmatprep.subr.mxu0 0.0
  %693 = vmatpush1.msra.mxu0 0.0
  %694 = vmatprep.subr.mxu0 0.0
  %695 = vmatpush1.msra.mxu0 0.0
  %696 = vmatprep.subr.mxu0 0.0
  %697 = vmatpush1.msra.mxu0 0.0
  %698 = vmatprep.subr.mxu0 0.0
  %699 = vmatpush1.msra.mxu0 0.0
  %700 = vmatprep.subr.mxu0 0.0
  %701 = vmatpush1.msra.mxu0 0.0
  %702 = vmatprep.subr.mxu0 0.0
  %703 = vmatpush1.msra.mxu0 0.0
  %704 = vmatprep.subr.mxu0 0.0
  %705 = vmatpush1.msra.mxu0 0.0
  %706 = vmatprep.subr.mxu0 0.0
  %707 = vmatpush1.msra.mxu0 0.0
  %708 = vmatprep.subr.mxu0 0.0
  %709 = vmatpush1.msra.mxu0 0.0
  %710 = vmatprep.subr.mxu0 0.0
  %711 = vmatpush1.msra.mxu0 0.0
  %712 = vmatprep.subr.mxu0 0.0
  %713 = vmatpush1.msra.mxu0 0.0
  %714 = vmatprep.subr.mxu0 0.0
  %715 = vmatpush1.msra.mxu0 0.0
  %716 = vmatprep.subr.mxu0 0.0
  %717 = vmatpush1.msra.mxu0 0.0
  %718 = vmatprep.subr.mxu0 0.0
  %719 = vmatpush1.msra.mxu0 0.0
  %720 = vmatprep.subr.mxu0 0.0
  %721 = vmatpush1.msra.mxu0 0.0
  %722 = vmatprep.subr.mxu0 0.0
  %723 = vmatpush1.msra.mxu0 0.0
  %724 = vmatprep.subr.mxu0 0.0
  %725 = vmatpush1.msra.mxu0 0.0
  %726 = vmatprep.subr.mxu0 0.0
  %727 = vmatpush1.msra.mxu0 0.0
  %728 = vmatprep.subr.mxu0 0.0
  %729 = vmatpush1.msra.mxu0 0.0
  %730 = vmatprep.subr.mxu0 0.0
  %731 = vmatpush1.msra.mxu0 0.0
  %732 = vmatprep.mubr.f32.mxu0 0.0
  %733 = vmatmul.mubr.f32.gmra.mrb[0].mxu0 %v666
  %v734 = vpop.f32.mrb[0].mxu0
  %v735 = vadd.f32 0.0, %v734
  %v736 = vpop.f32.mrb[0].mxu0
  %737 = vdwg.mxu0
  %v738 = vadd.f32 %v665, %v735
  %v739 = vxor.u32 %v738, 2147483648
  %v740 = vmul.f32 %v739, 1.442695
  %v741 = vpow.pop %v740
  %v742 = vadd.f32 %v741, 1.0
  %v743 = vrcp.pop %v742
  %v744 = vmul.f32 1.0, %v743
  %v745 = vtanh.pop %v738
  %v746 = vmul.f32 %v744, %v650
  %748 = vrot.lane.b32.xlu0 %v745, 64
  %v749 = vpop.permute.xlu0 %748
  %v751 = vmul.f32 %v744, %v749
  %753 = vrot.lane.b32.xlu0 %v751, 32
  %v754 = vpop.permute.xlu0 %753
  %v756 = vadd.f32 %v746, %v754
  %v757 = vtanh.pop %v756
  %759 = vrot.lane.b32.xlu0 %v757, 64
  %v760 = vpop.permute.xlu0 %759
  %v762 = vmul.f32 %v744, %v760
  %764 = vrot.lane.b32.xlu0 %v762, 32
  %v765 = vpop.permute.xlu0 %764
  %767 = vst.msk [vmem:[%s663] sm:$0x3] %vm342, %v765
  %768 = vst.msk [vmem:[%s661] sm:$0x3] %vm345, %v765
  %v769 = vsel %vm228, %v204, %v186
  %v770 = vsel %vm90, %v765, 0
  %772 = vmatprep.subr.mxu0 0.0
  %773 = vmatpush1.msra.mxu0 %v229
  %774 = vmatprep.subr.mxu0 0.0
  %775 = vmatpush1.msra.mxu0 %v230
  %776 = vmatprep.subr.mxu0 0.0
  %777 = vmatpush1.msra.mxu0 %v231
  %778 = vmatprep.subr.mxu0 0.0
  %779 = vmatpush1.msra.mxu0 %v232
  %780 = vmatprep.subr.mxu0 0.0
  %781 = vmatpush1.msra.mxu0 0.0
  %782 = vmatprep.subr.mxu0 0.0
  %783 = vmatpush1.msra.mxu0 0.0
  %784 = vmatprep.subr.mxu0 0.0
  %785 = vmatpush1.msra.mxu0 0.0
  %786 = vmatprep.subr.mxu0 0.0
  %787 = vmatpush1.msra.mxu0 0.0
  %788 = vmatprep.subr.mxu0 0.0
  %789 = vmatpush1.msra.mxu0 0.0
  %790 = vmatprep.subr.mxu0 0.0
  %791 = vmatpush1.msra.mxu0 0.0
  %792 = vmatprep.subr.mxu0 0.0
  %793 = vmatpush1.msra.mxu0 0.0
  %794 = vmatprep.subr.mxu0 0.0
  %795 = vmatpush1.msra.mxu0 0.0
  %796 = vmatprep.subr.mxu0 0.0
  %797 = vmatpush1.msra.mxu0 0.0
  %798 = vmatprep.subr.mxu0 0.0
  %799 = vmatpush1.msra.mxu0 0.0
  %800 = vmatprep.subr.mxu0 0.0
  %801 = vmatpush1.msra.mxu0 0.0
  %802 = vmatprep.subr.mxu0 0.0
  %803 = vmatpush1.msra.mxu0 0.0
  %804 = vmatprep.subr.mxu0 0.0
  %805 = vmatpush1.msra.mxu0 0.0
  %806 = vmatprep.subr.mxu0 0.0
  %807 = vmatpush1.msra.mxu0 0.0
  %808 = vmatprep.subr.mxu0 0.0
  %809 = vmatpush1.msra.mxu0 0.0
  %810 = vmatprep.subr.mxu0 0.0
  %811 = vmatpush1.msra.mxu0 0.0
  %812 = vmatprep.subr.mxu0 0.0
  %813 = vmatpush1.msra.mxu0 0.0
  %814 = vmatprep.subr.mxu0 0.0
  %815 = vmatpush1.msra.mxu0 0.0
  %816 = vmatprep.subr.mxu0 0.0
  %817 = vmatpush1.msra.mxu0 0.0
  %818 = vmatprep.subr.mxu0 0.0
  %819 = vmatpush1.msra.mxu0 0.0
  %820 = vmatprep.subr.mxu0 0.0
  %821 = vmatpush1.msra.mxu0 0.0
  %822 = vmatprep.subr.mxu0 0.0
  %823 = vmatpush1.msra.mxu0 0.0
  %824 = vmatprep.subr.mxu0 0.0
  %825 = vmatpush1.msra.mxu0 0.0
  %826 = vmatprep.subr.mxu0 0.0
  %827 = vmatpush1.msra.mxu0 0.0
  %828 = vmatprep.subr.mxu0 0.0
  %829 = vmatpush1.msra.mxu0 0.0
  %830 = vmatprep.subr.mxu0 0.0
  %831 = vmatpush1.msra.mxu0 0.0
  %832 = vmatprep.subr.mxu0 0.0
  %833 = vmatpush1.msra.mxu0 0.0
  %834 = vmatprep.subr.mxu0 0.0
  %835 = vmatpush1.msra.mxu0 0.0
  %836 = vmatprep.mubr.f32.mxu0 0.0
  %837 = vmatmul.mubr.f32.gmra.mrb[0].mxu0 %v770
  %v838 = vpop.f32.mrb[0].mxu0
  %v839 = vadd.f32 0.0, %v838
  %v840 = vpop.f32.mrb[0].mxu0
  %841 = vdwg.mxu0
  %v842 = vadd.f32 %v769, %v839
  %v843 = vxor.u32 %v842, 2147483648
  %v844 = vmul.f32 %v843, 1.442695
  %v845 = vpow.pop %v844
  %v846 = vadd.f32 %v845, 1.0
  %v847 = vrcp.pop %v846
  %v848 = vmul.f32 1.0, %v847
  %v849 = vtanh.pop %v842
  %v850 = vmul.f32 %v848, %v756
  %852 = vrot.lane.b32.xlu0 %v849, 64
  %v853 = vpop.permute.xlu0 %852
  %v855 = vmul.f32 %v848, %v853
  %857 = vrot.lane.b32.xlu0 %v855, 32
  %v858 = vpop.permute.xlu0 %857
  %v860 = vadd.f32 %v850, %v858
  %v861 = vtanh.pop %v860
  %863 = vrot.lane.b32.xlu0 %v861, 64
  %v864 = vpop.permute.xlu0 %863
  %v866 = vmul.f32 %v848, %v864
  %868 = vrot.lane.b32.xlu0 %v866, 32
  %v869 = vpop.permute.xlu0 %868
  %871 = vst.msk [vmem:[%s557] sm:$0x3] %vm342, %v869
  %872 = vst.msk [vmem:[%s555] sm:$0x3] %vm345, %v869
  %v873 = vsel %vm228, %v203, %v187
  %v874 = vsel %vm90, %v869, 0
  %876 = vmatprep.subr.mxu0 0.0
  %877 = vmatpush1.msra.mxu0 %v229
  %878 = vmatprep.subr.mxu0 0.0
  %879 = vmatpush1.msra.mxu0 %v230
  %880 = vmatprep.subr.mxu0 0.0
  %881 = vmatpush1.msra.mxu0 %v231
  %882 = vmatprep.subr.mxu0 0.0
  %883 = vmatpush1.msra.mxu0 %v232
  %884 = vmatprep.subr.mxu0 0.0
  %885 = vmatpush1.msra.mxu0 0.0
  %886 = vmatprep.subr.mxu0 0.0
  %887 = vmatpush1.msra.mxu0 0.0
  %888 = vmatprep.subr.mxu0 0.0
  %889 = vmatpush1.msra.mxu0 0.0
  %890 = vmatprep.subr.mxu0 0.0
  %891 = vmatpush1.msra.mxu0 0.0
  %892 = vmatprep.subr.mxu0 0.0
  %893 = vmatpush1.msra.mxu0 0.0
  %894 = vmatprep.subr.mxu0 0.0
  %895 = vmatpush1.msra.mxu0 0.0
  %896 = vmatprep.subr.mxu0 0.0
  %897 = vmatpush1.msra.mxu0 0.0
  %898 = vmatprep.subr.mxu0 0.0
  %899 = vmatpush1.msra.mxu0 0.0
  %900 = vmatprep.subr.mxu0 0.0
  %901 = vmatpush1.msra.mxu0 0.0
  %902 = vmatprep.subr.mxu0 0.0
  %903 = vmatpush1.msra.mxu0 0.0
  %904 = vmatprep.subr.mxu0 0.0
  %905 = vmatpush1.msra.mxu0 0.0
  %906 = vmatprep.subr.mxu0 0.0
  %907 = vmatpush1.msra.mxu0 0.0
  %908 = vmatprep.subr.mxu0 0.0
  %909 = vmatpush1.msra.mxu0 0.0
  %910 = vmatprep.subr.mxu0 0.0
  %911 = vmatpush1.msra.mxu0 0.0
  %912 = vmatprep.subr.mxu0 0.0
  %913 = vmatpush1.msra.mxu0 0.0
  %914 = vmatprep.subr.mxu0 0.0
  %915 = vmatpush1.msra.mxu0 0.0
  %916 = vmatprep.subr.mxu0 0.0
  %917 = vmatpush1.msra.mxu0 0.0
  %918 = vmatprep.subr.mxu0 0.0
  %919 = vmatpush1.msra.mxu0 0.0
  %920 = vmatprep.subr.mxu0 0.0
  %921 = vmatpush1.msra.mxu0 0.0
  %922 = vmatprep.subr.mxu0 0.0
  %923 = vmatpush1.msra.mxu0 0.0
  %924 = vmatprep.subr.mxu0 0.0
  %925 = vmatpush1.msra.mxu0 0.0
  %926 = vmatprep.subr.mxu0 0.0
  %927 = vmatpush1.msra.mxu0 0.0
  %928 = vmatprep.subr.mxu0 0.0
  %929 = vmatpush1.msra.mxu0 0.0
  %930 = vmatprep.subr.mxu0 0.0
  %931 = vmatpush1.msra.mxu0 0.0
  %932 = vmatprep.subr.mxu0 0.0
  %933 = vmatpush1.msra.mxu0 0.0
  %934 = vmatprep.subr.mxu0 0.0
  %935 = vmatpush1.msra.mxu0 0.0
  %936 = vmatprep.subr.mxu0 0.0
  %937 = vmatpush1.msra.mxu0 0.0
  %938 = vmatprep.subr.mxu0 0.0
  %939 = vmatpush1.msra.mxu0 0.0
  %940 = vmatprep.mubr.f32.mxu0 0.0
  %941 = vmatmul.mubr.f32.gmra.mrb[0].mxu0 %v874
  %v942 = vpop.f32.mrb[0].mxu0
  %v943 = vadd.f32 0.0, %v942
  %v944 = vpop.f32.mrb[0].mxu0
  %945 = vdwg.mxu0
  %v946 = vadd.f32 %v873, %v943
  %v947 = vxor.u32 %v946, 2147483648
  %v948 = vmul.f32 %v947, 1.442695
  %v949 = vpow.pop %v948
  %v950 = vadd.f32 %v949, 1.0
  %v951 = vrcp.pop %v950
  %v952 = vmul.f32 1.0, %v951
  %v953 = vtanh.pop %v946
  %v954 = vmul.f32 %v952, %v860
  %956 = vrot.lane.b32.xlu0 %v953, 64
  %v957 = vpop.permute.xlu0 %956
  %v959 = vmul.f32 %v952, %v957
  %961 = vrot.lane.b32.xlu0 %v959, 32
  %v962 = vpop.permute.xlu0 %961
  %v964 = vadd.f32 %v954, %v962
  %v965 = vtanh.pop %v964
  %967 = vrot.lane.b32.xlu0 %v965, 64
  %v968 = vpop.permute.xlu0 %967
  %v970 = vmul.f32 %v952, %v968
  %972 = vrot.lane.b32.xlu0 %v970, 32
  %v973 = vpop.permute.xlu0 %972
  %975 = vst.msk [vmem:[%s451] sm:$0x3] %vm342, %v973
  %976 = vst.msk [vmem:[%s449] sm:$0x3] %vm345, %v973
  %v977 = vsel %vm228, %v205, %v179
  %v978 = vsel %vm90, %v973, 0
  %980 = vmatprep.subr.mxu0 0.0
  %981 = vmatpush1.msra.mxu0 %v229
  %982 = vmatprep.subr.mxu0 0.0
  %983 = vmatpush1.msra.mxu0 %v230
  %984 = vmatprep.subr.mxu0 0.0
  %985 = vmatpush1.msra.mxu0 %v231
  %986 = vmatprep.subr.mxu0 0.0
  %987 = vmatpush1.msra.mxu0 %v232
  %988 = vmatprep.subr.mxu0 0.0
  %989 = vmatpush1.msra.mxu0 0.0
  %990 = vmatprep.subr.mxu0 0.0
  %991 = vmatpush1.msra.mxu0 0.0
  %992 = vmatprep.subr.mxu0 0.0
  %993 = vmatpush1.msra.mxu0 0.0
  %994 = vmatprep.subr.mxu0 0.0
  %995 = vmatpush1.msra.mxu0 0.0
  %996 = vmatprep.subr.mxu0 0.0
  %997 = vmatpush1.msra.mxu0 0.0
  %998 = vmatprep.subr.mxu0 0.0
  %999 = vmatpush1.msra.mxu0 0.0
  %1000 = vmatprep.subr.mxu0 0.0
  %1001 = vmatpush1.msra.mxu0 0.0
  %1002 = vmatprep.subr.mxu0 0.0
  %1003 = vmatpush1.msra.mxu0 0.0
  %1004 = vmatprep.subr.mxu0 0.0
  %1005 = vmatpush1.msra.mxu0 0.0
  %1006 = vmatprep.subr.mxu0 0.0
  %1007 = vmatpush1.msra.mxu0 0.0
  %1008 = vmatprep.subr.mxu0 0.0
  %1009 = vmatpush1.msra.mxu0 0.0
  %1010 = vmatprep.subr.mxu0 0.0
  %1011 = vmatpush1.msra.mxu0 0.0
  %1012 = vmatprep.subr.mxu0 0.0
  %1013 = vmatpush1.msra.mxu0 0.0
  %1014 = vmatprep.subr.mxu0 0.0
  %1015 = vmatpush1.msra.mxu0 0.0
  %1016 = vmatprep.subr.mxu0 0.0
  %1017 = vmatpush1.msra.mxu0 0.0
  %1018 = vmatprep.subr.mxu0 0.0
  %1019 = vmatpush1.msra.mxu0 0.0
  %1020 = vmatprep.subr.mxu0 0.0
  %1021 = vmatpush1.msra.mxu0 0.0
  %1022 = vmatprep.subr.mxu0 0.0
  %1023 = vmatpush1.msra.mxu0 0.0
  %1024 = vmatprep.subr.mxu0 0.0
  %1025 = vmatpush1.msra.mxu0 0.0
  %1026 = vmatprep.subr.mxu0 0.0
  %1027 = vmatpush1.msra.mxu0 0.0
  %1028 = vmatprep.subr.mxu0 0.0
  %1029 = vmatpush1.msra.mxu0 0.0
  %1030 = vmatprep.subr.mxu0 0.0
  %1031 = vmatpush1.msra.mxu0 0.0
  %1032 = vmatprep.subr.mxu0 0.0
  %1033 = vmatpush1.msra.mxu0 0.0
  %1034 = vmatprep.subr.mxu0 0.0
  %1035 = vmatpush1.msra.mxu0 0.0
  %1036 = vmatprep.subr.mxu0 0.0
  %1037 = vmatpush1.msra.mxu0 0.0
  %1038 = vmatprep.subr.mxu0 0.0
  %1039 = vmatpush1.msra.mxu0 0.0
  %1040 = vmatprep.subr.mxu0 0.0
  %1041 = vmatpush1.msra.mxu0 0.0
  %1042 = vmatprep.subr.mxu0 0.0
  %1043 = vmatpush1.msra.mxu0 0.0
  %1044 = vmatprep.mubr.f32.mxu0 0.0
  %1045 = vmatmul.mubr.f32.gmra.mrb[0].mxu0 %v978
  %v1046 = vpop.f32.mrb[0].mxu0
  %v1047 = vadd.f32 0.0, %v1046
  %v1048 = vpop.f32.mrb[0].mxu0
  %1049 = vdwg.mxu0
  %v1050 = vadd.f32 %v977, %v1047
  %v1051 = vxor.u32 %v1050, 2147483648
  %v1052 = vmul.f32 %v1051, 1.442695
  %v1053 = vpow.pop %v1052
  %v1054 = vadd.f32 %v1053, 1.0
  %v1055 = vrcp.pop %v1054
  %v1056 = vmul.f32 1.0, %v1055
  %v1057 = vtanh.pop %v1050
  %v1058 = vmul.f32 %v1056, %v964
  %1060 = vrot.lane.b32.xlu0 %v1057, 64
  %v1061 = vpop.permute.xlu0 %1060
  %v1063 = vmul.f32 %v1056, %v1061
  %1065 = vrot.lane.b32.xlu0 %v1063, 32
  %v1066 = vpop.permute.xlu0 %1065
  %v1068 = vadd.f32 %v1058, %v1066
  %v1069 = vtanh.pop %v1068
  %1071 = vrot.lane.b32.xlu0 %v1069, 64
  %v1072 = vpop.permute.xlu0 %1071
  %v1074 = vmul.f32 %v1056, %v1072
  %1076 = vrot.lane.b32.xlu0 %v1074, 32
  %v1077 = vpop.permute.xlu0 %1076
  %1079 = vst.msk [vmem:[%s344] sm:$0x3] %vm342, %v1077
  %1080 = vst.msk [vmem:[#allocation2] sm:$0x3] %vm345, %v1077
  %v1081 = vld [vmem:[#allocation2] sm:$0x3]
  %v1082 = vld [vmem:[#allocation2 + $0x2] sm:$0x3]
  %v1083 = vld [vmem:[#allocation2 + $0x4] sm:$0x3]
  %v1084 = vld [vmem:[#allocation2 + $0x6] sm:$0x3]
  %v1085 = vld [vmem:[#allocation2 + $0x8] sm:$0x3]
  %v1086 = vld [vmem:[#allocation2 + $0xa] sm:$0x3]
  %v1087 = vld [vmem:[#allocation2 + $0xc] sm:$0x3]
  %v1088 = vld [vmem:[#allocation2 + $0xe] sm:$0x3]
  %v1089 = vld [vmem:[%s6] sm:$0xff]
  %v1090 = vld [vmem:[%s6 + $0x8] sm:$0xff]
  %v1091 = vld [vmem:[%s6 + $0x10] sm:$0xff]
  %v1092 = vld [vmem:[%s6 + $0x18] sm:$0xff]
  %v1093 = vld [vmem:[%s7] sm:$0x1]
  %v1095 = vlaneseq
  %v1096 = vshrl.u32 %v1095, 7
  %v1097 = vsub.s32 0, %v1096
  %v1098 = vrot.slane %v1093, %v1097
  %v1108 = vcombine.low %v1081, %v1082
  %v1109 = vcombine.low %v1083, %v1084
  %v1111 = vunpack.c.l.s4 1983009808
  %v1112 = vunpack.c.0.s8 %v1111
  %v1113 = vlaneseq
  %v1114 = vshrl.u32 %v1113, 7
  %v1115 = vsub.s32 %v1112, %v1114
  %v1116 = vrot.slane %v1108, %v1115
  %v1118 = vunpack.c.l.s4 1983009808
  %v1119 = vunpack.c.0.s8 %v1118
  %v1120 = vlaneseq
  %v1121 = vshrl.u32 %v1120, 7
  %v1122 = vsub.s32 %v1119, %v1121
  %v1123 = vrot.slane %v1109, %v1122
  %v1124 = vcombine.low %v1116, %v1123
  %v1125 = vcombine.low %v1085, %v1086
  %v1126 = vcombine.low %v1087, %v1088
  %v1128 = vunpack.c.l.s4 1983009808
  %v1129 = vunpack.c.0.s8 %v1128
  %v1130 = vlaneseq
  %v1131 = vshrl.u32 %v1130, 7
  %v1132 = vsub.s32 %v1129, %v1131
  %v1133 = vrot.slane %v1125, %v1132
  %v1135 = vunpack.c.l.s4 1983009808
  %v1136 = vunpack.c.0.s8 %v1135
  %v1137 = vlaneseq
  %v1138 = vshrl.u32 %v1137, 7
  %v1139 = vsub.s32 %v1136, %v1138
  %v1140 = vrot.slane %v1126, %v1139
  %v1141 = vcombine.low %v1133, %v1140
  %v1142 = vsel %vm90, %v1124, 0
  %v1144 = vsel %vm90, %v1141, 0
  %1146 = vmatprep.subr.mxu0 0.0
  %1147 = vmatpush1.msra.mxu0 %v1089
  %1148 = vmatprep.subr.mxu0 0.0
  %1149 = vmatpush1.msra.mxu0 %v1090
  %1150 = vmatprep.subr.mxu0 0.0
  %1151 = vmatpush1.msra.mxu0 %v1091
  %1152 = vmatprep.subr.mxu0 0.0
  %1153 = vmatpush1.msra.mxu0 %v1092
  %1154 = vmatprep.subr.mxu0 0.0
  %1155 = vmatpush1.msra.mxu0 0.0
  %1156 = vmatprep.subr.mxu0 0.0
  %1157 = vmatpush1.msra.mxu0 0.0
  %1158 = vmatprep.subr.mxu0 0.0
  %1159 = vmatpush1.msra.mxu0 0.0
  %1160 = vmatprep.subr.mxu0 0.0
  %1161 = vmatpush1.msra.mxu0 0.0
  %1162 = vmatprep.subr.mxu0 0.0
  %1163 = vmatpush1.msra.mxu0 0.0
  %1164 = vmatprep.subr.mxu0 0.0
  %1165 = vmatpush1.msra.mxu0 0.0
  %1166 = vmatprep.subr.mxu0 0.0
  %1167 = vmatpush1.msra.mxu0 0.0
  %1168 = vmatprep.subr.mxu0 0.0
  %1169 = vmatpush1.msra.mxu0 0.0
  %1170 = vmatprep.subr.mxu0 0.0
  %1171 = vmatpush1.msra.mxu0 0.0
  %1172 = vmatprep.subr.mxu0 0.0
  %1173 = vmatpush1.msra.mxu0 0.0
  %1174 = vmatprep.subr.mxu0 0.0
  %1175 = vmatpush1.msra.mxu0 0.0
  %1176 = vmatprep.subr.mxu0 0.0
  %1177 = vmatpush1.msra.mxu0 0.0
  %1178 = vmatprep.subr.mxu0 0.0
  %1179 = vmatpush1.msra.mxu0 0.0
  %1180 = vmatprep.subr.mxu0 0.0
  %1181 = vmatpush1.msra.mxu0 0.0
  %1182 = vmatprep.subr.mxu0 0.0
  %1183 = vmatpush1.msra.mxu0 0.0
  %1184 = vmatprep.subr.mxu0 0.0
  %1185 = vmatpush1.msra.mxu0 0.0
  %1186 = vmatprep.subr.mxu0 0.0
  %1187 = vmatpush1.msra.mxu0 0.0
  %1188 = vmatprep.subr.mxu0 0.0
  %1189 = vmatpush1.msra.mxu0 0.0
  %1190 = vmatprep.subr.mxu0 0.0
  %1191 = vmatpush1.msra.mxu0 0.0
  %1192 = vmatprep.subr.mxu0 0.0
  %1193 = vmatpush1.msra.mxu0 0.0
  %1194 = vmatprep.subr.mxu0 0.0
  %1195 = vmatpush1.msra.mxu0 0.0
  %1196 = vmatprep.subr.mxu0 0.0
  %1197 = vmatpush1.msra.mxu0 0.0
  %1198 = vmatprep.subr.mxu0 0.0
  %1199 = vmatpush1.msra.mxu0 0.0
  %1200 = vmatprep.subr.mxu0 0.0
  %1201 = vmatpush1.msra.mxu0 0.0
  %1202 = vmatprep.subr.mxu0 0.0
  %1203 = vmatpush1.msra.mxu0 0.0
  %1204 = vmatprep.subr.mxu0 0.0
  %1205 = vmatpush1.msra.mxu0 0.0
  %1206 = vmatprep.subr.mxu0 0.0
  %1207 = vmatpush1.msra.mxu0 0.0
  %1208 = vmatprep.subr.mxu0 0.0
  %1209 = vmatpush1.msra.mxu0 0.0
  %1210 = vmatprep.mubr.f32.mxu0 0.0
  %1211 = vmatmul.mubr.f32.gmra.mrb[0].mxu0 %v1142
  %v1212 = vpop.f32.mrb[0].mxu0
  %v1213 = vadd.f32 %v1098, %v1212
  %v1214 = vpop.f32.mrb[0].mxu0
  %1215 = vmatprep.mubr.f32.mxu0 0.0
  %1216 = vmatmul.mubr.f32.gmra.mrb[0].mxu0 %v1144
  %v1217 = vpop.f32.mrb[0].mxu0
  %v1218 = vadd.f32 %v1098, %v1217
  %v1219 = vpop.f32.mrb[0].mxu0
  %1220 = vdwg.mxu0
  %v1223 = vcombine.high %v1213, %v1213
  %v1225 = vunpack.c.l.s4 1983009808
  %v1226 = vunpack.c.0.s8 %v1225
  %v1227 = vlaneseq
  %v1228 = vshrl.u32 %v1227, 7
  %v1229 = vsub.s32 %v1226, %v1228
  %v1230 = vrot.slane %v1213, %v1229
  %v1232 = vunpack.c.l.s4 1983009808
  %v1233 = vunpack.c.0.s8 %v1232
  %v1234 = vlaneseq
  %v1235 = vshrl.u32 %v1234, 7
  %v1236 = vsub.s32 %v1233, %v1235
  %v1237 = vrot.slane %v1223, %v1236
  %v1238 = vcombine.high %v1230, %v1230
  %v1239 = vcombine.high %v1237, %v1237
  %v1240 = vcombine.high %v1218, %v1218
  %v1242 = vunpack.c.l.s4 1983009808
  %v1243 = vunpack.c.0.s8 %v1242
  %v1244 = vlaneseq
  %v1245 = vshrl.u32 %v1244, 7
  %v1246 = vsub.s32 %v1243, %v1245
  %v1247 = vrot.slane %v1218, %v1246
  %v1249 = vunpack.c.l.s4 1983009808
  %v1250 = vunpack.c.0.s8 %v1249
  %v1251 = vlaneseq
  %v1252 = vshrl.u32 %v1251, 7
  %v1253 = vsub.s32 %v1250, %v1252
  %v1254 = vrot.slane %v1240, %v1253
  %v1255 = vcombine.high %v1247, %v1247
  %v1256 = vcombine.high %v1254, %v1254
  %vm1265 = vcmask 33792
  %1266 = vst.msk [vmem:[%s8] sm:$0x3] %vm1265, %v1230
  %1267 = vst.msk [vmem:[%s8 + $0x2] sm:$0x3] %vm1265, %v1238
  %1268 = vst.msk [vmem:[%s8 + $0x4] sm:$0x3] %vm1265, %v1237
  %1269 = vst.msk [vmem:[%s8 + $0x6] sm:$0x3] %vm1265, %v1239
  %1270 = vst.msk [vmem:[%s8 + $0x8] sm:$0x3] %vm1265, %v1247
  %1271 = vst.msk [vmem:[%s8 + $0xa] sm:$0x3] %vm1265, %v1255
  %1272 = vst.msk [vmem:[%s8 + $0xc] sm:$0x3] %vm1265, %v1254
  %1273 = vst.msk [vmem:[%s8 + $0xe] sm:$0x3] %vm1265, %v1256
  // Predicated region
  $region34: #{bilstm_forward.3} parent=0 // pred_check
    _
  $region35: #{bilstm_forward.3} parent=0 // pred_check_branch
    %1275 = sbr.rel (0) target = $region37
  $region36: #{bilstm_forward.3} parent=0 // pred_region
    _
  $region37: #{bilstm_forward.3} parent=0 // pred_fallthru
    _
  // Predicated region
  $region38: #{bilstm_forward.3} parent=0 // pred_check
    _
  $region39: #{bilstm_forward.3} parent=0 // pred_check_branch
    %1277 = sbr.rel (0) target = $region41
  $region40: #{bilstm_forward.3} parent=0 // pred_region
    _
  $region41: #{bilstm_forward.3} parent=0 // pred_fallthru
    _

// kernel: bilstm_forward.2
$region0: #{bilstm_forward.2}
  #allocation0 [shape = 'u32[]', space=smem, size = 0x4, offset = 0x4, fixed_abs, tag = 'smem constant byte address 0x4 - core index']
  #allocation1 [shape = 'u32[144,128]{1,0:T(1,128)}', space=vmem, size = 0x12000, scoped, tag = 'internal scratch']
  %s0 = inlined_call_operand.vmem [shape: f32[8,2,16], index: 0, kind: input, shape index: {}]
  %s1 = inlined_call_operand.vmem [shape: f32[16,128], index: 1, kind: input, shape index: {}]
  %s2 = inlined_call_operand.vmem [shape: f32[32,128], index: 2, kind: input, shape index: {}]
  %s3 = inlined_call_operand.vmem [shape: f32[1,128], index: 3, kind: input, shape index: {}]
  %s4 = inlined_call_operand.vmem [shape: f32[2,32], index: 4, kind: input, shape index: {}]
  %s5 = inlined_call_operand.vmem [shape: f32[2,32], index: 5, kind: input, shape index: {}]
  %s6 = inlined_call_operand.vmem [shape: f32[8,2,32], index: 6, kind: output, shape index: {}]
  %s7 = sld [smem:[#allocation0]]
  $region34: #{bilstm_forward.2} parent=0
    _
  %s9 = ssub.s32 1, %s7
  %s10 = scalar_select 0, %s9, %s7
  // Predicated region
  $region2: #{bilstm_forward.2} parent=0 // pred_check
    _
  $region3: #{bilstm_forward.2} parent=0 // pred_check_branch
    %12 = sbr.rel (0) target = $region5
  $region4: #{bilstm_forward.2} parent=0 // pred_region
    _
  $region5: #{bilstm_forward.2} parent=0 // pred_fallthru
    _
  // Predicated region
  $region6: #{bilstm_forward.2} parent=0 // pred_check
    _
  $region7: #{bilstm_forward.2} parent=0 // pred_check_branch
    %14 = sbr.rel (0) target = $region9
  $region8: #{bilstm_forward.2} parent=0 // pred_region
    _
  $region9: #{bilstm_forward.2} parent=0 // pred_fallthru
    _
  // Predicated region
  $region10: #{bilstm_forward.2} parent=0 // pred_check
    _
  $region11: #{bilstm_forward.2} parent=0 // pred_check_branch
    %16 = sbr.rel (0) target = $region13
  $region12: #{bilstm_forward.2} parent=0 // pred_region
    _
  $region13: #{bilstm_forward.2} parent=0 // pred_fallthru
    _
  // Predicated region
  $region14: #{bilstm_forward.2} parent=0 // pred_check
    _
  $region15: #{bilstm_forward.2} parent=0 // pred_check_branch
    %18 = sbr.rel (0) target = $region17
  $region16: #{bilstm_forward.2} parent=0 // pred_region
    _
  $region17: #{bilstm_forward.2} parent=0 // pred_fallthru
    _
  // Predicated region
  $region18: #{bilstm_forward.2} parent=0 // pred_check
    _
  $region19: #{bilstm_forward.2} parent=0 // pred_check_branch
    %20 = sbr.rel (0) target = $region21
  $region20: #{bilstm_forward.2} parent=0 // pred_region
    _
  $region21: #{bilstm_forward.2} parent=0 // pred_fallthru
    _
  // Predicated region
  $region22: #{bilstm_forward.2} parent=0 // pred_check
    _
  $region23: #{bilstm_forward.2} parent=0 // pred_check_branch
    %22 = sbr.rel (0) target = $region25
  $region24: #{bilstm_forward.2} parent=0 // pred_region
    _
  $region25: #{bilstm_forward.2} parent=0 // pred_fallthru
    _
  %v23 = vld [vmem:[%s0] sm:$0x3]
  %v24 = vld [vmem:[%s0 + $0x2] sm:$0x3]
  %v25 = vld [vmem:[%s0 + $0x4] sm:$0x3]
  %v26 = vld [vmem:[%s0 + $0x6] sm:$0x3]
  %v27 = vld [vmem:[%s0 + $0x8] sm:$0x3]
  %v28 = vld [vmem:[%s0 + $0xa] sm:$0x3]
  %v29 = vld [vmem:[%s0 + $0xc] sm:$0x3]
  %v30 = vld [vmem:[%s0 + $0xe] sm:$0x3]
  %v31 = vld [vmem:[%s1] sm:$0xff]
  %v32 = vld [vmem:[%s1 + $0x8] sm:$0xff]
  %v33 = vld [vmem:[%s3] sm:$0x1]
  %v35 = vlaneseq
  %v36 = vshrl.u32 %v35, 7
  %v37 = vsub.s32 0, %v36
  %v38 = vrot.slane %v33, %v37
  %v48 = vcombine.low %v23, %v24
  %v49 = vcombine.low %v25, %v26
  %v51 = vunpack.c.l.s4 1983009808
  %v52 = vunpack.c.0.s8 %v51
  %v53 = vlaneseq
  %v54 = vshrl.u32 %v53, 7
  %v55 = vsub.s32 %v52, %v54
  %v56 = vrot.slane %v48, %v55
  %v58 = vunpack.c.l.s4 1983009808
  %v59 = vunpack.c.0.s8 %v58
  %v60 = vlaneseq
  %v61 = vshrl.u32 %v60, 7
  %v62 = vsub.s32 %v59, %v61
  %v63 = vrot.slane %v49, %v62
  %v64 = vcombine.low %v56, %v63
  %v65 = vcombine.low %v27, %v28
  %v66 = vcombine.low %v29, %v30
  %v68 = vunpack.c.l.s4 1983009808
  %v69 = vunpack.c.0.s8 %v68
  %v70 = vlaneseq
  %v71 = vshrl.u32 %v70, 7
  %v72 = vsub.s32 %v69, %v71
  %v73 = vrot.slane %v65, %v72
  %v75 = vunpack.c.l.s4 1983009808
  %v76 = vunpack.c.0.s8 %v75
  %v77 = vlaneseq
  %v78 = vshrl.u32 %v77, 7
  %v79 = vsub.s32 %v76, %v78
  %v80 = vrot.slane %v66, %v79
  %v81 = vcombine.low %v73, %v80
  %vm82 = vcmask 130048
  %v83 = vsel %vm82, %v64, 0
  %v85 = vsel %vm82, %v81, 0
  %87 = vmatprep.subr.mxu0 0.0
  %88 = vmatpush1.msra.mxu0 %v31
  %89 = vmatprep.subr.mxu0 0.0
  %90 = vmatpush1.msra.mxu0 %v32
  %91 = vmatprep.subr.mxu0 0.0
  %92 = vmatpush1.msra.mxu0 0.0
  %93 = vmatprep.subr.mxu0 0.0
  %94 = vmatpush1.msra.mxu0 0.0
  %95 = vmatprep.subr.mxu0 0.0
  %96 = vmatpush1.msra.mxu0 0.0
  %97 = vmatprep.subr.mxu0 0.0
  %98 = vmatpush1.msra.mxu0 0.0
  %99 = vmatprep.subr.mxu0 0.0
  %100 = vmatpush1.msra.mxu0 0.0
  %101 = vmatprep.subr.mxu0 0.0
  %102 = vmatpush1.msra.mxu0 0.0
  %103 = vmatprep.subr.mxu0 0.0
  %104 = vmatpush1.msra.mxu0 0.0
  %105 = vmatprep.subr.mxu0 0.0
  %106 = vmatpush1.msra.mxu0 0.0
  %107 = vmatprep.subr.mxu0 0.0
  %108 = vmatpush1.msra.mxu0 0.0
  %109 = vmatprep.subr.mxu0 0.0
  %110 = vmatpush1.msra.mxu0 0.0
  %111 = vmatprep.subr.mxu0 0.0
  %112 = vmatpush1.msra.mxu0 0.0
  %113 = vmatprep.subr.mxu0 0.0
  %114 = vmatpush1.msra.mxu0 0.0
  %115 = vmatprep.subr.mxu0 0.0
  %116 = vmatpush1.msra.mxu0 0.0
  %117 = vmatprep.subr.mxu0 0.0
  %118 = vmatpush1.msra.mxu0 0.0
  %119 = vmatprep.subr.mxu0 0.0
  %120 = vmatpush1.msra.mxu0 0.0
  %121 = vmatprep.subr.mxu0 0.0
  %122 = vmatpush1.msra.mxu0 0.0
  %123 = vmatprep.subr.mxu0 0.0
  %124 = vmatpush1.msra.mxu0 0.0
  %125 = vmatprep.subr.mxu0 0.0
  %126 = vmatpush1.msra.mxu0 0.0
  %127 = vmatprep.subr.mxu0 0.0
  %128 = vmatpush1.msra.mxu0 0.0
  %129 = vmatprep.subr.mxu0 0.0
  %130 = vmatpush1.msra.mxu0 0.0
  %131 = vmatprep.subr.mxu0 0.0
  %132 = vmatpush1.msra.mxu0 0.0
  %133 = vmatprep.subr.mxu0 0.0
  %134 = vmatpush1.msra.mxu0 0.0
  %135 = vmatprep.subr.mxu0 0.0
  %136 = vmatpush1.msra.mxu0 0.0
  %137 = vmatprep.subr.mxu0 0.0
  %138 = vmatpush1.msra.mxu0 0.0
  %139 = vmatprep.subr.mxu0 0.0
  %140 = vmatpush1.msra.mxu0 0.0
  %141 = vmatprep.subr.mxu0 0.0
  %142 = vmatpush1.msra.mxu0 0.0
  %143 = vmatprep.subr.mxu0 0.0
  %144 = vmatpush1.msra.mxu0 0.0
  %145 = vmatprep.subr.mxu0 0.0
  %146 = vmatpush1.msra.mxu0 0.0
  %147 = vmatprep.subr.mxu0 0.0
  %148 = vmatpush1.msra.mxu0 0.0
  %149 = vmatprep.subr.mxu0 0.0
  %150 = vmatpush1.msra.mxu0 0.0
  %151 = vmatprep.mubr.f32.mxu0 0.0
  %152 = vmatmul.mubr.f32.gmra.mrb[0].mxu0 %v83
  %v153 = vpop.f32.mrb[0].mxu0
  %v154 = vadd.f32 %v38, %v153
  %v155 = vpop.f32.mrb[0].mxu0
  %156 = vmatprep.mubr.f32.mxu0 0.0
  %157 = vmatmul.mubr.f32.gmra.mrb[0].mxu0 %v85
  %v158 = vpop.f32.mrb[0].mxu0
  %v159 = vadd.f32 %v38, %v158
  %v160 = vpop.f32.mrb[0].mxu0
  %161 = vdwg.mxu0
  %v164 = vcombine.high %v154, %v154
  %v166 = vunpack.c.l.s4 1983009808
  %v167 = vunpack.c.0.s8 %v166
  %v168 = vlaneseq
  %v169 = vshrl.u32 %v168, 7
  %v170 = vsub.s32 %v167, %v169
  %v171 = vrot.slane %v154, %v170
  %v173 = vunpack.c.l.s4 1983009808
  %v174 = vunpack.c.0.s8 %v173
  %v175 = vlaneseq
  %v176 = vshrl.u32 %v175, 7
  %v177 = vsub.s32 %v174, %v176
  %v178 = vrot.slane %v164, %v177
  %v179 = vcombine.high %v171, %v171
  %v180 = vcombine.high %v178, %v178
  %v181 = vcombine.high %v159, %v159
  %v183 = vunpack.c.l.s4 1983009808
  %v184 = vunpack.c.0.s8 %v183
  %v185 = vlaneseq
  %v186 = vshrl.u32 %v185, 7
  %v187 = vsub.s32 %v184, %v186
  %v188 = vrot.slane %v159, %v187
  %v190 = vunpack.c.l.s4 1983009808
  %v191 = vunpack.c.0.s8 %v190
  %v192 = vlaneseq
  %v193 = vshrl.u32 %v192, 7
  %v194 = vsub.s32 %v191, %v193
  %v195 = vrot.slane %v181, %v194
  %v196 = vcombine.high %v188, %v188
  %v197 = vcombine.high %v195, %v195
  %v206 = vlaneseq
  %v207 = vand.u32 %v206, 127
  %vm208 = vcmp.lt.s32.totalorder %v207, 0
  %v209 = vsub.s32 0, %v207
  %v210 = vsel %vm208, %v209, %v207
  %v211 = vshrl.u32 %v210, 5
  %v212 = vand.u32 %v210, 31
  %v213 = vsub.s32 0, %v212
  %v214 = vsel %vm208, %v213, %v212
  %vm215 = vcmp.ne.s32.totalorder %v214, 0
  %vm216 = vcmp.lt.s32.totalorder %v214, 0
  %vm217 = vmand %vm216, %vm215
  %v218 = vadd.s32 %v214, 32
  %v219 = vsel %vm217, %v218, %v214
  %vm220 = vcmp.lt.s32.totalorder %v219, 16
  %v221 = vld [vmem:[%s2] sm:$0xff]
  %v222 = vld [vmem:[%s2 + $0x8] sm:$0xff]
  %v223 = vld [vmem:[%s2 + $0x10] sm:$0xff]
  %v224 = vld [vmem:[%s2 + $0x18] sm:$0xff]
  %v225 = vld [vmem:[%s4] sm:$0x3]
  %v226 = vld [vmem:[%s5] sm:$0x3]
  %v227 = vsel %vm220, %v171, %v197
  %vm228 = vcmask 261120
  %v230 = vsel %vm228, %v225, 0
  %232 = vmatprep.subr.mxu0 0.0
  %233 = vmatpush1.msra.mxu0 %v221
  %234 = vmatprep.subr.mxu0 0.0
  %235 = vmatpush1.msra.mxu0 %v222
  %236 = vmatprep.subr.mxu0 0.0
  %237 = vmatpush1.msra.mxu0 %v223
  %238 = vmatprep.subr.mxu0 0.0
  %239 = vmatpush1.msra.mxu0 %v224
  %240 = vmatprep.subr.mxu0 0.0
  %241 = vmatpush1.msra.mxu0 0.0
  %242 = vmatprep.subr.mxu0 0.0
  %243 = vmatpush1.msra.mxu0 0.0
  %244 = vmatprep.subr.mxu0 0.0
  %245 = vmatpush1.msra.mxu0 0.0
  %246 = vmatprep.subr.mxu0 0.0
  %247 = vmatpush1.msra.mxu0 0.0
  %248 = vmatprep.subr.mxu0 0.0
  %249 = vmatpush1.msra.mxu0 0.0
  %250 = vmatprep.subr.mxu0 0.0
  %251 = vmatpush1.msra.mxu0 0.0
  %252 = vmatprep.subr.mxu0 0.0
  %253 = vmatpush1.msra.mxu0 0.0
  %254 = vmatprep.subr.mxu0 0.0
  %255 = vmatpush1.msra.mxu0 0.0
  %256 = vmatprep.subr.mxu0 0.0
  %257 = vmatpush1.msra.mxu0 0.0
  %258 = vmatprep.subr.mxu0 0.0
  %259 = vmatpush1.msra.mxu0 0.0
  %260 = vmatprep.subr.mxu0 0.0
  %261 = vmatpush1.msra.mxu0 0.0
  %262 = vmatprep.subr.mxu0 0.0
  %263 = vmatpush1.msra.mxu0 0.0
  %264 = vmatprep.subr.mxu0 0.0
  %265 = vmatpush1.msra.mxu0 0.0
  %266 = vmatprep.subr.mxu0 0.0
  %267 = vmatpush1.msra.mxu0 0.0
  %268 = vmatprep.subr.mxu0 0.0
  %269 = vmatpush1.msra.mxu0 0.0
  %270 = vmatprep.subr.mxu0 0.0
  %271 = vmatpush1.msra.mxu0 0.0
  %272 = vmatprep.subr.mxu0 0.0
  %273 = vmatpush1.msra.mxu0 0.0
  %274 = vmatprep.subr.mxu0 0.0
  %275 = vmatpush1.msra.mxu0 0.0
  %276 = vmatprep.subr.mxu0 0.0
  %277 = vmatpush1.msra.mxu0 0.0
  %278 = vmatprep.subr.mxu0 0.0
  %279 = vmatpush1.msra.mxu0 0.0
  %280 = vmatprep.subr.mxu0 0.0
  %281 = vmatpush1.msra.mxu0 0.0
  %282 = vmatprep.subr.mxu0 0.0
  %283 = vmatpush1.msra.mxu0 0.0
  %284 = vmatprep.subr.mxu0 0.0
  %285 = vmatpush1.msra.mxu0 0.0
  %286 = vmatprep.subr.mxu0 0.0
  %287 = vmatpush1.msra.mxu0 0.0
  %288 = vmatprep.subr.mxu0 0.0
  %289 = vmatpush1.msra.mxu0 0.0
  %290 = vmatprep.subr.mxu0 0.0
  %291 = vmatpush1.msra.mxu0 0.0
  %292 = vmatprep.subr.mxu0 0.0
  %293 = vmatpush1.msra.mxu0 0.0
  %294 = vmatprep.subr.mxu0 0.0
  %295 = vmatpush1.msra.mxu0 0.0
  %296 = vmatprep.mubr.f32.mxu0 0.0
  %297 = vmatmul.mubr.f32.gmra.mrb[0].mxu0 %v230
  %v298 = vpop.f32.mrb[0].mxu0
  %v299 = vadd.f32 0.0, %v298
  %v300 = vpop.f32.mrb[0].mxu0
  %301 = vdwg.mxu0
  %v302 = vadd.f32 %v227, %v299
  %v303 = vxor.u32 %v302, 2147483648
  %v304 = vmul.f32 %v303, 1.442695
  %v305 = vpow.pop %v304
  %v306 = vadd.f32 %v305, 1.0
  %v307 = vrcp.pop %v306
  %v308 = vmul.f32 1.0, %v307
  %v309 = vtanh.pop %v302
  %311 = vrot.lane.b32.xlu0 %v226, 32
  %v312 = vpop.permute.xlu0 %311
  %v314 = vmul.f32 %v308, %v312
  %316 = vrot.lane.b32.xlu0 %v309, 64
  %v317 = vpop.permute.xlu0 %316
  %v319 = vmul.f32 %v308, %v317
  %321 = vrot.lane.b32.xlu0 %v319, 32
  %v322 = vpop.permute.xlu0 %321
  %v324 = vadd.f32 %v314, %v322
  %v325 = vtanh.pop %v324
  %327 = vrot.lane.b32.xlu0 %v325, 64
  %v328 = vpop.permute.xlu0 %327
  %v330 = vmul.f32 %v308, %v328
  %332 = vrot.lane.b32.xlu0 %v330, 32
  %v333 = vpop.permute.xlu0 %332
  %vm335 = vcmask 123904
  %336 = vst.msk [vmem:[%s6] sm:$0x3] %vm335, %v333
  %s337 = scalar_lea.vmem %s6, 14
  %vm338 = vcmask 255104
  %339 = vst.msk [vmem:[%s337] sm:$0x3] %vm338, %v333
  %v340 = vsel %vm220, %v179, %v195
  %v341 = vsel %vm228, %v333, 0
  %343 = vmatprep.subr.mxu0 0.0
  %344 = vmatpush1.msra.mxu0 %v221
  %345 = vmatprep.subr.mxu0 0.0
  %346 = vmatpush1.msra.mxu0 %v222
  %347 = vmatprep.subr.mxu0 0.0
  %348 = vmatpush1.msra.mxu0 %v223
  %349 = vmatprep.subr.mxu0 0.0
  %350 = vmatpush1.msra.mxu0 %v224
  %351 = vmatprep.subr.mxu0 0.0
  %352 = vmatpush1.msra.mxu0 0.0
  %353 = vmatprep.subr.mxu0 0.0
  %354 = vmatpush1.msra.mxu0 0.0
  %355 = vmatprep.subr.mxu0 0.0
  %356 = vmatpush1.msra.mxu0 0.0
  %357 = vmatprep.subr.mxu0 0.0
  %358 = vmatpush1.msra.mxu0 0.0
  %359 = vmatprep.subr.mxu0 0.0
  %360 = vmatpush1.msra.mxu0 0.0
  %361 = vmatprep.subr.mxu0 0.0
  %362 = vmatpush1.msra.mxu0 0.0
  %363 = vmatprep.subr.mxu0 0.0
  %364 = vmatpush1.msra.mxu0 0.0
  %365 = vmatprep.subr.mxu0 0.0
  %366 = vmatpush1.msra.mxu0 0.0
  %367 = vmatprep.subr.mxu0 0.0
  %368 = vmatpush1.msra.mxu0 0.0
  %369 = vmatprep.subr.mxu0 0.0
  %370 = vmatpush1.msra.mxu0 0.0
  %371 = vmatprep.subr.mxu0 0.0
  %372 = vmatpush1.msra.mxu0 0.0
  %373 = vmatprep.subr.mxu0 0.0
  %374 = vmatpush1.msra.mxu0 0.0
  %375 = vmatprep.subr.mxu0 0.0
  %376 = vmatpush1.msra.mxu0 0.0
  %377 = vmatprep.subr.mxu0 0.0
  %378 = vmatpush1.msra.mxu0 0.0
  %379 = vmatprep.subr.mxu0 0.0
  %380 = vmatpush1.msra.mxu0 0.0
  %381 = vmatprep.subr.mxu0 0.0
  %382 = vmatpush1.msra.mxu0 0.0
  %383 = vmatprep.subr.mxu0 0.0
  %384 = vmatpush1.msra.mxu0 0.0
  %385 = vmatprep.subr.mxu0 0.0
  %386 = vmatpush1.msra.mxu0 0.0
  %387 = vmatprep.subr.mxu0 0.0
  %388 = vmatpush1.msra.mxu0 0.0
  %389 = vmatprep.subr.mxu0 0.0
  %390 = vmatpush1.msra.mxu0 0.0
  %391 = vmatprep.subr.mxu0 0.0
  %392 = vmatpush1.msra.mxu0 0.0
  %393 = vmatprep.subr.mxu0 0.0
  %394 = vmatpush1.msra.mxu0 0.0
  %395 = vmatprep.subr.mxu0 0.0
  %396 = vmatpush1.msra.mxu0 0.0
  %397 = vmatprep.subr.mxu0 0.0
  %398 = vmatpush1.msra.mxu0 0.0
  %399 = vmatprep.subr.mxu0 0.0
  %400 = vmatpush1.msra.mxu0 0.0
  %401 = vmatprep.subr.mxu0 0.0
  %402 = vmatpush1.msra.mxu0 0.0
  %403 = vmatprep.subr.mxu0 0.0
  %404 = vmatpush1.msra.mxu0 0.0
  %405 = vmatprep.subr.mxu0 0.0
  %406 = vmatpush1.msra.mxu0 0.0
  %407 = vmatprep.mubr.f32.mxu0 0.0
  %408 = vmatmul.mubr.f32.gmra.mrb[0].mxu0 %v341
  %v409 = vpop.f32.mrb[0].mxu0
  %v410 = vadd.f32 0.0, %v409
  %v411 = vpop.f32.mrb[0].mxu0
  %412 = vdwg.mxu0
  %v413 = vadd.f32 %v340, %v410
  %v414 = vxor.u32 %v413, 2147483648
  %v415 = vmul.f32 %v414, 1.442695
  %v416 = vpow.pop %v415
  %v417 = vadd.f32 %v416, 1.0
  %v418 = vrcp.pop %v417
  %v419 = vmul.f32 1.0, %v418
  %v420 = vtanh.pop %v413
  %v421 = vmul.f32 %v419, %v324
  %423 = vrot.lane.b32.xlu0 %v420, 64
  %v424 = vpop.permute.xlu0 %423
  %v426 = vmul.f32 %v419, %v424
  %428 = vrot.lane.b32.xlu0 %v426, 32
  %v429 = vpop.permute.xlu0 %428
  %v431 = vadd.f32 %v421, %v429
  %v432 = vtanh.pop %v431
  %434 = vrot.lane.b32.xlu0 %v432, 64
  %v435 = vpop.permute.xlu0 %434
  %v437 = vmul.f32 %v419, %v435
  %439 = vrot.lane.b32.xlu0 %v437, 32
  %v440 = vpop.permute.xlu0 %439
  %s442 = scalar_lea.vmem %s6, 2
  %443 = vst.msk [vmem:[%s442] sm:$0x3] %vm335, %v440
  %s444 = scalar_lea.vmem %s6, 12
  %445 = vst.msk [vmem:[%s444] sm:$0x3] %vm338, %v440
  %v446 = vsel %vm220, %v178, %v196
  %v447 = vsel %vm228, %v440, 0
  %449 = vmatprep.subr.mxu0 0.0
  %450 = vmatpush1.msra.mxu0 %v221
  %451 = vmatprep.subr.mxu0 0.0
  %452 = vmatpush1.msra.mxu0 %v222
  %453 = vmatprep.subr.mxu0 0.0
  %454 = vmatpush1.msra.mxu0 %v223
  %455 = vmatprep.subr.mxu0 0.0
  %456 = vmatpush1.msra.mxu0 %v224
  %457 = vmatprep.subr.mxu0 0.0
  %458 = vmatpush1.msra.mxu0 0.0
  %459 = vmatprep.subr.mxu0 0.0
  %460 = vmatpush1.msra.mxu0 0.0
  %461 = vmatprep.subr.mxu0 0.0
  %462 = vmatpush1.msra.mxu0 0.0
  %463 = vmatprep.subr.mxu0 0.0
  %464 = vmatpush1.msra.mxu0 0.0
  %465 = vmatprep.subr.mxu0 0.0
  %466 = vmatpush1.msra.mxu0 0.0
  %467 = vmatprep.subr.mxu0 0.0
  %468 = vmatpush1.msra.mxu0 0.0
  %469 = vmatprep.subr.mxu0 0.0
  %470 = vmatpush1.msra.mxu0 0.0
  %471 = vmatprep.subr.mxu0 0.0
  %472 = vmatpush1.msra.mxu0 0.0
  %473 = vmatprep.subr.mxu0 0.0
  %474 = vmatpush1.msra.mxu0 0.0
  %475 = vmatprep.subr.mxu0 0.0
  %476 = vmatpush1.msra.mxu0 0.0
  %477 = vmatprep.subr.mxu0 0.0
  %478 = vmatpush1.msra.mxu0 0.0
  %479 = vmatprep.subr.mxu0 0.0
  %480 = vmatpush1.msra.mxu0 0.0
  %481 = vmatprep.subr.mxu0 0.0
  %482 = vmatpush1.msra.mxu0 0.0
  %483 = vmatprep.subr.mxu0 0.0
  %484 = vmatpush1.msra.mxu0 0.0
  %485 = vmatprep.subr.mxu0 0.0
  %486 = vmatpush1.msra.mxu0 0.0
  %487 = vmatprep.subr.mxu0 0.0
  %488 = vmatpush1.msra.mxu0 0.0
  %489 = vmatprep.subr.mxu0 0.0
  %490 = vmatpush1.msra.mxu0 0.0
  %491 = vmatprep.subr.mxu0 0.0
  %492 = vmatpush1.msra.mxu0 0.0
  %493 = vmatprep.subr.mxu0 0.0
  %494 = vmatpush1.msra.mxu0 0.0
  %495 = vmatprep.subr.mxu0 0.0
  %496 = vmatpush1.msra.mxu0 0.0
  %497 = vmatprep.subr.mxu0 0.0
  %498 = vmatpush1.msra.mxu0 0.0
  %499 = vmatprep.subr.mxu0 0.0
  %500 = vmatpush1.msra.mxu0 0.0
  %501 = vmatprep.subr.mxu0 0.0
  %502 = vmatpush1.msra.mxu0 0.0
  %503 = vmatprep.subr.mxu0 0.0
  %504 = vmatpush1.msra.mxu0 0.0
  %505 = vmatprep.subr.mxu0 0.0
  %506 = vmatpush1.msra.mxu0 0.0
  %507 = vmatprep.subr.mxu0 0.0
  %508 = vmatpush1.msra.mxu0 0.0
  %509 = vmatprep.subr.mxu0 0.0
  %510 = vmatpush1.msra.mxu0 0.0
  %511 = vmatprep.subr.mxu0 0.0
  %512 = vmatpush1.msra.mxu0 0.0
  %513 = vmatprep.mubr.f32.mxu0 0.0
  %514 = vmatmul.mubr.f32.gmra.mrb[0].mxu0 %v447
  %v515 = vpop.f32.mrb[0].mxu0
  %v516 = vadd.f32 0.0, %v515
  %v517 = vpop.f32.mrb[0].mxu0
  %518 = vdwg.mxu0
  %v519 = vadd.f32 %v446, %v516
  %v520 = vxor.u32 %v519, 2147483648
  %v521 = vmul.f32 %v520, 1.442695
  %v522 = vpow.pop %v521
  %v523 = vadd.f32 %v522, 1.0
  %v524 = vrcp.pop %v523
  %v525 = vmul.f32 1.0, %v524
  %v526 = vtanh.pop %v519
  %v527 = vmul.f32 %v525, %v431
  %529 = vrot.lane.b32.xlu0 %v526, 64
  %v530 = vpop.permute.xlu0 %529
  %v532 = vmul.f32 %v525, %v530
  %534 = vrot.lane.b32.xlu0 %v532, 32
  %v535 = vpop.permute.xlu0 %534
  %v537 = vadd.f32 %v527, %v535
  %v538 = vtanh.pop %v537
  %540 = vrot.lane.b32.xlu0 %v538, 64
  %v541 = vpop.permute.xlu0 %540
  %v543 = vmul.f32 %v525, %v541
  %545 = vrot.lane.b32.xlu0 %v543, 32
  %v546 = vpop.permute.xlu0 %545
  %s548 = scalar_lea.vmem %s6, 4
  %549 = vst.msk [vmem:[%s548] sm:$0x3] %vm335, %v546
  %s550 = scalar_lea.vmem %s6, 10
  %551 = vst.msk [vmem:[%s550] sm:$0x3] %vm338, %v546
  %v552 = vsel %vm220, %v180, %v188
  %v553 = vsel %vm228, %v546, 0
  %555 = vmatprep.subr.mxu0 0.0
  %556 = vmatpush1.msra.mxu0 %v221
  %557 = vmatprep.subr.mxu0 0.0
  %558 = vmatpush1.msra.mxu0 %v222
  %559 = vmatprep.subr.mxu0 0.0
  %560 = vmatpush1.msra.mxu0 %v223
  %561 = vmatprep.subr.mxu0 0.0
  %562 = vmatpush1.msra.mxu0 %v224
  %563 = vmatprep.subr.mxu0 0.0
  %564 = vmatpush1.msra.mxu0 0.0
  %565 = vmatprep.subr.mxu0 0.0
  %566 = vmatpush1.msra.mxu0 0.0
  %567 = vmatprep.subr.mxu0 0.0
  %568 = vmatpush1.msra.mxu0 0.0
  %569 = vmatprep.subr.mxu0 0.0
  %570 = vmatpush1.msra.mxu0 0.0
  %571 = vmatprep.subr.mxu0 0.0
  %572 = vmatpush1.msra.mxu0 0.0
  %573 = vmatprep.subr.mxu0 0.0
  %574 = vmatpush1.msra.mxu0 0.0
  %575 = vmatprep.subr.mxu0 0.0
  %576 = vmatpush1.msra.mxu0 0.0
  %577 = vmatprep.subr.mxu0 0.0
  %578 = vmatpush1.msra.mxu0 0.0
  %579 = vmatprep.subr.mxu0 0.0
  %580 = vmatpush1.msra.mxu0 0.0
  %581 = vmatprep.subr.mxu0 0.0
  %582 = vmatpush1.msra.mxu0 0.0
  %583 = vmatprep.subr.mxu0 0.0
  %584 = vmatpush1.msra.mxu0 0.0
  %585 = vmatprep.subr.mxu0 0.0
  %586 = vmatpush1.msra.mxu0 0.0
  %587 = vmatprep.subr.mxu0 0.0
  %588 = vmatpush1.msra.mxu0 0.0
  %589 = vmatprep.subr.mxu0 0.0
  %590 = vmatpush1.msra.mxu0 0.0
  %591 = vmatprep.subr.mxu0 0.0
  %592 = vmatpush1.msra.mxu0 0.0
  %593 = vmatprep.subr.mxu0 0.0
  %594 = vmatpush1.msra.mxu0 0.0
  %595 = vmatprep.subr.mxu0 0.0
  %596 = vmatpush1.msra.mxu0 0.0
  %597 = vmatprep.subr.mxu0 0.0
  %598 = vmatpush1.msra.mxu0 0.0
  %599 = vmatprep.subr.mxu0 0.0
  %600 = vmatpush1.msra.mxu0 0.0
  %601 = vmatprep.subr.mxu0 0.0
  %602 = vmatpush1.msra.mxu0 0.0
  %603 = vmatprep.subr.mxu0 0.0
  %604 = vmatpush1.msra.mxu0 0.0
  %605 = vmatprep.subr.mxu0 0.0
  %606 = vmatpush1.msra.mxu0 0.0
  %607 = vmatprep.subr.mxu0 0.0
  %608 = vmatpush1.msra.mxu0 0.0
  %609 = vmatprep.subr.mxu0 0.0
  %610 = vmatpush1.msra.mxu0 0.0
  %611 = vmatprep.subr.mxu0 0.0
  %612 = vmatpush1.msra.mxu0 0.0
  %613 = vmatprep.subr.mxu0 0.0
  %614 = vmatpush1.msra.mxu0 0.0
  %615 = vmatprep.subr.mxu0 0.0
  %616 = vmatpush1.msra.mxu0 0.0
  %617 = vmatprep.subr.mxu0 0.0
  %618 = vmatpush1.msra.mxu0 0.0
  %619 = vmatprep.mubr.f32.mxu0 0.0
  %620 = vmatmul.mubr.f32.gmra.mrb[0].mxu0 %v553
  %v621 = vpop.f32.mrb[0].mxu0
  %v622 = vadd.f32 0.0, %v621
  %v623 = vpop.f32.mrb[0].mxu0
  %624 = vdwg.mxu0
  %v625 = vadd.f32 %v552, %v622
  %v626 = vxor.u32 %v625, 2147483648
  %v627 = vmul.f32 %v626, 1.442695
  %v628 = vpow.pop %v627
  %v629 = vadd.f32 %v628, 1.0
  %v630 = vrcp.pop %v629
  %v631 = vmul.f32 1.0, %v630
  %v632 = vtanh.pop %v625
  %v633 = vmul.f32 %v631, %v537
  %635 = vrot.lane.b32.xlu0 %v632, 64
  %v636 = vpop.permute.xlu0 %635
  %v638 = vmul.f32 %v631, %v636
  %640 = vrot.lane.b32.xlu0 %v638, 32
  %v641 = vpop.permute.xlu0 %640
  %v643 = vadd.f32 %v633, %v641
  %v644 = vtanh.pop %v643
  %646 = vrot.lane.b32.xlu0 %v644, 64
  %v647 = vpop.permute.xlu0 %646
  %v649 = vmul.f32 %v631, %v647
  %651 = vrot.lane.b32.xlu0 %v649, 32
  %v652 = vpop.permute.xlu0 %651
  %s654 = scalar_lea.vmem %s6, 6
  %655 = vst.msk [vmem:[%s654] sm:$0x3] %vm335, %v652
  %s656 = scalar_lea.vmem %s6, 8
  %657 = vst.msk [vmem:[%s656] sm:$0x3] %vm338, %v652
  %v658 = vsel %vm220, %v188, %v180
  %v659 = vsel %vm228, %v652, 0
  %661 = vmatprep.subr.mxu0 0.0
  %662 = vmatpush1.msra.mxu0 %v221
  %663 = vmatprep.subr.mxu0 0.0
  %664 = vmatpush1.msra.mxu0 %v222
  %665 = vmatprep.subr.mxu0 0.0
  %666 = vmatpush1.msra.mxu0 %v223
  %667 = vmatprep.subr.mxu0 0.0
  %668 = vmatpush1.msra.mxu0 %v224
  %669 = vmatprep.subr.mxu0 0.0
  %670 = vmatpush1.msra.mxu0 0.0
  %671 = vmatprep.subr.mxu0 0.0
  %672 = vmatpush1.msra.mxu0 0.0
  %673 = vmatprep.subr.mxu0 0.0
  %674 = vmatpush1.msra.mxu0 0.0
  %675 = vmatprep.subr.mxu0 0.0
  %676 = vmatpush1.msra.mxu0 0.0
  %677 = vmatprep.subr.mxu0 0.0
  %678 = vmatpush1.msra.mxu0 0.0
  %679 = vmatprep.subr.mxu0 0.0
  %680 = vmatpush1.msra.mxu0 0.0
  %681 = vmatprep.subr.mxu0 0.0
  %682 = vmatpush1.msra.mxu0 0.0
  %683 = vmatprep.subr.mxu0 0.0
  %684 = vmatpush1.msra.mxu0 0.0
  %685 = vmatprep.subr.mxu0 0.0
  %686 = vmatpush1.msra.mxu0 0.0
  %687 = vmatprep.subr.mxu0 0.0
  %688 = vmatpush1.msra.mxu0 0.0
  %689 = vmatprep.subr.mxu0 0.0
  %690 = vmatpush1.msra.mxu0 0.0
  %691 = vmatprep.subr.mxu0 0.0
  %692 = vmatpush1.msra.mxu0 0.0
  %693 = vmatprep.subr.mxu0 0.0
  %694 = vmatpush1.msra.mxu0 0.0
  %695 = vmatprep.subr.mxu0 0.0
  %696 = vmatpush1.msra.mxu0 0.0
  %697 = vmatprep.subr.mxu0 0.0
  %698 = vmatpush1.msra.mxu0 0.0
  %699 = vmatprep.subr.mxu0 0.0
  %700 = vmatpush1.msra.mxu0 0.0
  %701 = vmatprep.subr.mxu0 0.0
  %702 = vmatpush1.msra.mxu0 0.0
  %703 = vmatprep.subr.mxu0 0.0
  %704 = vmatpush1.msra.mxu0 0.0
  %705 = vmatprep.subr.mxu0 0.0
  %706 = vmatpush1.msra.mxu0 0.0
  %707 = vmatprep.subr.mxu0 0.0
  %708 = vmatpush1.msra.mxu0 0.0
  %709 = vmatprep.subr.mxu0 0.0
  %710 = vmatpush1.msra.mxu0 0.0
  %711 = vmatprep.subr.mxu0 0.0
  %712 = vmatpush1.msra.mxu0 0.0
  %713 = vmatprep.subr.mxu0 0.0
  %714 = vmatpush1.msra.mxu0 0.0
  %715 = vmatprep.subr.mxu0 0.0
  %716 = vmatpush1.msra.mxu0 0.0
  %717 = vmatprep.subr.mxu0 0.0
  %718 = vmatpush1.msra.mxu0 0.0
  %719 = vmatprep.subr.mxu0 0.0
  %720 = vmatpush1.msra.mxu0 0.0
  %721 = vmatprep.subr.mxu0 0.0
  %722 = vmatpush1.msra.mxu0 0.0
  %723 = vmatprep.subr.mxu0 0.0
  %724 = vmatpush1.msra.mxu0 0.0
  %725 = vmatprep.mubr.f32.mxu0 0.0
  %726 = vmatmul.mubr.f32.gmra.mrb[0].mxu0 %v659
  %v727 = vpop.f32.mrb[0].mxu0
  %v728 = vadd.f32 0.0, %v727
  %v729 = vpop.f32.mrb[0].mxu0
  %730 = vdwg.mxu0
  %v731 = vadd.f32 %v658, %v728
  %v732 = vxor.u32 %v731, 2147483648
  %v733 = vmul.f32 %v732, 1.442695
  %v734 = vpow.pop %v733
  %v735 = vadd.f32 %v734, 1.0
  %v736 = vrcp.pop %v735
  %v737 = vmul.f32 1.0, %v736
  %v738 = vtanh.pop %v731
  %v739 = vmul.f32 %v737, %v643
  %741 = vrot.lane.b32.xlu0 %v738, 64
  %v742 = vpop.permute.xlu0 %741
  %v744 = vmul.f32 %v737, %v742
  %746 = vrot.lane.b32.xlu0 %v744, 32
  %v747 = vpop.permute.xlu0 %746
  %v749 = vadd.f32 %v739, %v747
  %v750 = vtanh.pop %v749
  %752 = vrot.lane.b32.xlu0 %v750, 64
  %v753 = vpop.permute.xlu0 %752
  %v755 = vmul.f32 %v737, %v753
  %757 = vrot.lane.b32.xlu0 %v755, 32
  %v758 = vpop.permute.xlu0 %757
  %760 = vst.msk [vmem:[%s656] sm:$0x3] %vm335, %v758
  %761 = vst.msk [vmem:[%s654] sm:$0x3] %vm338, %v758
  %v762 = vsel %vm220, %v196, %v178
  %v763 = vsel %vm228, %v758, 0
  %765 = vmatprep.subr.mxu0 0.0
  %766 = vmatpush1.msra.mxu0 %v221
  %767 = vmatprep.subr.mxu0 0.0
  %768 = vmatpush1.msra.mxu0 %v222
  %769 = vmatprep.subr.mxu0 0.0
  %770 = vmatpush1.msra.mxu0 %v223
  %771 = vmatprep.subr.mxu0 0.0
  %772 = vmatpush1.msra.mxu0 %v224
  %773 = vmatprep.subr.mxu0 0.0
  %774 = vmatpush1.msra.mxu0 0.0
  %775 = vmatprep.subr.mxu0 0.0
  %776 = vmatpush1.msra.mxu0 0.0
  %777 = vmatprep.subr.mxu0 0.0
  %778 = vmatpush1.msra.mxu0 0.0
  %779 = vmatprep.subr.mxu0 0.0
  %780 = vmatpush1.msra.mxu0 0.0
  %781 = vmatprep.subr.mxu0 0.0
  %782 = vmatpush1.msra.mxu0 0.0
  %783 = vmatprep.subr.mxu0 0.0
  %784 = vmatpush1.msra.mxu0 0.0
  %785 = vmatprep.subr.mxu0 0.0
  %786 = vmatpush1.msra.mxu0 0.0
  %787 = vmatprep.subr.mxu0 0.0
  %788 = vmatpush1.msra.mxu0 0.0
  %789 = vmatprep.subr.mxu0 0.0
  %790 = vmatpush1.msra.mxu0 0.0
  %791 = vmatprep.subr.mxu0 0.0
  %792 = vmatpush1.msra.mxu0 0.0
  %793 = vmatprep.subr.mxu0 0.0
  %794 = vmatpush1.msra.mxu0 0.0
  %795 = vmatprep.subr.mxu0 0.0
  %796 = vmatpush1.msra.mxu0 0.0
  %797 = vmatprep.subr.mxu0 0.0
  %798 = vmatpush1.msra.mxu0 0.0
  %799 = vmatprep.subr.mxu0 0.0
  %800 = vmatpush1.msra.mxu0 0.0
  %801 = vmatprep.subr.mxu0 0.0
  %802 = vmatpush1.msra.mxu0 0.0
  %803 = vmatprep.subr.mxu0 0.0
  %804 = vmatpush1.msra.mxu0 0.0
  %805 = vmatprep.subr.mxu0 0.0
  %806 = vmatpush1.msra.mxu0 0.0
  %807 = vmatprep.subr.mxu0 0.0
  %808 = vmatpush1.msra.mxu0 0.0
  %809 = vmatprep.subr.mxu0 0.0
  %810 = vmatpush1.msra.mxu0 0.0
  %811 = vmatprep.subr.mxu0 0.0
  %812 = vmatpush1.msra.mxu0 0.0
  %813 = vmatprep.subr.mxu0 0.0
  %814 = vmatpush1.msra.mxu0 0.0
  %815 = vmatprep.subr.mxu0 0.0
  %816 = vmatpush1.msra.mxu0 0.0
  %817 = vmatprep.subr.mxu0 0.0
  %818 = vmatpush1.msra.mxu0 0.0
  %819 = vmatprep.subr.mxu0 0.0
  %820 = vmatpush1.msra.mxu0 0.0
  %821 = vmatprep.subr.mxu0 0.0
  %822 = vmatpush1.msra.mxu0 0.0
  %823 = vmatprep.subr.mxu0 0.0
  %824 = vmatpush1.msra.mxu0 0.0
  %825 = vmatprep.subr.mxu0 0.0
  %826 = vmatpush1.msra.mxu0 0.0
  %827 = vmatprep.subr.mxu0 0.0
  %828 = vmatpush1.msra.mxu0 0.0
  %829 = vmatprep.mubr.f32.mxu0 0.0
  %830 = vmatmul.mubr.f32.gmra.mrb[0].mxu0 %v763
  %v831 = vpop.f32.mrb[0].mxu0
  %v832 = vadd.f32 0.0, %v831
  %v833 = vpop.f32.mrb[0].mxu0
  %834 = vdwg.mxu0
  %v835 = vadd.f32 %v762, %v832
  %v836 = vxor.u32 %v835, 2147483648
  %v837 = vmul.f32 %v836, 1.442695
  %v838 = vpow.pop %v837
  %v839 = vadd.f32 %v838, 1.0
  %v840 = vrcp.pop %v839
  %v841 = vmul.f32 1.0, %v840
  %v842 = vtanh.pop %v835
  %v843 = vmul.f32 %v841, %v749
  %845 = vrot.lane.b32.xlu0 %v842, 64
  %v846 = vpop.permute.xlu0 %845
  %v848 = vmul.f32 %v841, %v846
  %850 = vrot.lane.b32.xlu0 %v848, 32
  %v851 = vpop.permute.xlu0 %850
  %v853 = vadd.f32 %v843, %v851
  %v854 = vtanh.pop %v853
  %856 = vrot.lane.b32.xlu0 %v854, 64
  %v857 = vpop.permute.xlu0 %856
  %v859 = vmul.f32 %v841, %v857
  %861 = vrot.lane.b32.xlu0 %v859, 32
  %v862 = vpop.permute.xlu0 %861
  %864 = vst.msk [vmem:[%s550] sm:$0x3] %vm335, %v862
  %865 = vst.msk [vmem:[%s548] sm:$0x3] %vm338, %v862
  %v866 = vsel %vm220, %v195, %v179
  %v867 = vsel %vm228, %v862, 0
  %869 = vmatprep.subr.mxu0 0.0
  %870 = vmatpush1.msra.mxu0 %v221
  %871 = vmatprep.subr.mxu0 0.0
  %872 = vmatpush1.msra.mxu0 %v222
  %873 = vmatprep.subr.mxu0 0.0
  %874 = vmatpush1.msra.mxu0 %v223
  %875 = vmatprep.subr.mxu0 0.0
  %876 = vmatpush1.msra.mxu0 %v224
  %877 = vmatprep.subr.mxu0 0.0
  %878 = vmatpush1.msra.mxu0 0.0
  %879 = vmatprep.subr.mxu0 0.0
  %880 = vmatpush1.msra.mxu0 0.0
  %881 = vmatprep.subr.mxu0 0.0
  %882 = vmatpush1.msra.mxu0 0.0
  %883 = vmatprep.subr.mxu0 0.0
  %884 = vmatpush1.msra.mxu0 0.0
  %885 = vmatprep.subr.mxu0 0.0
  %886 = vmatpush1.msra.mxu0 0.0
  %887 = vmatprep.subr.mxu0 0.0
  %888 = vmatpush1.msra.mxu0 0.0
  %889 = vmatprep.subr.mxu0 0.0
  %890 = vmatpush1.msra.mxu0 0.0
  %891 = vmatprep.subr.mxu0 0.0
  %892 = vmatpush1.msra.mxu0 0.0
  %893 = vmatprep.subr.mxu0 0.0
  %894 = vmatpush1.msra.mxu0 0.0
  %895 = vmatprep.subr.mxu0 0.0
  %896 = vmatpush1.msra.mxu0 0.0
  %897 = vmatprep.subr.mxu0 0.0
  %898 = vmatpush1.msra.mxu0 0.0
  %899 = vmatprep.subr.mxu0 0.0
  %900 = vmatpush1.msra.mxu0 0.0
  %901 = vmatprep.subr.mxu0 0.0
  %902 = vmatpush1.msra.mxu0 0.0
  %903 = vmatprep.subr.mxu0 0.0
  %904 = vmatpush1.msra.mxu0 0.0
  %905 = vmatprep.subr.mxu0 0.0
  %906 = vmatpush1.msra.mxu0 0.0
  %907 = vmatprep.subr.mxu0 0.0
  %908 = vmatpush1.msra.mxu0 0.0
  %909 = vmatprep.subr.mxu0 0.0
  %910 = vmatpush1.msra.mxu0 0.0
  %911 = vmatprep.subr.mxu0 0.0
  %912 = vmatpush1.msra.mxu0 0.0
  %913 = vmatprep.subr.mxu0 0.0
  %914 = vmatpush1.msra.mxu0 0.0
  %915 = vmatprep.subr.mxu0 0.0
  %916 = vmatpush1.msra.mxu0 0.0
  %917 = vmatprep.subr.mxu0 0.0
  %918 = vmatpush1.msra.mxu0 0.0
  %919 = vmatprep.subr.mxu0 0.0
  %920 = vmatpush1.msra.mxu0 0.0
  %921 = vmatprep.subr.mxu0 0.0
  %922 = vmatpush1.msra.mxu0 0.0
  %923 = vmatprep.subr.mxu0 0.0
  %924 = vmatpush1.msra.mxu0 0.0
  %925 = vmatprep.subr.mxu0 0.0
  %926 = vmatpush1.msra.mxu0 0.0
  %927 = vmatprep.subr.mxu0 0.0
  %928 = vmatpush1.msra.mxu0 0.0
  %929 = vmatprep.subr.mxu0 0.0
  %930 = vmatpush1.msra.mxu0 0.0
  %931 = vmatprep.subr.mxu0 0.0
  %932 = vmatpush1.msra.mxu0 0.0
  %933 = vmatprep.mubr.f32.mxu0 0.0
  %934 = vmatmul.mubr.f32.gmra.mrb[0].mxu0 %v867
  %v935 = vpop.f32.mrb[0].mxu0
  %v936 = vadd.f32 0.0, %v935
  %v937 = vpop.f32.mrb[0].mxu0
  %938 = vdwg.mxu0
  %v939 = vadd.f32 %v866, %v936
  %v940 = vxor.u32 %v939, 2147483648
  %v941 = vmul.f32 %v940, 1.442695
  %v942 = vpow.pop %v941
  %v943 = vadd.f32 %v942, 1.0
  %v944 = vrcp.pop %v943
  %v945 = vmul.f32 1.0, %v944
  %v946 = vtanh.pop %v939
  %v947 = vmul.f32 %v945, %v853
  %949 = vrot.lane.b32.xlu0 %v946, 64
  %v950 = vpop.permute.xlu0 %949
  %v952 = vmul.f32 %v945, %v950
  %954 = vrot.lane.b32.xlu0 %v952, 32
  %v955 = vpop.permute.xlu0 %954
  %v957 = vadd.f32 %v947, %v955
  %v958 = vtanh.pop %v957
  %960 = vrot.lane.b32.xlu0 %v958, 64
  %v961 = vpop.permute.xlu0 %960
  %v963 = vmul.f32 %v945, %v961
  %965 = vrot.lane.b32.xlu0 %v963, 32
  %v966 = vpop.permute.xlu0 %965
  %968 = vst.msk [vmem:[%s444] sm:$0x3] %vm335, %v966
  %969 = vst.msk [vmem:[%s442] sm:$0x3] %vm338, %v966
  %v970 = vsel %vm220, %v197, %v171
  %v971 = vsel %vm228, %v966, 0
  %973 = vmatprep.subr.mxu0 0.0
  %974 = vmatpush1.msra.mxu0 %v221
  %975 = vmatprep.subr.mxu0 0.0
  %976 = vmatpush1.msra.mxu0 %v222
  %977 = vmatprep.subr.mxu0 0.0
  %978 = vmatpush1.msra.mxu0 %v223
  %979 = vmatprep.subr.mxu0 0.0
  %980 = vmatpush1.msra.mxu0 %v224
  %981 = vmatprep.subr.mxu0 0.0
  %982 = vmatpush1.msra.mxu0 0.0
  %983 = vmatprep.subr.mxu0 0.0
  %984 = vmatpush1.msra.mxu0 0.0
  %985 = vmatprep.subr.mxu0 0.0
  %986 = vmatpush1.msra.mxu0 0.0
  %987 = vmatprep.subr.mxu0 0.0
  %988 = vmatpush1.msra.mxu0 0.0
  %989 = vmatprep.subr.mxu0 0.0
  %990 = vmatpush1.msra.mxu0 0.0
  %991 = vmatprep.subr.mxu0 0.0
  %992 = vmatpush1.msra.mxu0 0.0
  %993 = vmatprep.subr.mxu0 0.0
  %994 = vmatpush1.msra.mxu0 0.0
  %995 = vmatprep.subr.mxu0 0.0
  %996 = vmatpush1.msra.mxu0 0.0
  %997 = vmatprep.subr.mxu0 0.0
  %998 = vmatpush1.msra.mxu0 0.0
  %999 = vmatprep.subr.mxu0 0.0
  %1000 = vmatpush1.msra.mxu0 0.0
  %1001 = vmatprep.subr.mxu0 0.0
  %1002 = vmatpush1.msra.mxu0 0.0
  %1003 = vmatprep.subr.mxu0 0.0
  %1004 = vmatpush1.msra.mxu0 0.0
  %1005 = vmatprep.subr.mxu0 0.0
  %1006 = vmatpush1.msra.mxu0 0.0
  %1007 = vmatprep.subr.mxu0 0.0
  %1008 = vmatpush1.msra.mxu0 0.0
  %1009 = vmatprep.subr.mxu0 0.0
  %1010 = vmatpush1.msra.mxu0 0.0
  %1011 = vmatprep.subr.mxu0 0.0
  %1012 = vmatpush1.msra.mxu0 0.0
  %1013 = vmatprep.subr.mxu0 0.0
  %1014 = vmatpush1.msra.mxu0 0.0
  %1015 = vmatprep.subr.mxu0 0.0
  %1016 = vmatpush1.msra.mxu0 0.0
  %1017 = vmatprep.subr.mxu0 0.0
  %1018 = vmatpush1.msra.mxu0 0.0
  %1019 = vmatprep.subr.mxu0 0.0
  %1020 = vmatpush1.msra.mxu0 0.0
  %1021 = vmatprep.subr.mxu0 0.0
  %1022 = vmatpush1.msra.mxu0 0.0
  %1023 = vmatprep.subr.mxu0 0.0
  %1024 = vmatpush1.msra.mxu0 0.0
  %1025 = vmatprep.subr.mxu0 0.0
  %1026 = vmatpush1.msra.mxu0 0.0
  %1027 = vmatprep.subr.mxu0 0.0
  %1028 = vmatpush1.msra.mxu0 0.0
  %1029 = vmatprep.subr.mxu0 0.0
  %1030 = vmatpush1.msra.mxu0 0.0
  %1031 = vmatprep.subr.mxu0 0.0
  %1032 = vmatpush1.msra.mxu0 0.0
  %1033 = vmatprep.subr.mxu0 0.0
  %1034 = vmatpush1.msra.mxu0 0.0
  %1035 = vmatprep.subr.mxu0 0.0
  %1036 = vmatpush1.msra.mxu0 0.0
  %1037 = vmatprep.mubr.f32.mxu0 0.0
  %1038 = vmatmul.mubr.f32.gmra.mrb[0].mxu0 %v971
  %v1039 = vpop.f32.mrb[0].mxu0
  %v1040 = vadd.f32 0.0, %v1039
  %v1041 = vpop.f32.mrb[0].mxu0
  %1042 = vdwg.mxu0
  %v1043 = vadd.f32 %v970, %v1040
  %v1044 = vxor.u32 %v1043, 2147483648
  %v1045 = vmul.f32 %v1044, 1.442695
  %v1046 = vpow.pop %v1045
  %v1047 = vadd.f32 %v1046, 1.0
  %v1048 = vrcp.pop %v1047
  %v1049 = vmul.f32 1.0, %v1048
  %v1050 = vtanh.pop %v1043
  %v1051 = vmul.f32 %v1049, %v957
  %1053 = vrot.lane.b32.xlu0 %v1050, 64
  %v1054 = vpop.permute.xlu0 %1053
  %v1056 = vmul.f32 %v1049, %v1054
  %1058 = vrot.lane.b32.xlu0 %v1056, 32
  %v1059 = vpop.permute.xlu0 %1058
  %v1061 = vadd.f32 %v1051, %v1059
  %v1062 = vtanh.pop %v1061
  %1064 = vrot.lane.b32.xlu0 %v1062, 64
  %v1065 = vpop.permute.xlu0 %1064
  %v1067 = vmul.f32 %v1049, %v1065
  %1069 = vrot.lane.b32.xlu0 %v1067, 32
  %v1070 = vpop.permute.xlu0 %1069
  %1072 = vst.msk [vmem:[%s337] sm:$0x3] %vm335, %v1070
  %1073 = vst.msk [vmem:[%s6] sm:$0x3] %vm338, %v1070
  // Predicated region
  $region26: #{bilstm_forward.2} parent=0 // pred_check
    _
  $region27: #{bilstm_forward.2} parent=0 // pred_check_branch
    %1075 = sbr.rel (0) target = $region29
  $region28: #{bilstm_forward.2} parent=0 // pred_region
    _
  $region29: #{bilstm_forward.2} parent=0 // pred_fallthru
    _
  // Predicated region
  $region30: #{bilstm_forward.2} parent=0 // pred_check
    _
  $region31: #{bilstm_forward.2} parent=0 // pred_check_branch
    %1077 = sbr.rel (0) target = $region33
  $region32: #{bilstm_forward.2} parent=0 // pred_region
    _
  $region33: #{bilstm_forward.2} parent=0 // pred_fallthru
    _

</llo_original>
